<compile_context>
chip_gen: v5e
topology: v5e:2x2
jax: 0.10.0
libtpu: 0.0.40
codegen_flags: <defaults>
</compile_context>

<pallas_src>
import jax
import jax.numpy as jnp
from jax.experimental import pallas as pl
from jax.experimental.pallas import tpu as pltpu


def _silu(x):
    return x * jax.nn.sigmoid(x)


def _round_up(v: int, m: int) -> int:
    return ((v + m - 1) // m) * m


def _pad_last(v, target: int):
    pad = target - v.shape[-1]
    if pad <= 0:
        return v
    widths = [(0, 0)] * (v.ndim - 1) + [(0, pad)]
    return jnp.pad(v, widths)  # zero padding


def _chip_info():
    """Returns (num_tensorcores, per-core VMEM bytes), conservative fallbacks."""
    kind = ""
    try:
        kind = jax.devices()[0].device_kind.lower()
    except Exception:
        pass
    num_cores = 2 if ("v7" in kind or "7x" in kind) else 1
    try:
        vmem = int(pltpu.get_tpu_info().vmem_capacity_bytes)
    except Exception:
        vmem = 64 << 20  # v7x per-TensorCore: smallest in the fleet.
    return num_cores, vmem


def _make_mlp_kernel(num_extra_hidden: int, eps: float, d_out_real: int, d_out_pad: int):
    """Fused MLP + LayerNorm kernel.

    Ref order: x, w1, b1, [wh_i, bh_i]*num_extra_hidden, w2, b2, gamma, beta, out
    """
    needs_mask = d_out_pad != d_out_real

    def kernel(*refs):
        x_ref = refs[0]
        w1_ref, b1_ref = refs[1], refs[2]
        idx = 3
        hidden_refs = []
        for _ in range(num_extra_hidden):
            hidden_refs.append((refs[idx], refs[idx + 1]))
            idx += 2
        w2_ref, b2_ref = refs[idx], refs[idx + 1]
        g_ref, beta_ref = refs[idx + 2], refs[idx + 3]
        o_ref = refs[idx + 4]

        # First linear + SiLU.  Matmul operands in the weight dtype (bf16 by
        # default -> fast MXU path); f32 accumulation; f32 bias/activation.
        h = jnp.dot(x_ref[...].astype(w1_ref.dtype), w1_ref[...],
                    preferred_element_type=jnp.float32)
        h = _silu(h + b1_ref[...].astype(jnp.float32))

        # Extra hidden layers (hidden_layers - 1 of them).
        # TODO(synk): on v6e/v7x the SiLU sigmoid could run in bf16 if the EUP
        # slot ever binds; kept f32 since the MXU dominates at these shapes.
        for wh_ref, bh_ref in hidden_refs:
            h = jnp.dot(h.astype(wh_ref.dtype), wh_ref[...],
                        preferred_element_type=jnp.float32)
            h = _silu(h + bh_ref[...].astype(jnp.float32))

        # Output projection (columns may be zero-padded to 128 lanes).
        y = jnp.dot(h.astype(w2_ref.dtype), w2_ref[...],
                    preferred_element_type=jnp.float32)
        y = y + b2_ref[...].astype(jnp.float32)

        # LayerNorm over the REAL feature width (biased variance, eps=1e-5).
        # Padded lanes of y are exactly zero (zero-padded w2/b2 columns), so
        # the plain sum already equals the sum over real lanes; the variance
        # term must mask them because (0 - mean)^2 is not zero.
        inv_n = jnp.float32(1.0 / d_out_real)
        mean = jnp.sum(y, axis=-1, keepdims=True) * inv_n
        diff = y - mean
        if needs_mask:
            lane = jax.lax.broadcasted_iota(jnp.int32, (1, d_out_pad), 1)
            diff = jnp.where(lane < d_out_real, diff, 0.0)
        var = jnp.sum(diff * diff, axis=-1, keepdims=True) * inv_n
        out = diff * jax.lax.rsqrt(var + eps)
        out = out * g_ref[...].astype(jnp.float32) + beta_ref[...].astype(jnp.float32)

        # Lane-dense store (padded to 128 lanes when output_dim < 128).
        o_ref[...] = out.astype(o_ref.dtype)

    return kernel


def mesh_graph_mlp(x, params, *, tile_m: int = 512, eps: float = 1e-5,
                   matmul_dtype=jnp.bfloat16):
    """Fused MeshGraphMLP forward.

    Args:
      x: (N, input_dim) array (any N; padded internally).
      params: dict with keys
        'w1' (in, hid), 'b1' (hid,),
        'hidden' list of (wh (hid, hid), bh (hid,)),
        'w2' (hid, out), 'b2' (out,),
        'gamma' (out,), 'beta' (out,).
      matmul_dtype: dtype for matmul operands (weights + activations);
        bf16 hits the native MXU path.  None keeps the parameter dtype.
    Returns:
      (N, output_dim) array, same dtype as x.
    """
    n, d_in = x.shape
    hid = params["w1"].shape[1]
    d_out = params["w2"].shape[1]
    num_extra = len(params["hidden"])

    # Lane-dense output: pad the output feature axis to 128 when narrower so
    # the final store is an unmasked vst instead of a masked partial store.
    d_out_pad = 128 if d_out < 128 else d_out

    def wcast(w):
        return w if matmul_dtype is None else w.astype(matmul_dtype)

    def row(v):
        return v.reshape(1, -1)

    param_ops = [wcast(params["w1"]), row(params["b1"])]
    for wh, bh in params["hidden"]:
        param_ops += [wcast(wh), row(bh)]
    param_ops += [_pad_last(wcast(params["w2"]), d_out_pad),
                  row(_pad_last(params["b2"], d_out_pad)),
                  row(_pad_last(params["gamma"], d_out_pad)),
                  row(_pad_last(params["beta"], d_out_pad))]
    param_bytes = sum(int(op.size) * op.dtype.itemsize for op in param_ops)

    num_cores, physical_vmem = _chip_info()
    budget = min((physical_vmem * 3) // 4, 100 << 20)

    # ---- Row-tile selection ------------------------------------------------
    tile = max(_round_up(min(tile_m, n), 8), 8)
    if num_cores > 1 and n > num_cores * 8:
        # Multi-TensorCore chips (v7x): at least one tile per core on the
        # parallel row axis.  Single-TC chips keep the largest budgeted tile.
        tile = min(tile, max(_round_up((n + num_cores - 1) // num_cores, 8), 8))

    xbytes = x.dtype.itemsize

    def vmem_estimate(t):
        io = 2 * t * d_in * xbytes + 2 * t * d_out_pad * xbytes  # double-buffered x / out
        acts = 3 * t * max(hid, d_in, d_out_pad) * 4             # f32 activation temporaries
        return io + acts + 2 * param_bytes                       # params double-buffered

    while vmem_estimate(tile) > budget and tile > 64:
        tile = max(_round_up(tile // 2, 8), 8)

    grid_m = (n + tile - 1) // tile
    if num_cores > 1 and grid_m > 1 and grid_m % num_cores != 0:
        # Even split across TensorCores (avoids an idle-TC tail step).
        grid_m += num_cores - (grid_m % num_cores)
    n_pad = grid_m * tile
    x_p = jnp.pad(x, ((0, n_pad - n), (0, 0))) if n_pad != n else x

    vmem_limit = int(min(budget, max(32 << 20, 2 * vmem_estimate(tile) + (4 << 20))))

    kernel = _make_mlp_kernel(num_extra, eps, d_out, d_out_pad)

    # x/out are streamed in the caller's dtype for module fidelity; pass bf16
    # x to also halve the row-streaming HBM traffic on mem-bound launches.
    in_specs = [pl.BlockSpec((tile, d_in), lambda i: (i, 0))]
    # TODO(synk): grid-invariant params could be single-buffered via
    # pipeline_mode=pl.Buffered(1) behind a capability probe; their footprint
    # is small (a few MiB at GraphCast dims) so default buffering is kept for
    # robustness instead of an exception-driven fallback.
    in_specs += [pl.BlockSpec(op.shape, lambda i: (0, 0)) for op in param_ops]
    out_specs = pl.BlockSpec((tile, d_out_pad), lambda i: (i, 0))

    out = pl.pallas_call(
        kernel,
        out_shape=jax.ShapeDtypeStruct((n_pad, d_out_pad), x.dtype),
        grid_spec=pl.GridSpec(grid=(grid_m,), in_specs=in_specs, out_specs=out_specs),
        compiler_params=pltpu.CompilerParams(
            dimension_semantics=("parallel",),
            vmem_limit_bytes=vmem_limit),
    )(x_p, *param_ops)

    return out[:n, :d_out]


def init_params(key, input_dim, output_dim, hidden_dim, hidden_layers,
                dtype=jnp.float32):
    """Deterministic PyTorch-Linear-style (uniform) init. Weights stored (in, out)."""
    def linear(k, fan_in, fan_out):
        kw, kb = jax.random.split(k)
        bound = 1.0 / jnp.sqrt(fan_in)
        w = jax.random.uniform(kw, (fan_in, fan_out), dtype, -bound, bound)
        b = jax.random.uniform(kb, (fan_out,), dtype, -bound, bound)
        return w, b

    keys = jax.random.split(key, hidden_layers + 1)
    w1, b1 = linear(keys[0], input_dim, hidden_dim)
    hidden = []
    for i in range(hidden_layers - 1):
        hidden.append(linear(keys[1 + i], hidden_dim, hidden_dim))
    w2, b2 = linear(keys[hidden_layers], hidden_dim, output_dim)
    gamma = jnp.ones((output_dim,), dtype)   # nn.LayerNorm default affine init
    beta = jnp.zeros((output_dim,), dtype)
    return {"w1": w1, "b1": b1, "hidden": hidden,
            "w2": w2, "b2": b2, "gamma": gamma, "beta": beta}


def reference(x, params, eps=1e-5, matmul_dtype=None):
    """Pure-JAX reference.  matmul_dtype=bf16 mimics the kernel's MXU precision."""
    def mm(a, w):
        if matmul_dtype is not None:
            a = a.astype(matmul_dtype)
            w = w.astype(matmul_dtype)
        return jnp.dot(a, w, preferred_element_type=jnp.float32)

    h = _silu(mm(x, params["w1"]) + params["b1"])
    for wh, bh in params["hidden"]:
        h = _silu(mm(h, wh) + bh)
    y = mm(h, params["w2"]) + params["b2"]
    mean = jnp.mean(y, axis=-1, keepdims=True)
    var = jnp.mean(jnp.square(y - mean), axis=-1, keepdims=True)
    return (y - mean) * jax.lax.rsqrt(var + eps) * params["gamma"] + params["beta"]


if __name__ == "__main__":
    key = jax.random.PRNGKey(0)
    k_x, k_p = jax.random.split(key)

    # Small shapes consistent with the module: N graph edges/nodes x features.
    # N is intentionally not a multiple of the tile (exercises row padding);
    # output_dim=32 < 128 exercises the lane-padding + masked-LayerNorm path;
    # hidden_layers=2 exercises the extra-hidden-layer loop.
    N, input_dim, hidden_dim, output_dim, hidden_layers = 1000, 32, 64, 32, 2

    x = jax.random.normal(k_x, (N, input_dim), jnp.float32)
    params = init_params(k_p, input_dim, output_dim, hidden_dim, hidden_layers)

    out = mesh_graph_mlp(x, params)
    out = jax.block_until_ready(out)
    assert out.shape == (N, output_dim)

    # Tight check vs a reference that uses the same bf16 matmul operands and
    # f32 accumulation as the kernel.
    ref_mixed = reference(x, params, matmul_dtype=jnp.bfloat16)
    assert jnp.allclose(out, ref_mixed, atol=2e-3, rtol=2e-3), \
        "mismatch vs mixed-precision reference"

    # Loose sanity check vs pure-f32 module semantics (bf16 matmul rounding only).
    ref_f32 = reference(x, params)
    assert jnp.allclose(out, ref_f32, atol=1e-1, rtol=1e-1), \
        "drift vs f32 reference too large"

    print("KERNEL_OK")
</pallas_src>

<mosaic_0001>
module attributes {stable_mosaic.version = 11 : i64} {
  func.func @kernel(%arg0: i32, %arg1: memref<512x32xf32, #tpu.memory_space<vmem>>, %arg2: memref<32x64xbf16, #tpu.memory_space<vmem>>, %arg3: memref<1x64xf32, #tpu.memory_space<vmem>>, %arg4: memref<64x64xbf16, #tpu.memory_space<vmem>>, %arg5: memref<1x64xf32, #tpu.memory_space<vmem>>, %arg6: memref<64x128xbf16, #tpu.memory_space<vmem>>, %arg7: memref<1x128xf32, #tpu.memory_space<vmem>>, %arg8: memref<1x128xf32, #tpu.memory_space<vmem>>, %arg9: memref<1x128xf32, #tpu.memory_space<vmem>>, %arg10: memref<512x128xf32, #tpu.memory_space<vmem>>) attributes {dimension_semantics = [#tpu.dimension_semantics<parallel>], iteration_bounds = array<i64: 2>, scalar_prefetch = 0 : i64, scratch_operands = 0 : i64, tpu.core_type = #tpu.core_type<tc>, window_params = [{transform_indices = @transform_0, window_bounds = array<i64: 512, 32>}, {pipeline_mode = #tpu.pipeline_mode<synchronous>, transform_indices = @transform_1, window_bounds = array<i64: 32, 64>}, {pipeline_mode = #tpu.pipeline_mode<synchronous>, transform_indices = @transform_2, window_bounds = array<i64: 1, 64>}, {pipeline_mode = #tpu.pipeline_mode<synchronous>, transform_indices = @transform_3, window_bounds = array<i64: 64, 64>}, {pipeline_mode = #tpu.pipeline_mode<synchronous>, transform_indices = @transform_4, window_bounds = array<i64: 1, 64>}, {pipeline_mode = #tpu.pipeline_mode<synchronous>, transform_indices = @transform_5, window_bounds = array<i64: 64, 128>}, {pipeline_mode = #tpu.pipeline_mode<synchronous>, transform_indices = @transform_6, window_bounds = array<i64: 1, 128>}, {pipeline_mode = #tpu.pipeline_mode<synchronous>, transform_indices = @transform_7, window_bounds = array<i64: 1, 128>}, {pipeline_mode = #tpu.pipeline_mode<synchronous>, transform_indices = @transform_8, window_bounds = array<i64: 1, 128>}, {transform_indices = @transform_9, window_bounds = array<i64: 512, 128>}]} {
    %c0 = arith.constant 0 : index
    %c0_0 = arith.constant 0 : index
    %0 = vector.load %arg1[%c0, %c0_0] : memref<512x32xf32, #tpu.memory_space<vmem>>, vector<512x32xf32>
    %1 = arith.truncf %0 : vector<512x32xf32> to vector<512x32xbf16>
    %c0_1 = arith.constant 0 : index
    %c0_2 = arith.constant 0 : index
    %2 = vector.load %arg2[%c0_1, %c0_2] : memref<32x64xbf16, #tpu.memory_space<vmem>>, vector<32x64xbf16>
    %cst = arith.constant dense<0.000000e+00> : vector<512x64xf32>
    %3 = tpu.matmul %1, %2, %cst {dimension_numbers = #tpu.dot_dimension_numbers<[1], [0], [0], [1], [0, 0, 1, 1], [], []>} : vector<512x32xbf16>, vector<32x64xbf16>, vector<512x64xf32> -> vector<512x64xf32>
    %c0_3 = arith.constant 0 : index
    %c0_4 = arith.constant 0 : index
    %4 = vector.load %arg3[%c0_3, %c0_4] : memref<1x64xf32, #tpu.memory_space<vmem>>, vector<1x64xf32>
    %5 = vector.broadcast %4 : vector<1x64xf32> to vector<512x64xf32>
    %6 = arith.addf %3, %5 : vector<512x64xf32>
    %7 = arith.negf %6 : vector<512x64xf32>
    %8 = math.exp %7 : vector<512x64xf32>
    %cst_5 = arith.constant 1.000000e+00 : f32
    %9 = vector.broadcast %cst_5 : f32 to vector<512x64xf32>
    %10 = arith.addf %9, %8 : vector<512x64xf32>
    %11 = arith.divf %9, %10 : vector<512x64xf32>
    %12 = arith.mulf %6, %11 : vector<512x64xf32>
    %13 = arith.truncf %12 : vector<512x64xf32> to vector<512x64xbf16>
    %c0_6 = arith.constant 0 : index
    %c0_7 = arith.constant 0 : index
    %14 = vector.load %arg4[%c0_6, %c0_7] : memref<64x64xbf16, #tpu.memory_space<vmem>>, vector<64x64xbf16>
    %cst_8 = arith.constant dense<0.000000e+00> : vector<512x64xf32>
    %15 = tpu.matmul %13, %14, %cst_8 {dimension_numbers = #tpu.dot_dimension_numbers<[1], [0], [0], [1], [0, 0, 1, 1], [], []>} : vector<512x64xbf16>, vector<64x64xbf16>, vector<512x64xf32> -> vector<512x64xf32>
    %c0_9 = arith.constant 0 : index
    %c0_10 = arith.constant 0 : index
    %16 = vector.load %arg5[%c0_9, %c0_10] : memref<1x64xf32, #tpu.memory_space<vmem>>, vector<1x64xf32>
    %17 = vector.broadcast %16 : vector<1x64xf32> to vector<512x64xf32>
    %18 = arith.addf %15, %17 : vector<512x64xf32>
    %19 = arith.negf %18 : vector<512x64xf32>
    %20 = math.exp %19 : vector<512x64xf32>
    %cst_11 = arith.constant 1.000000e+00 : f32
    %21 = vector.broadcast %cst_11 : f32 to vector<512x64xf32>
    %22 = arith.addf %21, %20 : vector<512x64xf32>
    %23 = arith.divf %21, %22 : vector<512x64xf32>
    %24 = arith.mulf %18, %23 : vector<512x64xf32>
    %25 = arith.truncf %24 : vector<512x64xf32> to vector<512x64xbf16>
    %c0_12 = arith.constant 0 : index
    %c0_13 = arith.constant 0 : index
    %26 = vector.load %arg6[%c0_12, %c0_13] : memref<64x128xbf16, #tpu.memory_space<vmem>>, vector<64x128xbf16>
    %cst_14 = arith.constant dense<0.000000e+00> : vector<512x128xf32>
    %27 = tpu.matmul %25, %26, %cst_14 {dimension_numbers = #tpu.dot_dimension_numbers<[1], [0], [0], [1], [0, 0, 1, 1], [], []>} : vector<512x64xbf16>, vector<64x128xbf16>, vector<512x128xf32> -> vector<512x128xf32>
    %c0_15 = arith.constant 0 : index
    %c0_16 = arith.constant 0 : index
    %28 = vector.load %arg7[%c0_15, %c0_16] : memref<1x128xf32, #tpu.memory_space<vmem>>, vector<1x128xf32>
    %29 = vector.broadcast %28 : vector<1x128xf32> to vector<512x128xf32>
    %30 = arith.addf %27, %29 : vector<512x128xf32>
    %cst_17 = arith.constant dense<0.000000e+00> : vector<512xf32>
    %31 = vector.multi_reduction <add>, %30, %cst_17 [1] : vector<512x128xf32> to vector<512xf32>
    %32 = vector.shape_cast %31 : vector<512xf32> to vector<512x1xf32>
    %cst_18 = arith.constant 3.125000e-02 : f32
    %33 = vector.broadcast %cst_18 : f32 to vector<512x1xf32>
    %34 = arith.mulf %32, %33 : vector<512x1xf32>
    %35 = vector.broadcast %34 : vector<512x1xf32> to vector<512x128xf32>
    %36 = arith.subf %30, %35 : vector<512x128xf32>
    %37 = tpu.iota {dimensions = array<i32: 1>} : vector<1x128xi32>
    %c32_i32 = arith.constant 32 : i32
    %38 = vector.broadcast %c32_i32 : i32 to vector<1x128xi32>
    %39 = arith.cmpi slt, %37, %38 : vector<1x128xi32>
    %cst_19 = arith.constant 0.000000e+00 : f32
    %40 = vector.shape_cast %39 : vector<1x128xi1> to vector<1x128xi1>
    %41 = vector.broadcast %40 : vector<1x128xi1> to vector<512x128xi1>
    %42 = vector.broadcast %cst_19 : f32 to vector<512x128xf32>
    %43 = arith.select %41, %36, %42 : vector<512x128xi1>, vector<512x128xf32>
    %44 = arith.mulf %43, %43 : vector<512x128xf32>
    %cst_20 = arith.constant dense<0.000000e+00> : vector<512xf32>
    %45 = vector.multi_reduction <add>, %44, %cst_20 [1] : vector<512x128xf32> to vector<512xf32>
    %46 = vector.shape_cast %45 : vector<512xf32> to vector<512x1xf32>
    %cst_21 = arith.constant 3.125000e-02 : f32
    %47 = vector.broadcast %cst_21 : f32 to vector<512x1xf32>
    %48 = arith.mulf %46, %47 : vector<512x1xf32>
    %cst_22 = arith.constant 9.99999974E-6 : f32
    %49 = vector.broadcast %cst_22 : f32 to vector<512x1xf32>
    %50 = arith.addf %48, %49 : vector<512x1xf32>
    %51 = math.rsqrt %50 : vector<512x1xf32>
    %52 = vector.broadcast %51 : vector<512x1xf32> to vector<512x128xf32>
    %53 = arith.mulf %43, %52 : vector<512x128xf32>
    %c0_23 = arith.constant 0 : index
    %c0_24 = arith.constant 0 : index
    %54 = vector.load %arg8[%c0_23, %c0_24] : memref<1x128xf32, #tpu.memory_space<vmem>>, vector<1x128xf32>
    %55 = vector.broadcast %54 : vector<1x128xf32> to vector<512x128xf32>
    %56 = arith.mulf %53, %55 : vector<512x128xf32>
    %c0_25 = arith.constant 0 : index
    %c0_26 = arith.constant 0 : index
    %57 = vector.load %arg9[%c0_25, %c0_26] : memref<1x128xf32, #tpu.memory_space<vmem>>, vector<1x128xf32>
    %58 = vector.broadcast %57 : vector<1x128xf32> to vector<512x128xf32>
    %59 = arith.addf %56, %58 : vector<512x128xf32>
    %c0_27 = arith.constant 0 : index
    %c0_28 = arith.constant 0 : index
    %60 = vector.load %arg10[%c0_27, %c0_28] : memref<512x128xf32, #tpu.memory_space<vmem>>, vector<512x128xf32>
    tpu.vector_store %arg10[%c0_27, %c0_28], %59 {strides = array<i32>} : memref<512x128xf32, #tpu.memory_space<vmem>>, vector<512x128xf32>,
    return
  }
  func.func @transform_0(%arg0: i32) -> (i32, i32) {
    %c0_i32 = arith.constant 0 : i32
    %c0_i32_0 = arith.constant 0 : i32
    return %arg0, %c0_i32 : i32, i32
  }
  func.func @transform_1(%arg0: i32) -> (i32, i32) {
    %c0_i32 = arith.constant 0 : i32
    %c0_i32_0 = arith.constant 0 : i32
    %c0_i32_1 = arith.constant 0 : i32
    return %c0_i32, %c0_i32_0 : i32, i32
  }
  func.func @transform_2(%arg0: i32) -> (i32, i32) {
    %c0_i32 = arith.constant 0 : i32
    %c0_i32_0 = arith.constant 0 : i32
    %c0_i32_1 = arith.constant 0 : i32
    return %c0_i32, %c0_i32_0 : i32, i32
  }
  func.func @transform_3(%arg0: i32) -> (i32, i32) {
    %c0_i32 = arith.constant 0 : i32
    %c0_i32_0 = arith.constant 0 : i32
    %c0_i32_1 = arith.constant 0 : i32
    return %c0_i32, %c0_i32_0 : i32, i32
  }
  func.func @transform_4(%arg0: i32) -> (i32, i32) {
    %c0_i32 = arith.constant 0 : i32
    %c0_i32_0 = arith.constant 0 : i32
    %c0_i32_1 = arith.constant 0 : i32
    return %c0_i32, %c0_i32_0 : i32, i32
  }
  func.func @transform_5(%arg0: i32) -> (i32, i32) {
    %c0_i32 = arith.constant 0 : i32
    %c0_i32_0 = arith.constant 0 : i32
    %c0_i32_1 = arith.constant 0 : i32
    return %c0_i32, %c0_i32_0 : i32, i32
  }
  func.func @transform_6(%arg0: i32) -> (i32, i32) {
    %c0_i32 = arith.constant 0 : i32
    %c0_i32_0 = arith.constant 0 : i32
    %c0_i32_1 = arith.constant 0 : i32
    return %c0_i32, %c0_i32_0 : i32, i32
  }
  func.func @transform_7(%arg0: i32) -> (i32, i32) {
    %c0_i32 = arith.constant 0 : i32
    %c0_i32_0 = arith.constant 0 : i32
    %c0_i32_1 = arith.constant 0 : i32
    return %c0_i32, %c0_i32_0 : i32, i32
  }
  func.func @transform_8(%arg0: i32) -> (i32, i32) {
    %c0_i32 = arith.constant 0 : i32
    %c0_i32_0 = arith.constant 0 : i32
    %c0_i32_1 = arith.constant 0 : i32
    return %c0_i32, %c0_i32_0 : i32, i32
  }
  func.func @transform_9(%arg0: i32) -> (i32, i32) {
    %c0_i32 = arith.constant 0 : i32
    %c0_i32_0 = arith.constant 0 : i32
    return %arg0, %c0_i32 : i32, i32
  }
}

</mosaic_0001>

<llo_original>
// kernel: tpu_custom_call.1
$region0: #{tpu_custom_call.1}
  #allocation0 [shape = 'u32[]', space=smem, size = 0x4, offset = 0x4, fixed_abs, tag = 'smem constant byte address 0x4 - core index']
  #allocation1 [shape = 'u32[72,128]{1,0:T(1,128)}', space=vmem, size = 0x9000, scoped, tag = 'internal scratch']
  %s0 = inlined_call_operand.vmem [shape: f32[1024,32], index: 0, kind: input, shape index: {}]
  %s1 = inlined_call_operand.vmem [shape: bf16[32,64], index: 1, kind: input, shape index: {}]
  %s2 = inlined_call_operand.vmem [shape: f32[1,64], index: 2, kind: input, shape index: {}]
  %s3 = inlined_call_operand.vmem [shape: bf16[64,64], index: 3, kind: input, shape index: {}]
  %s4 = inlined_call_operand.vmem [shape: f32[1,64], index: 4, kind: input, shape index: {}]
  %s5 = inlined_call_operand.vmem [shape: bf16[64,128], index: 5, kind: input, shape index: {}]
  %s6 = inlined_call_operand.vmem [shape: f32[1,128], index: 6, kind: input, shape index: {}]
  %s7 = inlined_call_operand.vmem [shape: f32[1,128], index: 7, kind: input, shape index: {}]
  %s8 = inlined_call_operand.vmem [shape: f32[1,128], index: 8, kind: input, shape index: {}]
  %s9 = inlined_call_operand.hbm [shape: f32[1024,128], index: 9, kind: output, shape index: {}]
  %s10 = sld [smem:[#allocation0]]
  $region69: #{tpu_custom_call.1} parent=0
    _
  %s12 = ssub.s32 1, %s10
  %s13 = scalar_select 0, %s12, %s10
  $region1: #{tpu_custom_call.1} parent=0
    #allocation2 [shape = 'u8[524288]{0}', space=vmem, size = 0x80000, scoped, tag = 'output window, operand 0']
    #allocation3 [shape = 's32[2]{0}', space=sflag, size = 0x8, scoped, tag = 'scoped memory for tpu_custom_call.1']
    %14 = vsyncpa [#allocation3], 0
    %s15 = scalar_lea.sflag [#allocation3], 1
    %16 = vsyncpa %s15, 0
    loop: start=0, step=1, limit=4
    $region2: #{tpu_custom_call.1} parent=1 // loop_pre_header
      _
    $region3: #{tpu_custom_call.1} parent=1 // loop_header
      %s18 = sphi 0, %s22
      %p19 = scmp.ge.s32.totalorder %s18, 4
      %s28 = sphi 0, %s30
      %s31 = sphi 0, %s28
      %s32 = sphi 0, %s31
      %s48 = sphi 0, %s32
      %s52 = sphi 0, %s52
      %s54 = sphi 0, %s52
      %s55 = sphi 0, %s54
      %s69 = sphi 0, %s55
      %s73 = sphi 0, %s73
      %s75 = sphi 0, %s73
      %s76 = sphi 0, %s75
      %s90 = sphi 0, %s76
      %s94 = sphi 0, %s94
      %s96 = sphi 0, %s94
      %s97 = sphi 0, %s96
      %s111 = sphi 0, %s97
      %s115 = sphi 0, %s115
      %s117 = sphi 0, %s115
      %s118 = sphi 0, %s117
      %s132 = sphi 0, %s118
      %s136 = sphi 0, %s136
      %s138 = sphi 0, %s136
      %s139 = sphi 0, %s138
      %s153 = sphi 0, %s139
      %s157 = sphi 0, %s157
      %s159 = sphi 0, %s157
      %s160 = sphi 0, %s159
      %s174 = sphi 0, %s160
      %s178 = sphi 0, %s178
      %s180 = sphi 0, %s178
      %s181 = sphi 0, %s180
      %s195 = sphi 0, %s181
      %s199 = sphi 0, %s199
      %s201 = sphi 0, %s199
      %s202 = sphi 0, %s201
      %s216 = sphi 0, %s202
      %s222 = sphi 0, %s224
      %s225 = sphi 0, %s222
      %s226 = sphi 0, %s225
      %s242 = sphi 0, %s226
    $region4: #{tpu_custom_call.1} parent=1 // loop_header_branch
      %21 = sbr.rel (%p19) target = $region8
    $region5: #{tpu_custom_call.1} parent=1 // loop_body
      %s23 = ssub.s32 %s18, 1
      %s24 = ssub.s32 %s18, 2
      %s25 = sadd.s32 %s18, 1
      %s26 = ssub.s32 %s18, %s25
      %p27 = scmp.eq.s32.totalorder %s26, 0
      %s29 = sadd.s32 %s28, 1
      %s30 = scalar_select %p27, %s28, %s29
      %p33 = pneg %p27
      %p34 = scmp.eq.s32.totalorder %s18, 1
      %p35 = por %p33, %p34
      %p36 = scmp.ne.s32.totalorder %s28, %s31
      %p37 = scmp.eq.s32.totalorder %s18, 0
      %p38 = por %p36, %p37
      %p39 = scmp.ne.s32.totalorder %s28, %s31
      %p40 = scmp.eq.s32.totalorder %s23, 1
      %p41 = por %p39, %p40
      %p42 = scmp.ne.s32.totalorder %s31, %s32
      %p43 = scmp.eq.s32.totalorder %s23, 0
      %p44 = por %p42, %p43
      %p45 = scmp.ne.s32.totalorder %s31, %s32
      %p46 = scmp.eq.s32.totalorder %s24, 1
      %p47 = por %p45, %p46
      %p49 = scmp.ne.s32.totalorder %s32, %s48
      %p50 = scmp.eq.s32.totalorder %s24, 0
      %p51 = por %p49, %p50
      %s53 = sadd.s32 %s52, 1
      %p56 = scmp.eq.s32.totalorder %s18, 1
      %p57 = scmp.ne.s32.totalorder %s52, %s54
      %p58 = scmp.eq.s32.totalorder %s18, 0
      %p59 = por %p57, %p58
      %p60 = scmp.ne.s32.totalorder %s52, %s54
      %p61 = scmp.eq.s32.totalorder %s23, 1
      %p62 = por %p60, %p61
      %p63 = scmp.ne.s32.totalorder %s54, %s55
      %p64 = scmp.eq.s32.totalorder %s23, 0
      %p65 = por %p63, %p64
      %p66 = scmp.ne.s32.totalorder %s54, %s55
      %p67 = scmp.eq.s32.totalorder %s24, 1
      %p68 = por %p66, %p67
      %p70 = scmp.ne.s32.totalorder %s55, %s69
      %p71 = scmp.eq.s32.totalorder %s24, 0
      %p72 = por %p70, %p71
      %s74 = sadd.s32 %s73, 1
      %p77 = scmp.eq.s32.totalorder %s18, 1
      %p78 = scmp.ne.s32.totalorder %s73, %s75
      %p79 = scmp.eq.s32.totalorder %s18, 0
      %p80 = por %p78, %p79
      %p81 = scmp.ne.s32.totalorder %s73, %s75
      %p82 = scmp.eq.s32.totalorder %s23, 1
      %p83 = por %p81, %p82
      %p84 = scmp.ne.s32.totalorder %s75, %s76
      %p85 = scmp.eq.s32.totalorder %s23, 0
      %p86 = por %p84, %p85
      %p87 = scmp.ne.s32.totalorder %s75, %s76
      %p88 = scmp.eq.s32.totalorder %s24, 1
      %p89 = por %p87, %p88
      %p91 = scmp.ne.s32.totalorder %s76, %s90
      %p92 = scmp.eq.s32.totalorder %s24, 0
      %p93 = por %p91, %p92
      %s95 = sadd.s32 %s94, 1
      %p98 = scmp.eq.s32.totalorder %s18, 1
      %p99 = scmp.ne.s32.totalorder %s94, %s96
      %p100 = scmp.eq.s32.totalorder %s18, 0
      %p101 = por %p99, %p100
      %p102 = scmp.ne.s32.totalorder %s94, %s96
      %p103 = scmp.eq.s32.totalorder %s23, 1
      %p104 = por %p102, %p103
      %p105 = scmp.ne.s32.totalorder %s96, %s97
      %p106 = scmp.eq.s32.totalorder %s23, 0
      %p107 = por %p105, %p106
      %p108 = scmp.ne.s32.totalorder %s96, %s97
      %p109 = scmp.eq.s32.totalorder %s24, 1
      %p110 = por %p108, %p109
      %p112 = scmp.ne.s32.totalorder %s97, %s111
      %p113 = scmp.eq.s32.totalorder %s24, 0
      %p114 = por %p112, %p113
      %s116 = sadd.s32 %s115, 1
      %p119 = scmp.eq.s32.totalorder %s18, 1
      %p120 = scmp.ne.s32.totalorder %s115, %s117
      %p121 = scmp.eq.s32.totalorder %s18, 0
      %p122 = por %p120, %p121
      %p123 = scmp.ne.s32.totalorder %s115, %s117
      %p124 = scmp.eq.s32.totalorder %s23, 1
      %p125 = por %p123, %p124
      %p126 = scmp.ne.s32.totalorder %s117, %s118
      %p127 = scmp.eq.s32.totalorder %s23, 0
      %p128 = por %p126, %p127
      %p129 = scmp.ne.s32.totalorder %s117, %s118
      %p130 = scmp.eq.s32.totalorder %s24, 1
      %p131 = por %p129, %p130
      %p133 = scmp.ne.s32.totalorder %s118, %s132
      %p134 = scmp.eq.s32.totalorder %s24, 0
      %p135 = por %p133, %p134
      %s137 = sadd.s32 %s136, 1
      %p140 = scmp.eq.s32.totalorder %s18, 1
      %p141 = scmp.ne.s32.totalorder %s136, %s138
      %p142 = scmp.eq.s32.totalorder %s18, 0
      %p143 = por %p141, %p142
      %p144 = scmp.ne.s32.totalorder %s136, %s138
      %p145 = scmp.eq.s32.totalorder %s23, 1
      %p146 = por %p144, %p145
      %p147 = scmp.ne.s32.totalorder %s138, %s139
      %p148 = scmp.eq.s32.totalorder %s23, 0
      %p149 = por %p147, %p148
      %p150 = scmp.ne.s32.totalorder %s138, %s139
      %p151 = scmp.eq.s32.totalorder %s24, 1
      %p152 = por %p150, %p151
      %p154 = scmp.ne.s32.totalorder %s139, %s153
      %p155 = scmp.eq.s32.totalorder %s24, 0
      %p156 = por %p154, %p155
      %s158 = sadd.s32 %s157, 1
      %p161 = scmp.eq.s32.totalorder %s18, 1
      %p162 = scmp.ne.s32.totalorder %s157, %s159
      %p163 = scmp.eq.s32.totalorder %s18, 0
      %p164 = por %p162, %p163
      %p165 = scmp.ne.s32.totalorder %s157, %s159
      %p166 = scmp.eq.s32.totalorder %s23, 1
      %p167 = por %p165, %p166
      %p168 = scmp.ne.s32.totalorder %s159, %s160
      %p169 = scmp.eq.s32.totalorder %s23, 0
      %p170 = por %p168, %p169
      %p171 = scmp.ne.s32.totalorder %s159, %s160
      %p172 = scmp.eq.s32.totalorder %s24, 1
      %p173 = por %p171, %p172
      %p175 = scmp.ne.s32.totalorder %s160, %s174
      %p176 = scmp.eq.s32.totalorder %s24, 0
      %p177 = por %p175, %p176
      %s179 = sadd.s32 %s178, 1
      %p182 = scmp.eq.s32.totalorder %s18, 1
      %p183 = scmp.ne.s32.totalorder %s178, %s180
      %p184 = scmp.eq.s32.totalorder %s18, 0
      %p185 = por %p183, %p184
      %p186 = scmp.ne.s32.totalorder %s178, %s180
      %p187 = scmp.eq.s32.totalorder %s23, 1
      %p188 = por %p186, %p187
      %p189 = scmp.ne.s32.totalorder %s180, %s181
      %p190 = scmp.eq.s32.totalorder %s23, 0
      %p191 = por %p189, %p190
      %p192 = scmp.ne.s32.totalorder %s180, %s181
      %p193 = scmp.eq.s32.totalorder %s24, 1
      %p194 = por %p192, %p193
      %p196 = scmp.ne.s32.totalorder %s181, %s195
      %p197 = scmp.eq.s32.totalorder %s24, 0
      %p198 = por %p196, %p197
      %s200 = sadd.s32 %s199, 1
      %p203 = scmp.eq.s32.totalorder %s18, 1
      %p204 = scmp.ne.s32.totalorder %s199, %s201
      %p205 = scmp.eq.s32.totalorder %s18, 0
      %p206 = por %p204, %p205
      %p207 = scmp.ne.s32.totalorder %s199, %s201
      %p208 = scmp.eq.s32.totalorder %s23, 1
      %p209 = por %p207, %p208
      %p210 = scmp.ne.s32.totalorder %s201, %s202
      %p211 = scmp.eq.s32.totalorder %s23, 0
      %p212 = por %p210, %p211
      %p213 = scmp.ne.s32.totalorder %s201, %s202
      %p214 = scmp.eq.s32.totalorder %s24, 1
      %p215 = por %p213, %p214
      %p217 = scmp.ne.s32.totalorder %s202, %s216
      %p218 = scmp.eq.s32.totalorder %s24, 0
      %p219 = por %p217, %p218
      %s220 = ssub.s32 %s18, %s25
      %p221 = scmp.eq.s32.totalorder %s220, 0
      %s223 = sadd.s32 %s222, 1
      %s224 = scalar_select %p221, %s222, %s223
      %p227 = pneg %p221
      %p228 = scmp.eq.s32.totalorder %s18, 1
      %p229 = por %p227, %p228
      %p230 = scmp.ne.s32.totalorder %s222, %s225
      %p231 = scmp.eq.s32.totalorder %s18, 0
      %p232 = por %p230, %p231
      %p233 = scmp.ne.s32.totalorder %s222, %s225
      %p234 = scmp.eq.s32.totalorder %s23, 1
      %p235 = por %p233, %p234
      %p236 = scmp.ne.s32.totalorder %s225, %s226
      %p237 = scmp.eq.s32.totalorder %s23, 0
      %p238 = por %p236, %p237
      %p239 = scmp.ne.s32.totalorder %s225, %s226
      %p240 = scmp.eq.s32.totalorder %s24, 1
      %p241 = por %p239, %p240
      %p243 = scmp.ne.s32.totalorder %s226, %s242
      %p244 = scmp.eq.s32.totalorder %s24, 0
      %p245 = por %p243, %p244
      %p246 = scmp.le.s32.totalorder 1, %s18
      %p247 = scmp.lt.s32.totalorder %s18, 3
      %p248 = pnand %p246, %p247
      %p249 = pneg %p248
      // Predicated region
      $region9: #{tpu_custom_call.1} parent=5 // pred_check
        _
      $region10: #{tpu_custom_call.1} parent=5 // pred_check_branch
        %251 = sbr.rel (%p248) target = $region12
      $region11: #{tpu_custom_call.1} parent=5 // pred_region
        %s252 = ssub.s32 %s18, 1
        // Predicated region
        $region13: #{tpu_custom_call.1} parent=11 // pred_check
          %p253 = pneg %p65
        $region14: #{tpu_custom_call.1} parent=11 // pred_check_branch
          %255 = sbr.rel (%p253) target = $region16
        $region15: #{tpu_custom_call.1} parent=11 // pred_region
          _
        $region16: #{tpu_custom_call.1} parent=11 // pred_fallthru
          _
        // Predicated region
        $region17: #{tpu_custom_call.1} parent=11 // pred_check
          %p256 = pneg %p86
        $region18: #{tpu_custom_call.1} parent=11 // pred_check_branch
          %258 = sbr.rel (%p256) target = $region20
        $region19: #{tpu_custom_call.1} parent=11 // pred_region
          _
        $region20: #{tpu_custom_call.1} parent=11 // pred_fallthru
          _
        // Predicated region
        $region21: #{tpu_custom_call.1} parent=11 // pred_check
          %p259 = pneg %p107
        $region22: #{tpu_custom_call.1} parent=11 // pred_check_branch
          %261 = sbr.rel (%p259) target = $region24
        $region23: #{tpu_custom_call.1} parent=11 // pred_region
          _
        $region24: #{tpu_custom_call.1} parent=11 // pred_fallthru
          _
        // Predicated region
        $region25: #{tpu_custom_call.1} parent=11 // pred_check
          %p262 = pneg %p128
        $region26: #{tpu_custom_call.1} parent=11 // pred_check_branch
          %264 = sbr.rel (%p262) target = $region28
        $region27: #{tpu_custom_call.1} parent=11 // pred_region
          _
        $region28: #{tpu_custom_call.1} parent=11 // pred_fallthru
          _
        // Predicated region
        $region29: #{tpu_custom_call.1} parent=11 // pred_check
          %p265 = pneg %p149
        $region30: #{tpu_custom_call.1} parent=11 // pred_check_branch
          %267 = sbr.rel (%p265) target = $region32
        $region31: #{tpu_custom_call.1} parent=11 // pred_region
          _
        $region32: #{tpu_custom_call.1} parent=11 // pred_fallthru
          _
        // Predicated region
        $region33: #{tpu_custom_call.1} parent=11 // pred_check
          %p268 = pneg %p170
        $region34: #{tpu_custom_call.1} parent=11 // pred_check_branch
          %270 = sbr.rel (%p268) target = $region36
        $region35: #{tpu_custom_call.1} parent=11 // pred_region
          _
        $region36: #{tpu_custom_call.1} parent=11 // pred_fallthru
          _
        // Predicated region
        $region37: #{tpu_custom_call.1} parent=11 // pred_check
          %p271 = pneg %p191
        $region38: #{tpu_custom_call.1} parent=11 // pred_check_branch
          %273 = sbr.rel (%p271) target = $region40
        $region39: #{tpu_custom_call.1} parent=11 // pred_region
          _
        $region40: #{tpu_custom_call.1} parent=11 // pred_fallthru
          _
        // Predicated region
        $region41: #{tpu_custom_call.1} parent=11 // pred_check
          %p274 = pneg %p212
        $region42: #{tpu_custom_call.1} parent=11 // pred_check_branch
          %276 = sbr.rel (%p274) target = $region44
        $region43: #{tpu_custom_call.1} parent=11 // pred_region
          _
        $region44: #{tpu_custom_call.1} parent=11 // pred_fallthru
          _
      $region12: #{tpu_custom_call.1} parent=5 // pred_fallthru
        _
      %p277 = scmp.lt.s32.totalorder %s18, 2
      // Predicated region
      $region45: #{tpu_custom_call.1} parent=5 // pred_check
        %p278 = pneg %p277
      $region46: #{tpu_custom_call.1} parent=5 // pred_check_branch
        %280 = sbr.rel (%p278) target = $region48
      $region47: #{tpu_custom_call.1} parent=5 // pred_region
        // Predicated region
        $region49: #{tpu_custom_call.1} parent=47 // pred_check
          %p281 = pneg %p38
        $region50: #{tpu_custom_call.1} parent=47 // pred_check_branch
          %283 = sbr.rel (%p281) target = $region52
        $region51: #{tpu_custom_call.1} parent=47 // pred_region
          %s284 = smul.u32 64, %s18
          %p285 = scmp.lt.s32.totalorder %s284, 127
          %s286 = scalar_select %p285, %s284, 127
          %s287 = smul.addr %s286, 8
          %s288 = scalar_lea.vmem %s0, %s287
          %s289 = smul.u32 64, %s18
        $region52: #{tpu_custom_call.1} parent=47 // pred_fallthru
          _
      $region48: #{tpu_custom_call.1} parent=5 // pred_fallthru
        _
      %p290 = scmp.le.s32.totalorder 1, %s18
      %p291 = scmp.lt.s32.totalorder %s18, 3
      %p292 = pnand %p290, %p291
      %p293 = pneg %p292
      // Predicated region
      $region53: #{tpu_custom_call.1} parent=5 // pred_check
        _
      $region54: #{tpu_custom_call.1} parent=5 // pred_check_branch
        %295 = sbr.rel (%p292) target = $region56
      $region55: #{tpu_custom_call.1} parent=5 // pred_region
        %s296 = ssub.s32 %s18, 1
        %s297 = smul.u32 64, %s23
        %p298 = scmp.lt.s32.totalorder %s297, 127
        %s299 = scalar_select %p298, %s297, 127
        %s300 = smul.addr %s299, 8
        %s301 = scalar_lea.vmem %s0, %s300
        %p302 = pneg %p44
        %p303 = pneg %p41
        %p304 = pneg %p65
        %p305 = pneg %p62
        %p306 = pneg %p86
        %p307 = pneg %p83
        %p308 = pneg %p107
        %p309 = pneg %p104
        %p310 = pneg %p128
        %p311 = pneg %p125
        %p312 = pneg %p149
        %p313 = pneg %p146
        %p314 = pneg %p170
        %p315 = pneg %p167
        %p316 = pneg %p191
        %p317 = pneg %p188
        %p318 = pneg %p212
        %p319 = pneg %p209
        %p320 = pneg %p238
        %p321 = pneg %p235
        %s322 = sand.u32 %s225, 1
        %s323 = scalar_lea.sflag [#allocation3], %s322
        %s324 = sand.u32 %s225, 1
        %s325 = smul.addr %s324, 512
        %s326 = scalar_lea.vmem [#allocation2], %s325
        %s327 = smul.u32 64, %s23
        %p328 = scmp.lt.s32.totalorder %s327, 127
        %s329 = scalar_select %p328, %s327, 127
        %s330 = smul.addr %s329, 8
        %s331 = scalar_lea.vmem %s0, %s330
        %s332 = smul.u32 64, %s23
        %s333 = smul.u32 64, %s23
        %v335 = vld [vmem:[%s331] sm:$0xff]
        %v336 = vld [vmem:[%s331 + $0x8] sm:$0xff]
        %v337 = vld [vmem:[%s331 + $0x10] sm:$0xff]
        %v338 = vld [vmem:[%s331 + $0x18] sm:$0xff]
        %v339 = vld [vmem:[%s331 + $0x20] sm:$0xff]
        %v340 = vld [vmem:[%s331 + $0x28] sm:$0xff]
        %v341 = vld [vmem:[%s331 + $0x30] sm:$0xff]
        %v342 = vld [vmem:[%s331 + $0x38] sm:$0xff]
        %v343 = vld [vmem:[%s331 + $0x40] sm:$0xff]
        %v344 = vld [vmem:[%s331 + $0x48] sm:$0xff]
        %v345 = vld [vmem:[%s331 + $0x50] sm:$0xff]
        %v346 = vld [vmem:[%s331 + $0x58] sm:$0xff]
        %v347 = vld [vmem:[%s331 + $0x60] sm:$0xff]
        %v348 = vld [vmem:[%s331 + $0x68] sm:$0xff]
        %v349 = vld [vmem:[%s331 + $0x70] sm:$0xff]
        %v350 = vld [vmem:[%s331 + $0x78] sm:$0xff]
        %v351 = vld [vmem:[%s331 + $0x80] sm:$0xff]
        %v352 = vld [vmem:[%s331 + $0x88] sm:$0xff]
        %v353 = vld [vmem:[%s331 + $0x90] sm:$0xff]
        %v354 = vld [vmem:[%s331 + $0x98] sm:$0xff]
        %v355 = vld [vmem:[%s331 + $0xa0] sm:$0xff]
        %v356 = vld [vmem:[%s331 + $0xa8] sm:$0xff]
        %v357 = vld [vmem:[%s331 + $0xb0] sm:$0xff]
        %v358 = vld [vmem:[%s331 + $0xb8] sm:$0xff]
        %v359 = vld [vmem:[%s331 + $0xc0] sm:$0xff]
        %v360 = vld [vmem:[%s331 + $0xc8] sm:$0xff]
        %v361 = vld [vmem:[%s331 + $0xd0] sm:$0xff]
        %v362 = vld [vmem:[%s331 + $0xd8] sm:$0xff]
        %v363 = vld [vmem:[%s331 + $0xe0] sm:$0xff]
        %v364 = vld [vmem:[%s331 + $0xe8] sm:$0xff]
        %v365 = vld [vmem:[%s331 + $0xf0] sm:$0xff]
        %v366 = vld [vmem:[%s331 + $0xf8] sm:$0xff]
        %v367 = vld [vmem:[%s331 + $0x100] sm:$0xff]
        %v368 = vld [vmem:[%s331 + $0x108] sm:$0xff]
        %v369 = vld [vmem:[%s331 + $0x110] sm:$0xff]
        %v370 = vld [vmem:[%s331 + $0x118] sm:$0xff]
        %v371 = vld [vmem:[%s331 + $0x120] sm:$0xff]
        %v372 = vld [vmem:[%s331 + $0x128] sm:$0xff]
        %v373 = vld [vmem:[%s331 + $0x130] sm:$0xff]
        %v374 = vld [vmem:[%s331 + $0x138] sm:$0xff]
        %v375 = vld [vmem:[%s331 + $0x140] sm:$0xff]
        %v376 = vld [vmem:[%s331 + $0x148] sm:$0xff]
        %v377 = vld [vmem:[%s331 + $0x150] sm:$0xff]
        %v378 = vld [vmem:[%s331 + $0x158] sm:$0xff]
        %v379 = vld [vmem:[%s331 + $0x160] sm:$0xff]
        %v380 = vld [vmem:[%s331 + $0x168] sm:$0xff]
        %v381 = vld [vmem:[%s331 + $0x170] sm:$0xff]
        %v382 = vld [vmem:[%s331 + $0x178] sm:$0xff]
        %v383 = vld [vmem:[%s331 + $0x180] sm:$0xff]
        %v384 = vld [vmem:[%s331 + $0x188] sm:$0xff]
        %v385 = vld [vmem:[%s331 + $0x190] sm:$0xff]
        %v386 = vld [vmem:[%s331 + $0x198] sm:$0xff]
        %v387 = vld [vmem:[%s331 + $0x1a0] sm:$0xff]
        %v388 = vld [vmem:[%s331 + $0x1a8] sm:$0xff]
        %v389 = vld [vmem:[%s331 + $0x1b0] sm:$0xff]
        %v390 = vld [vmem:[%s331 + $0x1b8] sm:$0xff]
        %v391 = vld [vmem:[%s331 + $0x1c0] sm:$0xff]
        %v392 = vld [vmem:[%s331 + $0x1c8] sm:$0xff]
        %v393 = vld [vmem:[%s331 + $0x1d0] sm:$0xff]
        %v394 = vld [vmem:[%s331 + $0x1d8] sm:$0xff]
        %v395 = vld [vmem:[%s331 + $0x1e0] sm:$0xff]
        %v396 = vld [vmem:[%s331 + $0x1e8] sm:$0xff]
        %v397 = vld [vmem:[%s331 + $0x1f0] sm:$0xff]
        %v398 = vld [vmem:[%s331 + $0x1f8] sm:$0xff]
        %v399 = vpack.c.bf16 %v336, %v335
        %v400 = vpack.c.bf16 %v338, %v337
        %v401 = vpack.c.bf16 %v340, %v339
        %v402 = vpack.c.bf16 %v342, %v341
        %v403 = vpack.c.bf16 %v344, %v343
        %v404 = vpack.c.bf16 %v346, %v345
        %v405 = vpack.c.bf16 %v348, %v347
        %v406 = vpack.c.bf16 %v350, %v349
        %v407 = vpack.c.bf16 %v352, %v351
        %v408 = vpack.c.bf16 %v354, %v353
        %v409 = vpack.c.bf16 %v356, %v355
        %v410 = vpack.c.bf16 %v358, %v357
        %v411 = vpack.c.bf16 %v360, %v359
        %v412 = vpack.c.bf16 %v362, %v361
        %v413 = vpack.c.bf16 %v364, %v363
        %v414 = vpack.c.bf16 %v366, %v365
        %v415 = vpack.c.bf16 %v368, %v367
        %v416 = vpack.c.bf16 %v370, %v369
        %v417 = vpack.c.bf16 %v372, %v371
        %v418 = vpack.c.bf16 %v374, %v373
        %v419 = vpack.c.bf16 %v376, %v375
        %v420 = vpack.c.bf16 %v378, %v377
        %v421 = vpack.c.bf16 %v380, %v379
        %v422 = vpack.c.bf16 %v382, %v381
        %v423 = vpack.c.bf16 %v384, %v383
        %v424 = vpack.c.bf16 %v386, %v385
        %v425 = vpack.c.bf16 %v388, %v387
        %v426 = vpack.c.bf16 %v390, %v389
        %v427 = vpack.c.bf16 %v392, %v391
        %v428 = vpack.c.bf16 %v394, %v393
        %v429 = vpack.c.bf16 %v396, %v395
        %v430 = vpack.c.bf16 %v398, %v397
        %v431 = vld [vmem:[%s1] sm:$0xf]
        %v432 = vld [vmem:[%s1 + $0x4] sm:$0xf]
        %v433 = vld [vmem:[%s1 + $0x8] sm:$0xf]
        %v434 = vld [vmem:[%s1 + $0xc] sm:$0xf]
        %v435 = vld [vmem:[%s2] sm:$0x1]
        %v437 = vperm.slane %v435, 0
        %v443 = vunpack.c.l.b16 %v431
        %v444 = vunpack.c.l.b16 %v432
        %v445 = vunpack.c.l.b16 %v433
        %v446 = vunpack.c.l.b16 %v434
        %v447 = vpack.c.b16 %v444, %v443
        %v448 = vpack.c.b16 %v446, %v445
        %vm451 = vcmask 261120
        %v453 = vsel %vm451, %v399, 0
        %v456 = vsel %vm451, %v400, 0
        %v459 = vsel %vm451, %v401, 0
        %v462 = vsel %vm451, %v402, 0
        %v465 = vsel %vm451, %v403, 0
        %v468 = vsel %vm451, %v404, 0
        %v471 = vsel %vm451, %v405, 0
        %v474 = vsel %vm451, %v406, 0
        %v477 = vsel %vm451, %v407, 0
        %v480 = vsel %vm451, %v408, 0
        %v483 = vsel %vm451, %v409, 0
        %v486 = vsel %vm451, %v410, 0
        %v489 = vsel %vm451, %v411, 0
        %v492 = vsel %vm451, %v412, 0
        %v495 = vsel %vm451, %v413, 0
        %v498 = vsel %vm451, %v414, 0
        %v501 = vsel %vm451, %v415, 0
        %v504 = vsel %vm451, %v416, 0
        %v507 = vsel %vm451, %v417, 0
        %v510 = vsel %vm451, %v418, 0
        %v513 = vsel %vm451, %v419, 0
        %v516 = vsel %vm451, %v420, 0
        %v519 = vsel %vm451, %v421, 0
        %v522 = vsel %vm451, %v422, 0
        %v525 = vsel %vm451, %v423, 0
        %v528 = vsel %vm451, %v424, 0
        %v531 = vsel %vm451, %v425, 0
        %v534 = vsel %vm451, %v426, 0
        %v537 = vsel %vm451, %v427, 0
        %v540 = vsel %vm451, %v428, 0
        %v543 = vsel %vm451, %v429, 0
        %v546 = vsel %vm451, %v430, 0
        %548 = vmatpush.bf16.msra.mxu0 0
        %549 = vmatpush.bf16.msra.mxu0 0
        %550 = vmatpush.bf16.msra.mxu0 0
        %551 = vmatpush.bf16.msra.mxu0 0
        %552 = vmatpush.bf16.msra.mxu0 0
        %553 = vmatpush.bf16.msra.mxu0 0
        %554 = vmatpush.bf16.msra.mxu0 %v448
        %555 = vmatpush.bf16.msra.mxu0 %v447
        %556 = vmatmul.bf16.gmra.mxu0 %v453
        %v557 = vpop.f32.mrf.mxu0
        %v558 = vadd.f32 %v437, %v557
        %v559 = vpop.f32.mrf.mxu0
        %v560 = vadd.f32 %v437, %v559
        %561 = vmatmul.bf16.gmra.mxu0 %v456
        %v562 = vpop.f32.mrf.mxu0
        %v563 = vadd.f32 %v437, %v562
        %v564 = vpop.f32.mrf.mxu0
        %v565 = vadd.f32 %v437, %v564
        %566 = vmatmul.bf16.gmra.mxu0 %v459
        %v567 = vpop.f32.mrf.mxu0
        %v568 = vadd.f32 %v437, %v567
        %v569 = vpop.f32.mrf.mxu0
        %v570 = vadd.f32 %v437, %v569
        %571 = vmatmul.bf16.gmra.mxu0 %v462
        %v572 = vpop.f32.mrf.mxu0
        %v573 = vadd.f32 %v437, %v572
        %v574 = vpop.f32.mrf.mxu0
        %v575 = vadd.f32 %v437, %v574
        %576 = vmatmul.bf16.gmra.mxu0 %v465
        %v577 = vpop.f32.mrf.mxu0
        %v578 = vadd.f32 %v437, %v577
        %v579 = vpop.f32.mrf.mxu0
        %v580 = vadd.f32 %v437, %v579
        %581 = vmatmul.bf16.gmra.mxu0 %v468
        %v582 = vpop.f32.mrf.mxu0
        %v583 = vadd.f32 %v437, %v582
        %v584 = vpop.f32.mrf.mxu0
        %v585 = vadd.f32 %v437, %v584
        %586 = vmatmul.bf16.gmra.mxu0 %v471
        %v587 = vpop.f32.mrf.mxu0
        %v588 = vadd.f32 %v437, %v587
        %v589 = vpop.f32.mrf.mxu0
        %v590 = vadd.f32 %v437, %v589
        %591 = vmatmul.bf16.gmra.mxu0 %v474
        %v592 = vpop.f32.mrf.mxu0
        %v593 = vadd.f32 %v437, %v592
        %v594 = vpop.f32.mrf.mxu0
        %v595 = vadd.f32 %v437, %v594
        %596 = vmatmul.bf16.gmra.mxu0 %v477
        %v597 = vpop.f32.mrf.mxu0
        %v598 = vadd.f32 %v437, %v597
        %v599 = vpop.f32.mrf.mxu0
        %v600 = vadd.f32 %v437, %v599
        %601 = vmatmul.bf16.gmra.mxu0 %v480
        %v602 = vpop.f32.mrf.mxu0
        %v603 = vadd.f32 %v437, %v602
        %v604 = vpop.f32.mrf.mxu0
        %v605 = vadd.f32 %v437, %v604
        %606 = vmatmul.bf16.gmra.mxu0 %v483
        %v607 = vpop.f32.mrf.mxu0
        %v608 = vadd.f32 %v437, %v607
        %v609 = vpop.f32.mrf.mxu0
        %v610 = vadd.f32 %v437, %v609
        %611 = vmatmul.bf16.gmra.mxu0 %v486
        %v612 = vpop.f32.mrf.mxu0
        %v613 = vadd.f32 %v437, %v612
        %v614 = vpop.f32.mrf.mxu0
        %v615 = vadd.f32 %v437, %v614
        %616 = vmatmul.bf16.gmra.mxu0 %v489
        %v617 = vpop.f32.mrf.mxu0
        %v618 = vadd.f32 %v437, %v617
        %v619 = vpop.f32.mrf.mxu0
        %v620 = vadd.f32 %v437, %v619
        %621 = vmatmul.bf16.gmra.mxu0 %v492
        %v622 = vpop.f32.mrf.mxu0
        %v623 = vadd.f32 %v437, %v622
        %v624 = vpop.f32.mrf.mxu0
        %v625 = vadd.f32 %v437, %v624
        %626 = vmatmul.bf16.gmra.mxu0 %v495
        %v627 = vpop.f32.mrf.mxu0
        %v628 = vadd.f32 %v437, %v627
        %v629 = vpop.f32.mrf.mxu0
        %v630 = vadd.f32 %v437, %v629
        %631 = vmatmul.bf16.gmra.mxu0 %v498
        %v632 = vpop.f32.mrf.mxu0
        %v633 = vadd.f32 %v437, %v632
        %v634 = vpop.f32.mrf.mxu0
        %v635 = vadd.f32 %v437, %v634
        %636 = vmatmul.bf16.gmra.mxu0 %v501
        %v637 = vpop.f32.mrf.mxu0
        %v638 = vadd.f32 %v437, %v637
        %v639 = vpop.f32.mrf.mxu0
        %v640 = vadd.f32 %v437, %v639
        %641 = vmatmul.bf16.gmra.mxu0 %v504
        %v642 = vpop.f32.mrf.mxu0
        %v643 = vadd.f32 %v437, %v642
        %v644 = vpop.f32.mrf.mxu0
        %v645 = vadd.f32 %v437, %v644
        %646 = vmatmul.bf16.gmra.mxu0 %v507
        %v647 = vpop.f32.mrf.mxu0
        %v648 = vadd.f32 %v437, %v647
        %v649 = vpop.f32.mrf.mxu0
        %v650 = vadd.f32 %v437, %v649
        %651 = vmatmul.bf16.gmra.mxu0 %v510
        %v652 = vpop.f32.mrf.mxu0
        %v653 = vadd.f32 %v437, %v652
        %v654 = vpop.f32.mrf.mxu0
        %v655 = vadd.f32 %v437, %v654
        %656 = vmatmul.bf16.gmra.mxu0 %v513
        %v657 = vpop.f32.mrf.mxu0
        %v658 = vadd.f32 %v437, %v657
        %v659 = vpop.f32.mrf.mxu0
        %v660 = vadd.f32 %v437, %v659
        %661 = vmatmul.bf16.gmra.mxu0 %v516
        %v662 = vpop.f32.mrf.mxu0
        %v663 = vadd.f32 %v437, %v662
        %v664 = vpop.f32.mrf.mxu0
        %v665 = vadd.f32 %v437, %v664
        %666 = vmatmul.bf16.gmra.mxu0 %v519
        %v667 = vpop.f32.mrf.mxu0
        %v668 = vadd.f32 %v437, %v667
        %v669 = vpop.f32.mrf.mxu0
        %v670 = vadd.f32 %v437, %v669
        %671 = vmatmul.bf16.gmra.mxu0 %v522
        %v672 = vpop.f32.mrf.mxu0
        %v673 = vadd.f32 %v437, %v672
        %v674 = vpop.f32.mrf.mxu0
        %v675 = vadd.f32 %v437, %v674
        %676 = vmatmul.bf16.gmra.mxu0 %v525
        %v677 = vpop.f32.mrf.mxu0
        %v678 = vadd.f32 %v437, %v677
        %v679 = vpop.f32.mrf.mxu0
        %v680 = vadd.f32 %v437, %v679
        %681 = vmatmul.bf16.gmra.mxu0 %v528
        %v682 = vpop.f32.mrf.mxu0
        %v683 = vadd.f32 %v437, %v682
        %v684 = vpop.f32.mrf.mxu0
        %v685 = vadd.f32 %v437, %v684
        %686 = vmatmul.bf16.gmra.mxu0 %v531
        %v687 = vpop.f32.mrf.mxu0
        %v688 = vadd.f32 %v437, %v687
        %v689 = vpop.f32.mrf.mxu0
        %v690 = vadd.f32 %v437, %v689
        %691 = vmatmul.bf16.gmra.mxu0 %v534
        %v692 = vpop.f32.mrf.mxu0
        %v693 = vadd.f32 %v437, %v692
        %v694 = vpop.f32.mrf.mxu0
        %v695 = vadd.f32 %v437, %v694
        %696 = vmatmul.bf16.gmra.mxu0 %v537
        %v697 = vpop.f32.mrf.mxu0
        %v698 = vadd.f32 %v437, %v697
        %v699 = vpop.f32.mrf.mxu0
        %v700 = vadd.f32 %v437, %v699
        %701 = vmatmul.bf16.gmra.mxu0 %v540
        %v702 = vpop.f32.mrf.mxu0
        %v703 = vadd.f32 %v437, %v702
        %v704 = vpop.f32.mrf.mxu0
        %v705 = vadd.f32 %v437, %v704
        %706 = vmatmul.bf16.gmra.mxu0 %v543
        %v707 = vpop.f32.mrf.mxu0
        %v708 = vadd.f32 %v437, %v707
        %v709 = vpop.f32.mrf.mxu0
        %v710 = vadd.f32 %v437, %v709
        %711 = vmatmul.bf16.gmra.mxu0 %v546
        %v712 = vpop.f32.mrf.mxu0
        %v713 = vadd.f32 %v437, %v712
        %v714 = vpop.f32.mrf.mxu0
        %v715 = vadd.f32 %v437, %v714
        %716 = vdwg.mxu0
        %v717 = vxor.u32 %v558, 2147483648
        %v718 = vxor.u32 %v560, 2147483648
        %v719 = vxor.u32 %v563, 2147483648
        %v720 = vxor.u32 %v565, 2147483648
        %v721 = vxor.u32 %v568, 2147483648
        %v722 = vxor.u32 %v570, 2147483648
        %v723 = vxor.u32 %v573, 2147483648
        %v724 = vxor.u32 %v575, 2147483648
        %v725 = vxor.u32 %v578, 2147483648
        %v726 = vxor.u32 %v580, 2147483648
        %v727 = vxor.u32 %v583, 2147483648
        %v728 = vxor.u32 %v585, 2147483648
        %v729 = vxor.u32 %v588, 2147483648
        %v730 = vxor.u32 %v590, 2147483648
        %v731 = vxor.u32 %v593, 2147483648
        %v732 = vxor.u32 %v595, 2147483648
        %v733 = vxor.u32 %v598, 2147483648
        %v734 = vxor.u32 %v600, 2147483648
        %v735 = vxor.u32 %v603, 2147483648
        %v736 = vxor.u32 %v605, 2147483648
        %v737 = vxor.u32 %v608, 2147483648
        %v738 = vxor.u32 %v610, 2147483648
        %v739 = vxor.u32 %v613, 2147483648
        %v740 = vxor.u32 %v615, 2147483648
        %v741 = vxor.u32 %v618, 2147483648
        %v742 = vxor.u32 %v620, 2147483648
        %v743 = vxor.u32 %v623, 2147483648
        %v744 = vxor.u32 %v625, 2147483648
        %v745 = vxor.u32 %v628, 2147483648
        %v746 = vxor.u32 %v630, 2147483648
        %v747 = vxor.u32 %v633, 2147483648
        %v748 = vxor.u32 %v635, 2147483648
        %v749 = vxor.u32 %v638, 2147483648
        %v750 = vxor.u32 %v640, 2147483648
        %v751 = vxor.u32 %v643, 2147483648
        %v752 = vxor.u32 %v645, 2147483648
        %v753 = vxor.u32 %v648, 2147483648
        %v754 = vxor.u32 %v650, 2147483648
        %v755 = vxor.u32 %v653, 2147483648
        %v756 = vxor.u32 %v655, 2147483648
        %v757 = vxor.u32 %v658, 2147483648
        %v758 = vxor.u32 %v660, 2147483648
        %v759 = vxor.u32 %v663, 2147483648
        %v760 = vxor.u32 %v665, 2147483648
        %v761 = vxor.u32 %v668, 2147483648
        %v762 = vxor.u32 %v670, 2147483648
        %v763 = vxor.u32 %v673, 2147483648
        %v764 = vxor.u32 %v675, 2147483648
        %v765 = vxor.u32 %v678, 2147483648
        %v766 = vxor.u32 %v680, 2147483648
        %v767 = vxor.u32 %v683, 2147483648
        %v768 = vxor.u32 %v685, 2147483648
        %v769 = vxor.u32 %v688, 2147483648
        %v770 = vxor.u32 %v690, 2147483648
        %v771 = vxor.u32 %v693, 2147483648
        %v772 = vxor.u32 %v695, 2147483648
        %v773 = vxor.u32 %v698, 2147483648
        %v774 = vxor.u32 %v700, 2147483648
        %v775 = vxor.u32 %v703, 2147483648
        %v776 = vxor.u32 %v705, 2147483648
        %v777 = vxor.u32 %v708, 2147483648
        %v778 = vxor.u32 %v710, 2147483648
        %v779 = vxor.u32 %v713, 2147483648
        %v780 = vxor.u32 %v715, 2147483648
        %v781 = vmul.f32 %v717, 1.442695
        %v782 = vpow.pop %v781
        %v783 = vmul.f32 %v718, 1.442695
        %v784 = vpow.pop %v783
        %v785 = vmul.f32 %v719, 1.442695
        %v786 = vpow.pop %v785
        %v787 = vmul.f32 %v720, 1.442695
        %v788 = vpow.pop %v787
        %v789 = vmul.f32 %v721, 1.442695
        %v790 = vpow.pop %v789
        %v791 = vmul.f32 %v722, 1.442695
        %v792 = vpow.pop %v791
        %v793 = vmul.f32 %v723, 1.442695
        %v794 = vpow.pop %v793
        %v795 = vmul.f32 %v724, 1.442695
        %v796 = vpow.pop %v795
        %v797 = vmul.f32 %v725, 1.442695
        %v798 = vpow.pop %v797
        %v799 = vmul.f32 %v726, 1.442695
        %v800 = vpow.pop %v799
        %v801 = vmul.f32 %v727, 1.442695
        %v802 = vpow.pop %v801
        %v803 = vmul.f32 %v728, 1.442695
        %v804 = vpow.pop %v803
        %v805 = vmul.f32 %v729, 1.442695
        %v806 = vpow.pop %v805
        %v807 = vmul.f32 %v730, 1.442695
        %v808 = vpow.pop %v807
        %v809 = vmul.f32 %v731, 1.442695
        %v810 = vpow.pop %v809
        %v811 = vmul.f32 %v732, 1.442695
        %v812 = vpow.pop %v811
        %v813 = vmul.f32 %v733, 1.442695
        %v814 = vpow.pop %v813
        %v815 = vmul.f32 %v734, 1.442695
        %v816 = vpow.pop %v815
        %v817 = vmul.f32 %v735, 1.442695
        %v818 = vpow.pop %v817
        %v819 = vmul.f32 %v736, 1.442695
        %v820 = vpow.pop %v819
        %v821 = vmul.f32 %v737, 1.442695
        %v822 = vpow.pop %v821
        %v823 = vmul.f32 %v738, 1.442695
        %v824 = vpow.pop %v823
        %v825 = vmul.f32 %v739, 1.442695
        %v826 = vpow.pop %v825
        %v827 = vmul.f32 %v740, 1.442695
        %v828 = vpow.pop %v827
        %v829 = vmul.f32 %v741, 1.442695
        %v830 = vpow.pop %v829
        %v831 = vmul.f32 %v742, 1.442695
        %v832 = vpow.pop %v831
        %v833 = vmul.f32 %v743, 1.442695
        %v834 = vpow.pop %v833
        %v835 = vmul.f32 %v744, 1.442695
        %v836 = vpow.pop %v835
        %v837 = vmul.f32 %v745, 1.442695
        %v838 = vpow.pop %v837
        %v839 = vmul.f32 %v746, 1.442695
        %v840 = vpow.pop %v839
        %v841 = vmul.f32 %v747, 1.442695
        %v842 = vpow.pop %v841
        %v843 = vmul.f32 %v748, 1.442695
        %v844 = vpow.pop %v843
        %v845 = vmul.f32 %v749, 1.442695
        %v846 = vpow.pop %v845
        %v847 = vmul.f32 %v750, 1.442695
        %v848 = vpow.pop %v847
        %v849 = vmul.f32 %v751, 1.442695
        %v850 = vpow.pop %v849
        %v851 = vmul.f32 %v752, 1.442695
        %v852 = vpow.pop %v851
        %v853 = vmul.f32 %v753, 1.442695
        %v854 = vpow.pop %v853
        %v855 = vmul.f32 %v754, 1.442695
        %v856 = vpow.pop %v855
        %v857 = vmul.f32 %v755, 1.442695
        %v858 = vpow.pop %v857
        %v859 = vmul.f32 %v756, 1.442695
        %v860 = vpow.pop %v859
        %v861 = vmul.f32 %v757, 1.442695
        %v862 = vpow.pop %v861
        %v863 = vmul.f32 %v758, 1.442695
        %v864 = vpow.pop %v863
        %v865 = vmul.f32 %v759, 1.442695
        %v866 = vpow.pop %v865
        %v867 = vmul.f32 %v760, 1.442695
        %v868 = vpow.pop %v867
        %v869 = vmul.f32 %v761, 1.442695
        %v870 = vpow.pop %v869
        %v871 = vmul.f32 %v762, 1.442695
        %v872 = vpow.pop %v871
        %v873 = vmul.f32 %v763, 1.442695
        %v874 = vpow.pop %v873
        %v875 = vmul.f32 %v764, 1.442695
        %v876 = vpow.pop %v875
        %v877 = vmul.f32 %v765, 1.442695
        %v878 = vpow.pop %v877
        %v879 = vmul.f32 %v766, 1.442695
        %v880 = vpow.pop %v879
        %v881 = vmul.f32 %v767, 1.442695
        %v882 = vpow.pop %v881
        %v883 = vmul.f32 %v768, 1.442695
        %v884 = vpow.pop %v883
        %v885 = vmul.f32 %v769, 1.442695
        %v886 = vpow.pop %v885
        %v887 = vmul.f32 %v770, 1.442695
        %v888 = vpow.pop %v887
        %v889 = vmul.f32 %v771, 1.442695
        %v890 = vpow.pop %v889
        %v891 = vmul.f32 %v772, 1.442695
        %v892 = vpow.pop %v891
        %v893 = vmul.f32 %v773, 1.442695
        %v894 = vpow.pop %v893
        %v895 = vmul.f32 %v774, 1.442695
        %v896 = vpow.pop %v895
        %v897 = vmul.f32 %v775, 1.442695
        %v898 = vpow.pop %v897
        %v899 = vmul.f32 %v776, 1.442695
        %v900 = vpow.pop %v899
        %v901 = vmul.f32 %v777, 1.442695
        %v902 = vpow.pop %v901
        %v903 = vmul.f32 %v778, 1.442695
        %v904 = vpow.pop %v903
        %v905 = vmul.f32 %v779, 1.442695
        %v906 = vpow.pop %v905
        %v907 = vmul.f32 %v780, 1.442695
        %v908 = vpow.pop %v907
        %v909 = vadd.f32 %v782, 1.0
        %v910 = vadd.f32 %v784, 1.0
        %v911 = vadd.f32 %v786, 1.0
        %v912 = vadd.f32 %v788, 1.0
        %v913 = vadd.f32 %v790, 1.0
        %v914 = vadd.f32 %v792, 1.0
        %v915 = vadd.f32 %v794, 1.0
        %v916 = vadd.f32 %v796, 1.0
        %v917 = vadd.f32 %v798, 1.0
        %v918 = vadd.f32 %v800, 1.0
        %v919 = vadd.f32 %v802, 1.0
        %v920 = vadd.f32 %v804, 1.0
        %v921 = vadd.f32 %v806, 1.0
        %v922 = vadd.f32 %v808, 1.0
        %v923 = vadd.f32 %v810, 1.0
        %v924 = vadd.f32 %v812, 1.0
        %v925 = vadd.f32 %v814, 1.0
        %v926 = vadd.f32 %v816, 1.0
        %v927 = vadd.f32 %v818, 1.0
        %v928 = vadd.f32 %v820, 1.0
        %v929 = vadd.f32 %v822, 1.0
        %v930 = vadd.f32 %v824, 1.0
        %v931 = vadd.f32 %v826, 1.0
        %v932 = vadd.f32 %v828, 1.0
        %v933 = vadd.f32 %v830, 1.0
        %v934 = vadd.f32 %v832, 1.0
        %v935 = vadd.f32 %v834, 1.0
        %v936 = vadd.f32 %v836, 1.0
        %v937 = vadd.f32 %v838, 1.0
        %v938 = vadd.f32 %v840, 1.0
        %v939 = vadd.f32 %v842, 1.0
        %v940 = vadd.f32 %v844, 1.0
        %v941 = vadd.f32 %v846, 1.0
        %v942 = vadd.f32 %v848, 1.0
        %v943 = vadd.f32 %v850, 1.0
        %v944 = vadd.f32 %v852, 1.0
        %v945 = vadd.f32 %v854, 1.0
        %v946 = vadd.f32 %v856, 1.0
        %v947 = vadd.f32 %v858, 1.0
        %v948 = vadd.f32 %v860, 1.0
        %v949 = vadd.f32 %v862, 1.0
        %v950 = vadd.f32 %v864, 1.0
        %v951 = vadd.f32 %v866, 1.0
        %v952 = vadd.f32 %v868, 1.0
        %v953 = vadd.f32 %v870, 1.0
        %v954 = vadd.f32 %v872, 1.0
        %v955 = vadd.f32 %v874, 1.0
        %v956 = vadd.f32 %v876, 1.0
        %v957 = vadd.f32 %v878, 1.0
        %v958 = vadd.f32 %v880, 1.0
        %v959 = vadd.f32 %v882, 1.0
        %v960 = vadd.f32 %v884, 1.0
        %v961 = vadd.f32 %v886, 1.0
        %v962 = vadd.f32 %v888, 1.0
        %v963 = vadd.f32 %v890, 1.0
        %v964 = vadd.f32 %v892, 1.0
        %v965 = vadd.f32 %v894, 1.0
        %v966 = vadd.f32 %v896, 1.0
        %v967 = vadd.f32 %v898, 1.0
        %v968 = vadd.f32 %v900, 1.0
        %v969 = vadd.f32 %v902, 1.0
        %v970 = vadd.f32 %v904, 1.0
        %v971 = vadd.f32 %v906, 1.0
        %v972 = vadd.f32 %v908, 1.0
        %v973 = vrcp.pop %v909
        %v974 = vmul.f32 %v909, %v973
        %v975 = vsub.f32 1.0, %v974
        %v976 = vmul.f32 %v973, %v975
        %v977 = vadd.f32 %v973, %v976
        %vm978 = vweird.f32 %v909
        %vm979 = vweird.f32 %v973
        %vm980 = vmor %vm978, %vm979
        %v981 = vsel %vm980, %v973, %v977
        %v982 = vand.u32 2147483647, %v909
        %vm983 = vcmp.eq.f32.partialorder %v982, 8.507059e+37
        %v984 = vand.u32 %v909, 2147483648
        %v985 = vor.u32 1.1754944e-38, %v984
        %v986 = vsel %vm983, %v985, %v981
        %v987 = vmul.f32 1.0, %v986
        %v988 = vrcp.pop %v910
        %v989 = vmul.f32 %v910, %v988
        %v990 = vsub.f32 1.0, %v989
        %v991 = vmul.f32 %v988, %v990
        %v992 = vadd.f32 %v988, %v991
        %vm993 = vweird.f32 %v910
        %vm994 = vweird.f32 %v988
        %vm995 = vmor %vm993, %vm994
        %v996 = vsel %vm995, %v988, %v992
        %v997 = vand.u32 2147483647, %v910
        %vm998 = vcmp.eq.f32.partialorder %v997, 8.507059e+37
        %v999 = vand.u32 %v910, 2147483648
        %v1000 = vor.u32 1.1754944e-38, %v999
        %v1001 = vsel %vm998, %v1000, %v996
        %v1002 = vmul.f32 1.0, %v1001
        %v1003 = vrcp.pop %v911
        %v1004 = vmul.f32 %v911, %v1003
        %v1005 = vsub.f32 1.0, %v1004
        %v1006 = vmul.f32 %v1003, %v1005
        %v1007 = vadd.f32 %v1003, %v1006
        %vm1008 = vweird.f32 %v911
        %vm1009 = vweird.f32 %v1003
        %vm1010 = vmor %vm1008, %vm1009
        %v1011 = vsel %vm1010, %v1003, %v1007
        %v1012 = vand.u32 2147483647, %v911
        %vm1013 = vcmp.eq.f32.partialorder %v1012, 8.507059e+37
        %v1014 = vand.u32 %v911, 2147483648
        %v1015 = vor.u32 1.1754944e-38, %v1014
        %v1016 = vsel %vm1013, %v1015, %v1011
        %v1017 = vmul.f32 1.0, %v1016
        %v1018 = vrcp.pop %v912
        %v1019 = vmul.f32 %v912, %v1018
        %v1020 = vsub.f32 1.0, %v1019
        %v1021 = vmul.f32 %v1018, %v1020
        %v1022 = vadd.f32 %v1018, %v1021
        %vm1023 = vweird.f32 %v912
        %vm1024 = vweird.f32 %v1018
        %vm1025 = vmor %vm1023, %vm1024
        %v1026 = vsel %vm1025, %v1018, %v1022
        %v1027 = vand.u32 2147483647, %v912
        %vm1028 = vcmp.eq.f32.partialorder %v1027, 8.507059e+37
        %v1029 = vand.u32 %v912, 2147483648
        %v1030 = vor.u32 1.1754944e-38, %v1029
        %v1031 = vsel %vm1028, %v1030, %v1026
        %v1032 = vmul.f32 1.0, %v1031
        %v1033 = vrcp.pop %v913
        %v1034 = vmul.f32 %v913, %v1033
        %v1035 = vsub.f32 1.0, %v1034
        %v1036 = vmul.f32 %v1033, %v1035
        %v1037 = vadd.f32 %v1033, %v1036
        %vm1038 = vweird.f32 %v913
        %vm1039 = vweird.f32 %v1033
        %vm1040 = vmor %vm1038, %vm1039
        %v1041 = vsel %vm1040, %v1033, %v1037
        %v1042 = vand.u32 2147483647, %v913
        %vm1043 = vcmp.eq.f32.partialorder %v1042, 8.507059e+37
        %v1044 = vand.u32 %v913, 2147483648
        %v1045 = vor.u32 1.1754944e-38, %v1044
        %v1046 = vsel %vm1043, %v1045, %v1041
        %v1047 = vmul.f32 1.0, %v1046
        %v1048 = vrcp.pop %v914
        %v1049 = vmul.f32 %v914, %v1048
        %v1050 = vsub.f32 1.0, %v1049
        %v1051 = vmul.f32 %v1048, %v1050
        %v1052 = vadd.f32 %v1048, %v1051
        %vm1053 = vweird.f32 %v914
        %vm1054 = vweird.f32 %v1048
        %vm1055 = vmor %vm1053, %vm1054
        %v1056 = vsel %vm1055, %v1048, %v1052
        %v1057 = vand.u32 2147483647, %v914
        %vm1058 = vcmp.eq.f32.partialorder %v1057, 8.507059e+37
        %v1059 = vand.u32 %v914, 2147483648
        %v1060 = vor.u32 1.1754944e-38, %v1059
        %v1061 = vsel %vm1058, %v1060, %v1056
        %v1062 = vmul.f32 1.0, %v1061
        %v1063 = vrcp.pop %v915
        %v1064 = vmul.f32 %v915, %v1063
        %v1065 = vsub.f32 1.0, %v1064
        %v1066 = vmul.f32 %v1063, %v1065
        %v1067 = vadd.f32 %v1063, %v1066
        %vm1068 = vweird.f32 %v915
        %vm1069 = vweird.f32 %v1063
        %vm1070 = vmor %vm1068, %vm1069
        %v1071 = vsel %vm1070, %v1063, %v1067
        %v1072 = vand.u32 2147483647, %v915
        %vm1073 = vcmp.eq.f32.partialorder %v1072, 8.507059e+37
        %v1074 = vand.u32 %v915, 2147483648
        %v1075 = vor.u32 1.1754944e-38, %v1074
        %v1076 = vsel %vm1073, %v1075, %v1071
        %v1077 = vmul.f32 1.0, %v1076
        %v1078 = vrcp.pop %v916
        %v1079 = vmul.f32 %v916, %v1078
        %v1080 = vsub.f32 1.0, %v1079
        %v1081 = vmul.f32 %v1078, %v1080
        %v1082 = vadd.f32 %v1078, %v1081
        %vm1083 = vweird.f32 %v916
        %vm1084 = vweird.f32 %v1078
        %vm1085 = vmor %vm1083, %vm1084
        %v1086 = vsel %vm1085, %v1078, %v1082
        %v1087 = vand.u32 2147483647, %v916
        %vm1088 = vcmp.eq.f32.partialorder %v1087, 8.507059e+37
        %v1089 = vand.u32 %v916, 2147483648
        %v1090 = vor.u32 1.1754944e-38, %v1089
        %v1091 = vsel %vm1088, %v1090, %v1086
        %v1092 = vmul.f32 1.0, %v1091
        %v1093 = vrcp.pop %v917
        %v1094 = vmul.f32 %v917, %v1093
        %v1095 = vsub.f32 1.0, %v1094
        %v1096 = vmul.f32 %v1093, %v1095
        %v1097 = vadd.f32 %v1093, %v1096
        %vm1098 = vweird.f32 %v917
        %vm1099 = vweird.f32 %v1093
        %vm1100 = vmor %vm1098, %vm1099
        %v1101 = vsel %vm1100, %v1093, %v1097
        %v1102 = vand.u32 2147483647, %v917
        %vm1103 = vcmp.eq.f32.partialorder %v1102, 8.507059e+37
        %v1104 = vand.u32 %v917, 2147483648
        %v1105 = vor.u32 1.1754944e-38, %v1104
        %v1106 = vsel %vm1103, %v1105, %v1101
        %v1107 = vmul.f32 1.0, %v1106
        %v1108 = vrcp.pop %v918
        %v1109 = vmul.f32 %v918, %v1108
        %v1110 = vsub.f32 1.0, %v1109
        %v1111 = vmul.f32 %v1108, %v1110
        %v1112 = vadd.f32 %v1108, %v1111
        %vm1113 = vweird.f32 %v918
        %vm1114 = vweird.f32 %v1108
        %vm1115 = vmor %vm1113, %vm1114
        %v1116 = vsel %vm1115, %v1108, %v1112
        %v1117 = vand.u32 2147483647, %v918
        %vm1118 = vcmp.eq.f32.partialorder %v1117, 8.507059e+37
        %v1119 = vand.u32 %v918, 2147483648
        %v1120 = vor.u32 1.1754944e-38, %v1119
        %v1121 = vsel %vm1118, %v1120, %v1116
        %v1122 = vmul.f32 1.0, %v1121
        %v1123 = vrcp.pop %v919
        %v1124 = vmul.f32 %v919, %v1123
        %v1125 = vsub.f32 1.0, %v1124
        %v1126 = vmul.f32 %v1123, %v1125
        %v1127 = vadd.f32 %v1123, %v1126
        %vm1128 = vweird.f32 %v919
        %vm1129 = vweird.f32 %v1123
        %vm1130 = vmor %vm1128, %vm1129
        %v1131 = vsel %vm1130, %v1123, %v1127
        %v1132 = vand.u32 2147483647, %v919
        %vm1133 = vcmp.eq.f32.partialorder %v1132, 8.507059e+37
        %v1134 = vand.u32 %v919, 2147483648
        %v1135 = vor.u32 1.1754944e-38, %v1134
        %v1136 = vsel %vm1133, %v1135, %v1131
        %v1137 = vmul.f32 1.0, %v1136
        %v1138 = vrcp.pop %v920
        %v1139 = vmul.f32 %v920, %v1138
        %v1140 = vsub.f32 1.0, %v1139
        %v1141 = vmul.f32 %v1138, %v1140
        %v1142 = vadd.f32 %v1138, %v1141
        %vm1143 = vweird.f32 %v920
        %vm1144 = vweird.f32 %v1138
        %vm1145 = vmor %vm1143, %vm1144
        %v1146 = vsel %vm1145, %v1138, %v1142
        %v1147 = vand.u32 2147483647, %v920
        %vm1148 = vcmp.eq.f32.partialorder %v1147, 8.507059e+37
        %v1149 = vand.u32 %v920, 2147483648
        %v1150 = vor.u32 1.1754944e-38, %v1149
        %v1151 = vsel %vm1148, %v1150, %v1146
        %v1152 = vmul.f32 1.0, %v1151
        %v1153 = vrcp.pop %v921
        %v1154 = vmul.f32 %v921, %v1153
        %v1155 = vsub.f32 1.0, %v1154
        %v1156 = vmul.f32 %v1153, %v1155
        %v1157 = vadd.f32 %v1153, %v1156
        %vm1158 = vweird.f32 %v921
        %vm1159 = vweird.f32 %v1153
        %vm1160 = vmor %vm1158, %vm1159
        %v1161 = vsel %vm1160, %v1153, %v1157
        %v1162 = vand.u32 2147483647, %v921
        %vm1163 = vcmp.eq.f32.partialorder %v1162, 8.507059e+37
        %v1164 = vand.u32 %v921, 2147483648
        %v1165 = vor.u32 1.1754944e-38, %v1164
        %v1166 = vsel %vm1163, %v1165, %v1161
        %v1167 = vmul.f32 1.0, %v1166
        %v1168 = vrcp.pop %v922
        %v1169 = vmul.f32 %v922, %v1168
        %v1170 = vsub.f32 1.0, %v1169
        %v1171 = vmul.f32 %v1168, %v1170
        %v1172 = vadd.f32 %v1168, %v1171
        %vm1173 = vweird.f32 %v922
        %vm1174 = vweird.f32 %v1168
        %vm1175 = vmor %vm1173, %vm1174
        %v1176 = vsel %vm1175, %v1168, %v1172
        %v1177 = vand.u32 2147483647, %v922
        %vm1178 = vcmp.eq.f32.partialorder %v1177, 8.507059e+37
        %v1179 = vand.u32 %v922, 2147483648
        %v1180 = vor.u32 1.1754944e-38, %v1179
        %v1181 = vsel %vm1178, %v1180, %v1176
        %v1182 = vmul.f32 1.0, %v1181
        %v1183 = vrcp.pop %v923
        %v1184 = vmul.f32 %v923, %v1183
        %v1185 = vsub.f32 1.0, %v1184
        %v1186 = vmul.f32 %v1183, %v1185
        %v1187 = vadd.f32 %v1183, %v1186
        %vm1188 = vweird.f32 %v923
        %vm1189 = vweird.f32 %v1183
        %vm1190 = vmor %vm1188, %vm1189
        %v1191 = vsel %vm1190, %v1183, %v1187
        %v1192 = vand.u32 2147483647, %v923
        %vm1193 = vcmp.eq.f32.partialorder %v1192, 8.507059e+37
        %v1194 = vand.u32 %v923, 2147483648
        %v1195 = vor.u32 1.1754944e-38, %v1194
        %v1196 = vsel %vm1193, %v1195, %v1191
        %v1197 = vmul.f32 1.0, %v1196
        %v1198 = vrcp.pop %v924
        %v1199 = vmul.f32 %v924, %v1198
        %v1200 = vsub.f32 1.0, %v1199
        %v1201 = vmul.f32 %v1198, %v1200
        %v1202 = vadd.f32 %v1198, %v1201
        %vm1203 = vweird.f32 %v924
        %vm1204 = vweird.f32 %v1198
        %vm1205 = vmor %vm1203, %vm1204
        %v1206 = vsel %vm1205, %v1198, %v1202
        %v1207 = vand.u32 2147483647, %v924
        %vm1208 = vcmp.eq.f32.partialorder %v1207, 8.507059e+37
        %v1209 = vand.u32 %v924, 2147483648
        %v1210 = vor.u32 1.1754944e-38, %v1209
        %v1211 = vsel %vm1208, %v1210, %v1206
        %v1212 = vmul.f32 1.0, %v1211
        %v1213 = vrcp.pop %v925
        %v1214 = vmul.f32 %v925, %v1213
        %v1215 = vsub.f32 1.0, %v1214
        %v1216 = vmul.f32 %v1213, %v1215
        %v1217 = vadd.f32 %v1213, %v1216
        %vm1218 = vweird.f32 %v925
        %vm1219 = vweird.f32 %v1213
        %vm1220 = vmor %vm1218, %vm1219
        %v1221 = vsel %vm1220, %v1213, %v1217
        %v1222 = vand.u32 2147483647, %v925
        %vm1223 = vcmp.eq.f32.partialorder %v1222, 8.507059e+37
        %v1224 = vand.u32 %v925, 2147483648
        %v1225 = vor.u32 1.1754944e-38, %v1224
        %v1226 = vsel %vm1223, %v1225, %v1221
        %v1227 = vmul.f32 1.0, %v1226
        %v1228 = vrcp.pop %v926
        %v1229 = vmul.f32 %v926, %v1228
        %v1230 = vsub.f32 1.0, %v1229
        %v1231 = vmul.f32 %v1228, %v1230
        %v1232 = vadd.f32 %v1228, %v1231
        %vm1233 = vweird.f32 %v926
        %vm1234 = vweird.f32 %v1228
        %vm1235 = vmor %vm1233, %vm1234
        %v1236 = vsel %vm1235, %v1228, %v1232
        %v1237 = vand.u32 2147483647, %v926
        %vm1238 = vcmp.eq.f32.partialorder %v1237, 8.507059e+37
        %v1239 = vand.u32 %v926, 2147483648
        %v1240 = vor.u32 1.1754944e-38, %v1239
        %v1241 = vsel %vm1238, %v1240, %v1236
        %v1242 = vmul.f32 1.0, %v1241
        %v1243 = vrcp.pop %v927
        %v1244 = vmul.f32 %v927, %v1243
        %v1245 = vsub.f32 1.0, %v1244
        %v1246 = vmul.f32 %v1243, %v1245
        %v1247 = vadd.f32 %v1243, %v1246
        %vm1248 = vweird.f32 %v927
        %vm1249 = vweird.f32 %v1243
        %vm1250 = vmor %vm1248, %vm1249
        %v1251 = vsel %vm1250, %v1243, %v1247
        %v1252 = vand.u32 2147483647, %v927
        %vm1253 = vcmp.eq.f32.partialorder %v1252, 8.507059e+37
        %v1254 = vand.u32 %v927, 2147483648
        %v1255 = vor.u32 1.1754944e-38, %v1254
        %v1256 = vsel %vm1253, %v1255, %v1251
        %v1257 = vmul.f32 1.0, %v1256
        %v1258 = vrcp.pop %v928
        %v1259 = vmul.f32 %v928, %v1258
        %v1260 = vsub.f32 1.0, %v1259
        %v1261 = vmul.f32 %v1258, %v1260
        %v1262 = vadd.f32 %v1258, %v1261
        %vm1263 = vweird.f32 %v928
        %vm1264 = vweird.f32 %v1258
        %vm1265 = vmor %vm1263, %vm1264
        %v1266 = vsel %vm1265, %v1258, %v1262
        %v1267 = vand.u32 2147483647, %v928
        %vm1268 = vcmp.eq.f32.partialorder %v1267, 8.507059e+37
        %v1269 = vand.u32 %v928, 2147483648
        %v1270 = vor.u32 1.1754944e-38, %v1269
        %v1271 = vsel %vm1268, %v1270, %v1266
        %v1272 = vmul.f32 1.0, %v1271
        %v1273 = vrcp.pop %v929
        %v1274 = vmul.f32 %v929, %v1273
        %v1275 = vsub.f32 1.0, %v1274
        %v1276 = vmul.f32 %v1273, %v1275
        %v1277 = vadd.f32 %v1273, %v1276
        %vm1278 = vweird.f32 %v929
        %vm1279 = vweird.f32 %v1273
        %vm1280 = vmor %vm1278, %vm1279
        %v1281 = vsel %vm1280, %v1273, %v1277
        %v1282 = vand.u32 2147483647, %v929
        %vm1283 = vcmp.eq.f32.partialorder %v1282, 8.507059e+37
        %v1284 = vand.u32 %v929, 2147483648
        %v1285 = vor.u32 1.1754944e-38, %v1284
        %v1286 = vsel %vm1283, %v1285, %v1281
        %v1287 = vmul.f32 1.0, %v1286
        %v1288 = vrcp.pop %v930
        %v1289 = vmul.f32 %v930, %v1288
        %v1290 = vsub.f32 1.0, %v1289
        %v1291 = vmul.f32 %v1288, %v1290
        %v1292 = vadd.f32 %v1288, %v1291
        %vm1293 = vweird.f32 %v930
        %vm1294 = vweird.f32 %v1288
        %vm1295 = vmor %vm1293, %vm1294
        %v1296 = vsel %vm1295, %v1288, %v1292
        %v1297 = vand.u32 2147483647, %v930
        %vm1298 = vcmp.eq.f32.partialorder %v1297, 8.507059e+37
        %v1299 = vand.u32 %v930, 2147483648
        %v1300 = vor.u32 1.1754944e-38, %v1299
        %v1301 = vsel %vm1298, %v1300, %v1296
        %v1302 = vmul.f32 1.0, %v1301
        %v1303 = vrcp.pop %v931
        %v1304 = vmul.f32 %v931, %v1303
        %v1305 = vsub.f32 1.0, %v1304
        %v1306 = vmul.f32 %v1303, %v1305
        %v1307 = vadd.f32 %v1303, %v1306
        %vm1308 = vweird.f32 %v931
        %vm1309 = vweird.f32 %v1303
        %vm1310 = vmor %vm1308, %vm1309
        %v1311 = vsel %vm1310, %v1303, %v1307
        %v1312 = vand.u32 2147483647, %v931
        %vm1313 = vcmp.eq.f32.partialorder %v1312, 8.507059e+37
        %v1314 = vand.u32 %v931, 2147483648
        %v1315 = vor.u32 1.1754944e-38, %v1314
        %v1316 = vsel %vm1313, %v1315, %v1311
        %v1317 = vmul.f32 1.0, %v1316
        %v1318 = vrcp.pop %v932
        %v1319 = vmul.f32 %v932, %v1318
        %v1320 = vsub.f32 1.0, %v1319
        %v1321 = vmul.f32 %v1318, %v1320
        %v1322 = vadd.f32 %v1318, %v1321
        %vm1323 = vweird.f32 %v932
        %vm1324 = vweird.f32 %v1318
        %vm1325 = vmor %vm1323, %vm1324
        %v1326 = vsel %vm1325, %v1318, %v1322
        %v1327 = vand.u32 2147483647, %v932
        %vm1328 = vcmp.eq.f32.partialorder %v1327, 8.507059e+37
        %v1329 = vand.u32 %v932, 2147483648
        %v1330 = vor.u32 1.1754944e-38, %v1329
        %v1331 = vsel %vm1328, %v1330, %v1326
        %v1332 = vmul.f32 1.0, %v1331
        %v1333 = vrcp.pop %v933
        %v1334 = vmul.f32 %v933, %v1333
        %v1335 = vsub.f32 1.0, %v1334
        %v1336 = vmul.f32 %v1333, %v1335
        %v1337 = vadd.f32 %v1333, %v1336
        %vm1338 = vweird.f32 %v933
        %vm1339 = vweird.f32 %v1333
        %vm1340 = vmor %vm1338, %vm1339
        %v1341 = vsel %vm1340, %v1333, %v1337
        %v1342 = vand.u32 2147483647, %v933
        %vm1343 = vcmp.eq.f32.partialorder %v1342, 8.507059e+37
        %v1344 = vand.u32 %v933, 2147483648
        %v1345 = vor.u32 1.1754944e-38, %v1344
        %v1346 = vsel %vm1343, %v1345, %v1341
        %v1347 = vmul.f32 1.0, %v1346
        %v1348 = vrcp.pop %v934
        %v1349 = vmul.f32 %v934, %v1348
        %v1350 = vsub.f32 1.0, %v1349
        %v1351 = vmul.f32 %v1348, %v1350
        %v1352 = vadd.f32 %v1348, %v1351
        %vm1353 = vweird.f32 %v934
        %vm1354 = vweird.f32 %v1348
        %vm1355 = vmor %vm1353, %vm1354
        %v1356 = vsel %vm1355, %v1348, %v1352
        %v1357 = vand.u32 2147483647, %v934
        %vm1358 = vcmp.eq.f32.partialorder %v1357, 8.507059e+37
        %v1359 = vand.u32 %v934, 2147483648
        %v1360 = vor.u32 1.1754944e-38, %v1359
        %v1361 = vsel %vm1358, %v1360, %v1356
        %v1362 = vmul.f32 1.0, %v1361
        %v1363 = vrcp.pop %v935
        %v1364 = vmul.f32 %v935, %v1363
        %v1365 = vsub.f32 1.0, %v1364
        %v1366 = vmul.f32 %v1363, %v1365
        %v1367 = vadd.f32 %v1363, %v1366
        %vm1368 = vweird.f32 %v935
        %vm1369 = vweird.f32 %v1363
        %vm1370 = vmor %vm1368, %vm1369
        %v1371 = vsel %vm1370, %v1363, %v1367
        %v1372 = vand.u32 2147483647, %v935
        %vm1373 = vcmp.eq.f32.partialorder %v1372, 8.507059e+37
        %v1374 = vand.u32 %v935, 2147483648
        %v1375 = vor.u32 1.1754944e-38, %v1374
        %v1376 = vsel %vm1373, %v1375, %v1371
        %v1377 = vmul.f32 1.0, %v1376
        %v1378 = vrcp.pop %v936
        %v1379 = vmul.f32 %v936, %v1378
        %v1380 = vsub.f32 1.0, %v1379
        %v1381 = vmul.f32 %v1378, %v1380
        %v1382 = vadd.f32 %v1378, %v1381
        %vm1383 = vweird.f32 %v936
        %vm1384 = vweird.f32 %v1378
        %vm1385 = vmor %vm1383, %vm1384
        %v1386 = vsel %vm1385, %v1378, %v1382
        %v1387 = vand.u32 2147483647, %v936
        %vm1388 = vcmp.eq.f32.partialorder %v1387, 8.507059e+37
        %v1389 = vand.u32 %v936, 2147483648
        %v1390 = vor.u32 1.1754944e-38, %v1389
        %v1391 = vsel %vm1388, %v1390, %v1386
        %v1392 = vmul.f32 1.0, %v1391
        %v1393 = vrcp.pop %v937
        %v1394 = vmul.f32 %v937, %v1393
        %v1395 = vsub.f32 1.0, %v1394
        %v1396 = vmul.f32 %v1393, %v1395
        %v1397 = vadd.f32 %v1393, %v1396
        %vm1398 = vweird.f32 %v937
        %vm1399 = vweird.f32 %v1393
        %vm1400 = vmor %vm1398, %vm1399
        %v1401 = vsel %vm1400, %v1393, %v1397
        %v1402 = vand.u32 2147483647, %v937
        %vm1403 = vcmp.eq.f32.partialorder %v1402, 8.507059e+37
        %v1404 = vand.u32 %v937, 2147483648
        %v1405 = vor.u32 1.1754944e-38, %v1404
        %v1406 = vsel %vm1403, %v1405, %v1401
        %v1407 = vmul.f32 1.0, %v1406
        %v1408 = vrcp.pop %v938
        %v1409 = vmul.f32 %v938, %v1408
        %v1410 = vsub.f32 1.0, %v1409
        %v1411 = vmul.f32 %v1408, %v1410
        %v1412 = vadd.f32 %v1408, %v1411
        %vm1413 = vweird.f32 %v938
        %vm1414 = vweird.f32 %v1408
        %vm1415 = vmor %vm1413, %vm1414
        %v1416 = vsel %vm1415, %v1408, %v1412
        %v1417 = vand.u32 2147483647, %v938
        %vm1418 = vcmp.eq.f32.partialorder %v1417, 8.507059e+37
        %v1419 = vand.u32 %v938, 2147483648
        %v1420 = vor.u32 1.1754944e-38, %v1419
        %v1421 = vsel %vm1418, %v1420, %v1416
        %v1422 = vmul.f32 1.0, %v1421
        %v1423 = vrcp.pop %v939
        %v1424 = vmul.f32 %v939, %v1423
        %v1425 = vsub.f32 1.0, %v1424
        %v1426 = vmul.f32 %v1423, %v1425
        %v1427 = vadd.f32 %v1423, %v1426
        %vm1428 = vweird.f32 %v939
        %vm1429 = vweird.f32 %v1423
        %vm1430 = vmor %vm1428, %vm1429
        %v1431 = vsel %vm1430, %v1423, %v1427
        %v1432 = vand.u32 2147483647, %v939
        %vm1433 = vcmp.eq.f32.partialorder %v1432, 8.507059e+37
        %v1434 = vand.u32 %v939, 2147483648
        %v1435 = vor.u32 1.1754944e-38, %v1434
        %v1436 = vsel %vm1433, %v1435, %v1431
        %v1437 = vmul.f32 1.0, %v1436
        %v1438 = vrcp.pop %v940
        %v1439 = vmul.f32 %v940, %v1438
        %v1440 = vsub.f32 1.0, %v1439
        %v1441 = vmul.f32 %v1438, %v1440
        %v1442 = vadd.f32 %v1438, %v1441
        %vm1443 = vweird.f32 %v940
        %vm1444 = vweird.f32 %v1438
        %vm1445 = vmor %vm1443, %vm1444
        %v1446 = vsel %vm1445, %v1438, %v1442
        %v1447 = vand.u32 2147483647, %v940
        %vm1448 = vcmp.eq.f32.partialorder %v1447, 8.507059e+37
        %v1449 = vand.u32 %v940, 2147483648
        %v1450 = vor.u32 1.1754944e-38, %v1449
        %v1451 = vsel %vm1448, %v1450, %v1446
        %v1452 = vmul.f32 1.0, %v1451
        %v1453 = vrcp.pop %v941
        %v1454 = vmul.f32 %v941, %v1453
        %v1455 = vsub.f32 1.0, %v1454
        %v1456 = vmul.f32 %v1453, %v1455
        %v1457 = vadd.f32 %v1453, %v1456
        %vm1458 = vweird.f32 %v941
        %vm1459 = vweird.f32 %v1453
        %vm1460 = vmor %vm1458, %vm1459
        %v1461 = vsel %vm1460, %v1453, %v1457
        %v1462 = vand.u32 2147483647, %v941
        %vm1463 = vcmp.eq.f32.partialorder %v1462, 8.507059e+37
        %v1464 = vand.u32 %v941, 2147483648
        %v1465 = vor.u32 1.1754944e-38, %v1464
        %v1466 = vsel %vm1463, %v1465, %v1461
        %v1467 = vmul.f32 1.0, %v1466
        %v1468 = vrcp.pop %v942
        %v1469 = vmul.f32 %v942, %v1468
        %v1470 = vsub.f32 1.0, %v1469
        %v1471 = vmul.f32 %v1468, %v1470
        %v1472 = vadd.f32 %v1468, %v1471
        %vm1473 = vweird.f32 %v942
        %vm1474 = vweird.f32 %v1468
        %vm1475 = vmor %vm1473, %vm1474
        %v1476 = vsel %vm1475, %v1468, %v1472
        %v1477 = vand.u32 2147483647, %v942
        %vm1478 = vcmp.eq.f32.partialorder %v1477, 8.507059e+37
        %v1479 = vand.u32 %v942, 2147483648
        %v1480 = vor.u32 1.1754944e-38, %v1479
        %v1481 = vsel %vm1478, %v1480, %v1476
        %v1482 = vmul.f32 1.0, %v1481
        %v1483 = vrcp.pop %v943
        %v1484 = vmul.f32 %v943, %v1483
        %v1485 = vsub.f32 1.0, %v1484
        %v1486 = vmul.f32 %v1483, %v1485
        %v1487 = vadd.f32 %v1483, %v1486
        %vm1488 = vweird.f32 %v943
        %vm1489 = vweird.f32 %v1483
        %vm1490 = vmor %vm1488, %vm1489
        %v1491 = vsel %vm1490, %v1483, %v1487
        %v1492 = vand.u32 2147483647, %v943
        %vm1493 = vcmp.eq.f32.partialorder %v1492, 8.507059e+37
        %v1494 = vand.u32 %v943, 2147483648
        %v1495 = vor.u32 1.1754944e-38, %v1494
        %v1496 = vsel %vm1493, %v1495, %v1491
        %v1497 = vmul.f32 1.0, %v1496
        %v1498 = vrcp.pop %v944
        %v1499 = vmul.f32 %v944, %v1498
        %v1500 = vsub.f32 1.0, %v1499
        %v1501 = vmul.f32 %v1498, %v1500
        %v1502 = vadd.f32 %v1498, %v1501
        %vm1503 = vweird.f32 %v944
        %vm1504 = vweird.f32 %v1498
        %vm1505 = vmor %vm1503, %vm1504
        %v1506 = vsel %vm1505, %v1498, %v1502
        %v1507 = vand.u32 2147483647, %v944
        %vm1508 = vcmp.eq.f32.partialorder %v1507, 8.507059e+37
        %v1509 = vand.u32 %v944, 2147483648
        %v1510 = vor.u32 1.1754944e-38, %v1509
        %v1511 = vsel %vm1508, %v1510, %v1506
        %v1512 = vmul.f32 1.0, %v1511
        %v1513 = vrcp.pop %v945
        %v1514 = vmul.f32 %v945, %v1513
        %v1515 = vsub.f32 1.0, %v1514
        %v1516 = vmul.f32 %v1513, %v1515
        %v1517 = vadd.f32 %v1513, %v1516
        %vm1518 = vweird.f32 %v945
        %vm1519 = vweird.f32 %v1513
        %vm1520 = vmor %vm1518, %vm1519
        %v1521 = vsel %vm1520, %v1513, %v1517
        %v1522 = vand.u32 2147483647, %v945
        %vm1523 = vcmp.eq.f32.partialorder %v1522, 8.507059e+37
        %v1524 = vand.u32 %v945, 2147483648
        %v1525 = vor.u32 1.1754944e-38, %v1524
        %v1526 = vsel %vm1523, %v1525, %v1521
        %v1527 = vmul.f32 1.0, %v1526
        %v1528 = vrcp.pop %v946
        %v1529 = vmul.f32 %v946, %v1528
        %v1530 = vsub.f32 1.0, %v1529
        %v1531 = vmul.f32 %v1528, %v1530
        %v1532 = vadd.f32 %v1528, %v1531
        %vm1533 = vweird.f32 %v946
        %vm1534 = vweird.f32 %v1528
        %vm1535 = vmor %vm1533, %vm1534
        %v1536 = vsel %vm1535, %v1528, %v1532
        %v1537 = vand.u32 2147483647, %v946
        %vm1538 = vcmp.eq.f32.partialorder %v1537, 8.507059e+37
        %v1539 = vand.u32 %v946, 2147483648
        %v1540 = vor.u32 1.1754944e-38, %v1539
        %v1541 = vsel %vm1538, %v1540, %v1536
        %v1542 = vmul.f32 1.0, %v1541
        %v1543 = vrcp.pop %v947
        %v1544 = vmul.f32 %v947, %v1543
        %v1545 = vsub.f32 1.0, %v1544
        %v1546 = vmul.f32 %v1543, %v1545
        %v1547 = vadd.f32 %v1543, %v1546
        %vm1548 = vweird.f32 %v947
        %vm1549 = vweird.f32 %v1543
        %vm1550 = vmor %vm1548, %vm1549
        %v1551 = vsel %vm1550, %v1543, %v1547
        %v1552 = vand.u32 2147483647, %v947
        %vm1553 = vcmp.eq.f32.partialorder %v1552, 8.507059e+37
        %v1554 = vand.u32 %v947, 2147483648
        %v1555 = vor.u32 1.1754944e-38, %v1554
        %v1556 = vsel %vm1553, %v1555, %v1551
        %v1557 = vmul.f32 1.0, %v1556
        %v1558 = vrcp.pop %v948
        %v1559 = vmul.f32 %v948, %v1558
        %v1560 = vsub.f32 1.0, %v1559
        %v1561 = vmul.f32 %v1558, %v1560
        %v1562 = vadd.f32 %v1558, %v1561
        %vm1563 = vweird.f32 %v948
        %vm1564 = vweird.f32 %v1558
        %vm1565 = vmor %vm1563, %vm1564
        %v1566 = vsel %vm1565, %v1558, %v1562
        %v1567 = vand.u32 2147483647, %v948
        %vm1568 = vcmp.eq.f32.partialorder %v1567, 8.507059e+37
        %v1569 = vand.u32 %v948, 2147483648
        %v1570 = vor.u32 1.1754944e-38, %v1569
        %v1571 = vsel %vm1568, %v1570, %v1566
        %v1572 = vmul.f32 1.0, %v1571
        %v1573 = vrcp.pop %v949
        %v1574 = vmul.f32 %v949, %v1573
        %v1575 = vsub.f32 1.0, %v1574
        %v1576 = vmul.f32 %v1573, %v1575
        %v1577 = vadd.f32 %v1573, %v1576
        %vm1578 = vweird.f32 %v949
        %vm1579 = vweird.f32 %v1573
        %vm1580 = vmor %vm1578, %vm1579
        %v1581 = vsel %vm1580, %v1573, %v1577
        %v1582 = vand.u32 2147483647, %v949
        %vm1583 = vcmp.eq.f32.partialorder %v1582, 8.507059e+37
        %v1584 = vand.u32 %v949, 2147483648
        %v1585 = vor.u32 1.1754944e-38, %v1584
        %v1586 = vsel %vm1583, %v1585, %v1581
        %v1587 = vmul.f32 1.0, %v1586
        %v1588 = vrcp.pop %v950
        %v1589 = vmul.f32 %v950, %v1588
        %v1590 = vsub.f32 1.0, %v1589
        %v1591 = vmul.f32 %v1588, %v1590
        %v1592 = vadd.f32 %v1588, %v1591
        %vm1593 = vweird.f32 %v950
        %vm1594 = vweird.f32 %v1588
        %vm1595 = vmor %vm1593, %vm1594
        %v1596 = vsel %vm1595, %v1588, %v1592
        %v1597 = vand.u32 2147483647, %v950
        %vm1598 = vcmp.eq.f32.partialorder %v1597, 8.507059e+37
        %v1599 = vand.u32 %v950, 2147483648
        %v1600 = vor.u32 1.1754944e-38, %v1599
        %v1601 = vsel %vm1598, %v1600, %v1596
        %v1602 = vmul.f32 1.0, %v1601
        %v1603 = vrcp.pop %v951
        %v1604 = vmul.f32 %v951, %v1603
        %v1605 = vsub.f32 1.0, %v1604
        %v1606 = vmul.f32 %v1603, %v1605
        %v1607 = vadd.f32 %v1603, %v1606
        %vm1608 = vweird.f32 %v951
        %vm1609 = vweird.f32 %v1603
        %vm1610 = vmor %vm1608, %vm1609
        %v1611 = vsel %vm1610, %v1603, %v1607
        %v1612 = vand.u32 2147483647, %v951
        %vm1613 = vcmp.eq.f32.partialorder %v1612, 8.507059e+37
        %v1614 = vand.u32 %v951, 2147483648
        %v1615 = vor.u32 1.1754944e-38, %v1614
        %v1616 = vsel %vm1613, %v1615, %v1611
        %v1617 = vmul.f32 1.0, %v1616
        %v1618 = vrcp.pop %v952
        %v1619 = vmul.f32 %v952, %v1618
        %v1620 = vsub.f32 1.0, %v1619
        %v1621 = vmul.f32 %v1618, %v1620
        %v1622 = vadd.f32 %v1618, %v1621
        %vm1623 = vweird.f32 %v952
        %vm1624 = vweird.f32 %v1618
        %vm1625 = vmor %vm1623, %vm1624
        %v1626 = vsel %vm1625, %v1618, %v1622
        %v1627 = vand.u32 2147483647, %v952
        %vm1628 = vcmp.eq.f32.partialorder %v1627, 8.507059e+37
        %v1629 = vand.u32 %v952, 2147483648
        %v1630 = vor.u32 1.1754944e-38, %v1629
        %v1631 = vsel %vm1628, %v1630, %v1626
        %v1632 = vmul.f32 1.0, %v1631
        %v1633 = vrcp.pop %v953
        %v1634 = vmul.f32 %v953, %v1633
        %v1635 = vsub.f32 1.0, %v1634
        %v1636 = vmul.f32 %v1633, %v1635
        %v1637 = vadd.f32 %v1633, %v1636
        %vm1638 = vweird.f32 %v953
        %vm1639 = vweird.f32 %v1633
        %vm1640 = vmor %vm1638, %vm1639
        %v1641 = vsel %vm1640, %v1633, %v1637
        %v1642 = vand.u32 2147483647, %v953
        %vm1643 = vcmp.eq.f32.partialorder %v1642, 8.507059e+37
        %v1644 = vand.u32 %v953, 2147483648
        %v1645 = vor.u32 1.1754944e-38, %v1644
        %v1646 = vsel %vm1643, %v1645, %v1641
        %v1647 = vmul.f32 1.0, %v1646
        %v1648 = vrcp.pop %v954
        %v1649 = vmul.f32 %v954, %v1648
        %v1650 = vsub.f32 1.0, %v1649
        %v1651 = vmul.f32 %v1648, %v1650
        %v1652 = vadd.f32 %v1648, %v1651
        %vm1653 = vweird.f32 %v954
        %vm1654 = vweird.f32 %v1648
        %vm1655 = vmor %vm1653, %vm1654
        %v1656 = vsel %vm1655, %v1648, %v1652
        %v1657 = vand.u32 2147483647, %v954
        %vm1658 = vcmp.eq.f32.partialorder %v1657, 8.507059e+37
        %v1659 = vand.u32 %v954, 2147483648
        %v1660 = vor.u32 1.1754944e-38, %v1659
        %v1661 = vsel %vm1658, %v1660, %v1656
        %v1662 = vmul.f32 1.0, %v1661
        %v1663 = vrcp.pop %v955
        %v1664 = vmul.f32 %v955, %v1663
        %v1665 = vsub.f32 1.0, %v1664
        %v1666 = vmul.f32 %v1663, %v1665
        %v1667 = vadd.f32 %v1663, %v1666
        %vm1668 = vweird.f32 %v955
        %vm1669 = vweird.f32 %v1663
        %vm1670 = vmor %vm1668, %vm1669
        %v1671 = vsel %vm1670, %v1663, %v1667
        %v1672 = vand.u32 2147483647, %v955
        %vm1673 = vcmp.eq.f32.partialorder %v1672, 8.507059e+37
        %v1674 = vand.u32 %v955, 2147483648
        %v1675 = vor.u32 1.1754944e-38, %v1674
        %v1676 = vsel %vm1673, %v1675, %v1671
        %v1677 = vmul.f32 1.0, %v1676
        %v1678 = vrcp.pop %v956
        %v1679 = vmul.f32 %v956, %v1678
        %v1680 = vsub.f32 1.0, %v1679
        %v1681 = vmul.f32 %v1678, %v1680
        %v1682 = vadd.f32 %v1678, %v1681
        %vm1683 = vweird.f32 %v956
        %vm1684 = vweird.f32 %v1678
        %vm1685 = vmor %vm1683, %vm1684
        %v1686 = vsel %vm1685, %v1678, %v1682
        %v1687 = vand.u32 2147483647, %v956
        %vm1688 = vcmp.eq.f32.partialorder %v1687, 8.507059e+37
        %v1689 = vand.u32 %v956, 2147483648
        %v1690 = vor.u32 1.1754944e-38, %v1689
        %v1691 = vsel %vm1688, %v1690, %v1686
        %v1692 = vmul.f32 1.0, %v1691
        %v1693 = vrcp.pop %v957
        %v1694 = vmul.f32 %v957, %v1693
        %v1695 = vsub.f32 1.0, %v1694
        %v1696 = vmul.f32 %v1693, %v1695
        %v1697 = vadd.f32 %v1693, %v1696
        %vm1698 = vweird.f32 %v957
        %vm1699 = vweird.f32 %v1693
        %vm1700 = vmor %vm1698, %vm1699
        %v1701 = vsel %vm1700, %v1693, %v1697
        %v1702 = vand.u32 2147483647, %v957
        %vm1703 = vcmp.eq.f32.partialorder %v1702, 8.507059e+37
        %v1704 = vand.u32 %v957, 2147483648
        %v1705 = vor.u32 1.1754944e-38, %v1704
        %v1706 = vsel %vm1703, %v1705, %v1701
        %v1707 = vmul.f32 1.0, %v1706
        %v1708 = vrcp.pop %v958
        %v1709 = vmul.f32 %v958, %v1708
        %v1710 = vsub.f32 1.0, %v1709
        %v1711 = vmul.f32 %v1708, %v1710
        %v1712 = vadd.f32 %v1708, %v1711
        %vm1713 = vweird.f32 %v958
        %vm1714 = vweird.f32 %v1708
        %vm1715 = vmor %vm1713, %vm1714
        %v1716 = vsel %vm1715, %v1708, %v1712
        %v1717 = vand.u32 2147483647, %v958
        %vm1718 = vcmp.eq.f32.partialorder %v1717, 8.507059e+37
        %v1719 = vand.u32 %v958, 2147483648
        %v1720 = vor.u32 1.1754944e-38, %v1719
        %v1721 = vsel %vm1718, %v1720, %v1716
        %v1722 = vmul.f32 1.0, %v1721
        %v1723 = vrcp.pop %v959
        %v1724 = vmul.f32 %v959, %v1723
        %v1725 = vsub.f32 1.0, %v1724
        %v1726 = vmul.f32 %v1723, %v1725
        %v1727 = vadd.f32 %v1723, %v1726
        %vm1728 = vweird.f32 %v959
        %vm1729 = vweird.f32 %v1723
        %vm1730 = vmor %vm1728, %vm1729
        %v1731 = vsel %vm1730, %v1723, %v1727
        %v1732 = vand.u32 2147483647, %v959
        %vm1733 = vcmp.eq.f32.partialorder %v1732, 8.507059e+37
        %v1734 = vand.u32 %v959, 2147483648
        %v1735 = vor.u32 1.1754944e-38, %v1734
        %v1736 = vsel %vm1733, %v1735, %v1731
        %v1737 = vmul.f32 1.0, %v1736
        %v1738 = vrcp.pop %v960
        %v1739 = vmul.f32 %v960, %v1738
        %v1740 = vsub.f32 1.0, %v1739
        %v1741 = vmul.f32 %v1738, %v1740
        %v1742 = vadd.f32 %v1738, %v1741
        %vm1743 = vweird.f32 %v960
        %vm1744 = vweird.f32 %v1738
        %vm1745 = vmor %vm1743, %vm1744
        %v1746 = vsel %vm1745, %v1738, %v1742
        %v1747 = vand.u32 2147483647, %v960
        %vm1748 = vcmp.eq.f32.partialorder %v1747, 8.507059e+37
        %v1749 = vand.u32 %v960, 2147483648
        %v1750 = vor.u32 1.1754944e-38, %v1749
        %v1751 = vsel %vm1748, %v1750, %v1746
        %v1752 = vmul.f32 1.0, %v1751
        %v1753 = vrcp.pop %v961
        %v1754 = vmul.f32 %v961, %v1753
        %v1755 = vsub.f32 1.0, %v1754
        %v1756 = vmul.f32 %v1753, %v1755
        %v1757 = vadd.f32 %v1753, %v1756
        %vm1758 = vweird.f32 %v961
        %vm1759 = vweird.f32 %v1753
        %vm1760 = vmor %vm1758, %vm1759
        %v1761 = vsel %vm1760, %v1753, %v1757
        %v1762 = vand.u32 2147483647, %v961
        %vm1763 = vcmp.eq.f32.partialorder %v1762, 8.507059e+37
        %v1764 = vand.u32 %v961, 2147483648
        %v1765 = vor.u32 1.1754944e-38, %v1764
        %v1766 = vsel %vm1763, %v1765, %v1761
        %v1767 = vmul.f32 1.0, %v1766
        %v1768 = vrcp.pop %v962
        %v1769 = vmul.f32 %v962, %v1768
        %v1770 = vsub.f32 1.0, %v1769
        %v1771 = vmul.f32 %v1768, %v1770
        %v1772 = vadd.f32 %v1768, %v1771
        %vm1773 = vweird.f32 %v962
        %vm1774 = vweird.f32 %v1768
        %vm1775 = vmor %vm1773, %vm1774
        %v1776 = vsel %vm1775, %v1768, %v1772
        %v1777 = vand.u32 2147483647, %v962
        %vm1778 = vcmp.eq.f32.partialorder %v1777, 8.507059e+37
        %v1779 = vand.u32 %v962, 2147483648
        %v1780 = vor.u32 1.1754944e-38, %v1779
        %v1781 = vsel %vm1778, %v1780, %v1776
        %v1782 = vmul.f32 1.0, %v1781
        %v1783 = vrcp.pop %v963
        %v1784 = vmul.f32 %v963, %v1783
        %v1785 = vsub.f32 1.0, %v1784
        %v1786 = vmul.f32 %v1783, %v1785
        %v1787 = vadd.f32 %v1783, %v1786
        %vm1788 = vweird.f32 %v963
        %vm1789 = vweird.f32 %v1783
        %vm1790 = vmor %vm1788, %vm1789
        %v1791 = vsel %vm1790, %v1783, %v1787
        %v1792 = vand.u32 2147483647, %v963
        %vm1793 = vcmp.eq.f32.partialorder %v1792, 8.507059e+37
        %v1794 = vand.u32 %v963, 2147483648
        %v1795 = vor.u32 1.1754944e-38, %v1794
        %v1796 = vsel %vm1793, %v1795, %v1791
        %v1797 = vmul.f32 1.0, %v1796
        %v1798 = vrcp.pop %v964
        %v1799 = vmul.f32 %v964, %v1798
        %v1800 = vsub.f32 1.0, %v1799
        %v1801 = vmul.f32 %v1798, %v1800
        %v1802 = vadd.f32 %v1798, %v1801
        %vm1803 = vweird.f32 %v964
        %vm1804 = vweird.f32 %v1798
        %vm1805 = vmor %vm1803, %vm1804
        %v1806 = vsel %vm1805, %v1798, %v1802
        %v1807 = vand.u32 2147483647, %v964
        %vm1808 = vcmp.eq.f32.partialorder %v1807, 8.507059e+37
        %v1809 = vand.u32 %v964, 2147483648
        %v1810 = vor.u32 1.1754944e-38, %v1809
        %v1811 = vsel %vm1808, %v1810, %v1806
        %v1812 = vmul.f32 1.0, %v1811
        %v1813 = vrcp.pop %v965
        %v1814 = vmul.f32 %v965, %v1813
        %v1815 = vsub.f32 1.0, %v1814
        %v1816 = vmul.f32 %v1813, %v1815
        %v1817 = vadd.f32 %v1813, %v1816
        %vm1818 = vweird.f32 %v965
        %vm1819 = vweird.f32 %v1813
        %vm1820 = vmor %vm1818, %vm1819
        %v1821 = vsel %vm1820, %v1813, %v1817
        %v1822 = vand.u32 2147483647, %v965
        %vm1823 = vcmp.eq.f32.partialorder %v1822, 8.507059e+37
        %v1824 = vand.u32 %v965, 2147483648
        %v1825 = vor.u32 1.1754944e-38, %v1824
        %v1826 = vsel %vm1823, %v1825, %v1821
        %v1827 = vmul.f32 1.0, %v1826
        %v1828 = vrcp.pop %v966
        %v1829 = vmul.f32 %v966, %v1828
        %v1830 = vsub.f32 1.0, %v1829
        %v1831 = vmul.f32 %v1828, %v1830
        %v1832 = vadd.f32 %v1828, %v1831
        %vm1833 = vweird.f32 %v966
        %vm1834 = vweird.f32 %v1828
        %vm1835 = vmor %vm1833, %vm1834
        %v1836 = vsel %vm1835, %v1828, %v1832
        %v1837 = vand.u32 2147483647, %v966
        %vm1838 = vcmp.eq.f32.partialorder %v1837, 8.507059e+37
        %v1839 = vand.u32 %v966, 2147483648
        %v1840 = vor.u32 1.1754944e-38, %v1839
        %v1841 = vsel %vm1838, %v1840, %v1836
        %v1842 = vmul.f32 1.0, %v1841
        %v1843 = vrcp.pop %v967
        %v1844 = vmul.f32 %v967, %v1843
        %v1845 = vsub.f32 1.0, %v1844
        %v1846 = vmul.f32 %v1843, %v1845
        %v1847 = vadd.f32 %v1843, %v1846
        %vm1848 = vweird.f32 %v967
        %vm1849 = vweird.f32 %v1843
        %vm1850 = vmor %vm1848, %vm1849
        %v1851 = vsel %vm1850, %v1843, %v1847
        %v1852 = vand.u32 2147483647, %v967
        %vm1853 = vcmp.eq.f32.partialorder %v1852, 8.507059e+37
        %v1854 = vand.u32 %v967, 2147483648
        %v1855 = vor.u32 1.1754944e-38, %v1854
        %v1856 = vsel %vm1853, %v1855, %v1851
        %v1857 = vmul.f32 1.0, %v1856
        %v1858 = vrcp.pop %v968
        %v1859 = vmul.f32 %v968, %v1858
        %v1860 = vsub.f32 1.0, %v1859
        %v1861 = vmul.f32 %v1858, %v1860
        %v1862 = vadd.f32 %v1858, %v1861
        %vm1863 = vweird.f32 %v968
        %vm1864 = vweird.f32 %v1858
        %vm1865 = vmor %vm1863, %vm1864
        %v1866 = vsel %vm1865, %v1858, %v1862
        %v1867 = vand.u32 2147483647, %v968
        %vm1868 = vcmp.eq.f32.partialorder %v1867, 8.507059e+37
        %v1869 = vand.u32 %v968, 2147483648
        %v1870 = vor.u32 1.1754944e-38, %v1869
        %v1871 = vsel %vm1868, %v1870, %v1866
        %v1872 = vmul.f32 1.0, %v1871
        %v1873 = vrcp.pop %v969
        %v1874 = vmul.f32 %v969, %v1873
        %v1875 = vsub.f32 1.0, %v1874
        %v1876 = vmul.f32 %v1873, %v1875
        %v1877 = vadd.f32 %v1873, %v1876
        %vm1878 = vweird.f32 %v969
        %vm1879 = vweird.f32 %v1873
        %vm1880 = vmor %vm1878, %vm1879
        %v1881 = vsel %vm1880, %v1873, %v1877
        %v1882 = vand.u32 2147483647, %v969
        %vm1883 = vcmp.eq.f32.partialorder %v1882, 8.507059e+37
        %v1884 = vand.u32 %v969, 2147483648
        %v1885 = vor.u32 1.1754944e-38, %v1884
        %v1886 = vsel %vm1883, %v1885, %v1881
        %v1887 = vmul.f32 1.0, %v1886
        %v1888 = vrcp.pop %v970
        %v1889 = vmul.f32 %v970, %v1888
        %v1890 = vsub.f32 1.0, %v1889
        %v1891 = vmul.f32 %v1888, %v1890
        %v1892 = vadd.f32 %v1888, %v1891
        %vm1893 = vweird.f32 %v970
        %vm1894 = vweird.f32 %v1888
        %vm1895 = vmor %vm1893, %vm1894
        %v1896 = vsel %vm1895, %v1888, %v1892
        %v1897 = vand.u32 2147483647, %v970
        %vm1898 = vcmp.eq.f32.partialorder %v1897, 8.507059e+37
        %v1899 = vand.u32 %v970, 2147483648
        %v1900 = vor.u32 1.1754944e-38, %v1899
        %v1901 = vsel %vm1898, %v1900, %v1896
        %v1902 = vmul.f32 1.0, %v1901
        %v1903 = vrcp.pop %v971
        %v1904 = vmul.f32 %v971, %v1903
        %v1905 = vsub.f32 1.0, %v1904
        %v1906 = vmul.f32 %v1903, %v1905
        %v1907 = vadd.f32 %v1903, %v1906
        %vm1908 = vweird.f32 %v971
        %vm1909 = vweird.f32 %v1903
        %vm1910 = vmor %vm1908, %vm1909
        %v1911 = vsel %vm1910, %v1903, %v1907
        %v1912 = vand.u32 2147483647, %v971
        %vm1913 = vcmp.eq.f32.partialorder %v1912, 8.507059e+37
        %v1914 = vand.u32 %v971, 2147483648
        %v1915 = vor.u32 1.1754944e-38, %v1914
        %v1916 = vsel %vm1913, %v1915, %v1911
        %v1917 = vmul.f32 1.0, %v1916
        %v1918 = vrcp.pop %v972
        %v1919 = vmul.f32 %v972, %v1918
        %v1920 = vsub.f32 1.0, %v1919
        %v1921 = vmul.f32 %v1918, %v1920
        %v1922 = vadd.f32 %v1918, %v1921
        %vm1923 = vweird.f32 %v972
        %vm1924 = vweird.f32 %v1918
        %vm1925 = vmor %vm1923, %vm1924
        %v1926 = vsel %vm1925, %v1918, %v1922
        %v1927 = vand.u32 2147483647, %v972
        %vm1928 = vcmp.eq.f32.partialorder %v1927, 8.507059e+37
        %v1929 = vand.u32 %v972, 2147483648
        %v1930 = vor.u32 1.1754944e-38, %v1929
        %v1931 = vsel %vm1928, %v1930, %v1926
        %v1932 = vmul.f32 1.0, %v1931
        %v1933 = vmul.f32 %v558, %v987
        %v1934 = vmul.f32 %v560, %v1002
        %v1935 = vmul.f32 %v563, %v1017
        %v1936 = vmul.f32 %v565, %v1032
        %v1937 = vmul.f32 %v568, %v1047
        %v1938 = vmul.f32 %v570, %v1062
        %v1939 = vmul.f32 %v573, %v1077
        %v1940 = vmul.f32 %v575, %v1092
        %v1941 = vmul.f32 %v578, %v1107
        %v1942 = vmul.f32 %v580, %v1122
        %v1943 = vmul.f32 %v583, %v1137
        %v1944 = vmul.f32 %v585, %v1152
        %v1945 = vmul.f32 %v588, %v1167
        %v1946 = vmul.f32 %v590, %v1182
        %v1947 = vmul.f32 %v593, %v1197
        %v1948 = vmul.f32 %v595, %v1212
        %v1949 = vmul.f32 %v598, %v1227
        %v1950 = vmul.f32 %v600, %v1242
        %v1951 = vmul.f32 %v603, %v1257
        %v1952 = vmul.f32 %v605, %v1272
        %v1953 = vmul.f32 %v608, %v1287
        %v1954 = vmul.f32 %v610, %v1302
        %v1955 = vmul.f32 %v613, %v1317
        %v1956 = vmul.f32 %v615, %v1332
        %v1957 = vmul.f32 %v618, %v1347
        %v1958 = vmul.f32 %v620, %v1362
        %v1959 = vmul.f32 %v623, %v1377
        %v1960 = vmul.f32 %v625, %v1392
        %v1961 = vmul.f32 %v628, %v1407
        %v1962 = vmul.f32 %v630, %v1422
        %v1963 = vmul.f32 %v633, %v1437
        %v1964 = vmul.f32 %v635, %v1452
        %v1965 = vmul.f32 %v638, %v1467
        %v1966 = vmul.f32 %v640, %v1482
        %v1967 = vmul.f32 %v643, %v1497
        %v1968 = vmul.f32 %v645, %v1512
        %v1969 = vmul.f32 %v648, %v1527
        %v1970 = vmul.f32 %v650, %v1542
        %v1971 = vmul.f32 %v653, %v1557
        %v1972 = vmul.f32 %v655, %v1572
        %v1973 = vmul.f32 %v658, %v1587
        %v1974 = vmul.f32 %v660, %v1602
        %v1975 = vmul.f32 %v663, %v1617
        %v1976 = vmul.f32 %v665, %v1632
        %v1977 = vmul.f32 %v668, %v1647
        %v1978 = vmul.f32 %v670, %v1662
        %v1979 = vmul.f32 %v673, %v1677
        %v1980 = vmul.f32 %v675, %v1692
        %v1981 = vmul.f32 %v678, %v1707
        %v1982 = vmul.f32 %v680, %v1722
        %v1983 = vmul.f32 %v683, %v1737
        %v1984 = vmul.f32 %v685, %v1752
        %v1985 = vmul.f32 %v688, %v1767
        %v1986 = vmul.f32 %v690, %v1782
        %v1987 = vmul.f32 %v693, %v1797
        %v1988 = vmul.f32 %v695, %v1812
        %v1989 = vmul.f32 %v698, %v1827
        %v1990 = vmul.f32 %v700, %v1842
        %v1991 = vmul.f32 %v703, %v1857
        %v1992 = vmul.f32 %v705, %v1872
        %v1993 = vmul.f32 %v708, %v1887
        %v1994 = vmul.f32 %v710, %v1902
        %v1995 = vmul.f32 %v713, %v1917
        %v1996 = vmul.f32 %v715, %v1932
        %v1997 = vpack.c.bf16 %v1934, %v1933
        %v1998 = vpack.c.bf16 %v1936, %v1935
        %v1999 = vpack.c.bf16 %v1938, %v1937
        %v2000 = vpack.c.bf16 %v1940, %v1939
        %v2001 = vpack.c.bf16 %v1942, %v1941
        %v2002 = vpack.c.bf16 %v1944, %v1943
        %v2003 = vpack.c.bf16 %v1946, %v1945
        %v2004 = vpack.c.bf16 %v1948, %v1947
        %v2005 = vpack.c.bf16 %v1950, %v1949
        %v2006 = vpack.c.bf16 %v1952, %v1951
        %v2007 = vpack.c.bf16 %v1954, %v1953
        %v2008 = vpack.c.bf16 %v1956, %v1955
        %v2009 = vpack.c.bf16 %v1958, %v1957
        %v2010 = vpack.c.bf16 %v1960, %v1959
        %v2011 = vpack.c.bf16 %v1962, %v1961
        %v2012 = vpack.c.bf16 %v1964, %v1963
        %v2013 = vpack.c.bf16 %v1966, %v1965
        %v2014 = vpack.c.bf16 %v1968, %v1967
        %v2015 = vpack.c.bf16 %v1970, %v1969
        %v2016 = vpack.c.bf16 %v1972, %v1971
        %v2017 = vpack.c.bf16 %v1974, %v1973
        %v2018 = vpack.c.bf16 %v1976, %v1975
        %v2019 = vpack.c.bf16 %v1978, %v1977
        %v2020 = vpack.c.bf16 %v1980, %v1979
        %v2021 = vpack.c.bf16 %v1982, %v1981
        %v2022 = vpack.c.bf16 %v1984, %v1983
        %v2023 = vpack.c.bf16 %v1986, %v1985
        %v2024 = vpack.c.bf16 %v1988, %v1987
        %v2025 = vpack.c.bf16 %v1990, %v1989
        %v2026 = vpack.c.bf16 %v1992, %v1991
        %v2027 = vpack.c.bf16 %v1994, %v1993
        %v2028 = vpack.c.bf16 %v1996, %v1995
        %v2029 = vld [vmem:[%s3] sm:$0xf]
        %v2030 = vld [vmem:[%s3 + $0x4] sm:$0xf]
        %v2031 = vld [vmem:[%s3 + $0x8] sm:$0xf]
        %v2032 = vld [vmem:[%s3 + $0xc] sm:$0xf]
        %v2033 = vld [vmem:[%s3 + $0x10] sm:$0xf]
        %v2034 = vld [vmem:[%s3 + $0x14] sm:$0xf]
        %v2035 = vld [vmem:[%s3 + $0x18] sm:$0xf]
        %v2036 = vld [vmem:[%s3 + $0x1c] sm:$0xf]
        %v2037 = vld [vmem:[%s4] sm:$0x1]
        %v2039 = vperm.slane %v2037, 0
        %v2049 = vunpack.c.l.b16 %v2029
        %v2050 = vunpack.c.l.b16 %v2030
        %v2051 = vunpack.c.l.b16 %v2031
        %v2052 = vunpack.c.l.b16 %v2032
        %v2053 = vunpack.c.l.b16 %v2033
        %v2054 = vunpack.c.l.b16 %v2034
        %v2055 = vunpack.c.l.b16 %v2035
        %v2056 = vunpack.c.l.b16 %v2036
        %v2057 = vpack.c.b16 %v2050, %v2049
        %v2058 = vpack.c.b16 %v2052, %v2051
        %v2059 = vpack.c.b16 %v2054, %v2053
        %v2060 = vpack.c.b16 %v2056, %v2055
        %vm2065 = vcmask 523264
        %v2067 = vsel %vm2065, %v1997, 0
        %v2070 = vsel %vm2065, %v1998, 0
        %v2073 = vsel %vm2065, %v1999, 0
        %v2076 = vsel %vm2065, %v2000, 0
        %v2079 = vsel %vm2065, %v2001, 0
        %v2082 = vsel %vm2065, %v2002, 0
        %v2085 = vsel %vm2065, %v2003, 0
        %v2088 = vsel %vm2065, %v2004, 0
        %v2091 = vsel %vm2065, %v2005, 0
        %v2094 = vsel %vm2065, %v2006, 0
        %v2097 = vsel %vm2065, %v2007, 0
        %v2100 = vsel %vm2065, %v2008, 0
        %v2103 = vsel %vm2065, %v2009, 0
        %v2106 = vsel %vm2065, %v2010, 0
        %v2109 = vsel %vm2065, %v2011, 0
        %v2112 = vsel %vm2065, %v2012, 0
        %v2115 = vsel %vm2065, %v2013, 0
        %v2118 = vsel %vm2065, %v2014, 0
        %v2121 = vsel %vm2065, %v2015, 0
        %v2124 = vsel %vm2065, %v2016, 0
        %v2127 = vsel %vm2065, %v2017, 0
        %v2130 = vsel %vm2065, %v2018, 0
        %v2133 = vsel %vm2065, %v2019, 0
        %v2136 = vsel %vm2065, %v2020, 0
        %v2139 = vsel %vm2065, %v2021, 0
        %v2142 = vsel %vm2065, %v2022, 0
        %v2145 = vsel %vm2065, %v2023, 0
        %v2148 = vsel %vm2065, %v2024, 0
        %v2151 = vsel %vm2065, %v2025, 0
        %v2154 = vsel %vm2065, %v2026, 0
        %v2157 = vsel %vm2065, %v2027, 0
        %v2160 = vsel %vm2065, %v2028, 0
        %2162 = vmatpush.bf16.msra.mxu0 0
        %2163 = vmatpush.bf16.msra.mxu0 0
        %2164 = vmatpush.bf16.msra.mxu0 0
        %2165 = vmatpush.bf16.msra.mxu0 0
        %2166 = vmatpush.bf16.msra.mxu0 %v2060
        %2167 = vmatpush.bf16.msra.mxu0 %v2059
        %2168 = vmatpush.bf16.msra.mxu0 %v2058
        %2169 = vmatpush.bf16.msra.mxu0 %v2057
        %2170 = vmatmul.bf16.gmra.mxu0 %v2067
        %v2171 = vpop.f32.mrf.mxu0
        %v2172 = vadd.f32 %v2039, %v2171
        %v2173 = vpop.f32.mrf.mxu0
        %v2174 = vadd.f32 %v2039, %v2173
        %2175 = vmatmul.bf16.gmra.mxu0 %v2070
        %v2176 = vpop.f32.mrf.mxu0
        %v2177 = vadd.f32 %v2039, %v2176
        %v2178 = vpop.f32.mrf.mxu0
        %v2179 = vadd.f32 %v2039, %v2178
        %2180 = vmatmul.bf16.gmra.mxu0 %v2073
        %v2181 = vpop.f32.mrf.mxu0
        %v2182 = vadd.f32 %v2039, %v2181
        %v2183 = vpop.f32.mrf.mxu0
        %v2184 = vadd.f32 %v2039, %v2183
        %2185 = vmatmul.bf16.gmra.mxu0 %v2076
        %v2186 = vpop.f32.mrf.mxu0
        %v2187 = vadd.f32 %v2039, %v2186
        %v2188 = vpop.f32.mrf.mxu0
        %v2189 = vadd.f32 %v2039, %v2188
        %2190 = vmatmul.bf16.gmra.mxu0 %v2079
        %v2191 = vpop.f32.mrf.mxu0
        %v2192 = vadd.f32 %v2039, %v2191
        %v2193 = vpop.f32.mrf.mxu0
        %v2194 = vadd.f32 %v2039, %v2193
        %2195 = vmatmul.bf16.gmra.mxu0 %v2082
        %v2196 = vpop.f32.mrf.mxu0
        %v2197 = vadd.f32 %v2039, %v2196
        %v2198 = vpop.f32.mrf.mxu0
        %v2199 = vadd.f32 %v2039, %v2198
        %2200 = vmatmul.bf16.gmra.mxu0 %v2085
        %v2201 = vpop.f32.mrf.mxu0
        %v2202 = vadd.f32 %v2039, %v2201
        %v2203 = vpop.f32.mrf.mxu0
        %v2204 = vadd.f32 %v2039, %v2203
        %2205 = vmatmul.bf16.gmra.mxu0 %v2088
        %v2206 = vpop.f32.mrf.mxu0
        %v2207 = vadd.f32 %v2039, %v2206
        %v2208 = vpop.f32.mrf.mxu0
        %v2209 = vadd.f32 %v2039, %v2208
        %2210 = vmatmul.bf16.gmra.mxu0 %v2091
        %v2211 = vpop.f32.mrf.mxu0
        %v2212 = vadd.f32 %v2039, %v2211
        %v2213 = vpop.f32.mrf.mxu0
        %v2214 = vadd.f32 %v2039, %v2213
        %2215 = vmatmul.bf16.gmra.mxu0 %v2094
        %v2216 = vpop.f32.mrf.mxu0
        %v2217 = vadd.f32 %v2039, %v2216
        %v2218 = vpop.f32.mrf.mxu0
        %v2219 = vadd.f32 %v2039, %v2218
        %2220 = vmatmul.bf16.gmra.mxu0 %v2097
        %v2221 = vpop.f32.mrf.mxu0
        %v2222 = vadd.f32 %v2039, %v2221
        %v2223 = vpop.f32.mrf.mxu0
        %v2224 = vadd.f32 %v2039, %v2223
        %2225 = vmatmul.bf16.gmra.mxu0 %v2100
        %v2226 = vpop.f32.mrf.mxu0
        %v2227 = vadd.f32 %v2039, %v2226
        %v2228 = vpop.f32.mrf.mxu0
        %v2229 = vadd.f32 %v2039, %v2228
        %2230 = vmatmul.bf16.gmra.mxu0 %v2103
        %v2231 = vpop.f32.mrf.mxu0
        %v2232 = vadd.f32 %v2039, %v2231
        %v2233 = vpop.f32.mrf.mxu0
        %v2234 = vadd.f32 %v2039, %v2233
        %2235 = vmatmul.bf16.gmra.mxu0 %v2106
        %v2236 = vpop.f32.mrf.mxu0
        %v2237 = vadd.f32 %v2039, %v2236
        %v2238 = vpop.f32.mrf.mxu0
        %v2239 = vadd.f32 %v2039, %v2238
        %2240 = vmatmul.bf16.gmra.mxu0 %v2109
        %v2241 = vpop.f32.mrf.mxu0
        %v2242 = vadd.f32 %v2039, %v2241
        %v2243 = vpop.f32.mrf.mxu0
        %v2244 = vadd.f32 %v2039, %v2243
        %2245 = vmatmul.bf16.gmra.mxu0 %v2112
        %v2246 = vpop.f32.mrf.mxu0
        %v2247 = vadd.f32 %v2039, %v2246
        %v2248 = vpop.f32.mrf.mxu0
        %v2249 = vadd.f32 %v2039, %v2248
        %2250 = vmatmul.bf16.gmra.mxu0 %v2115
        %v2251 = vpop.f32.mrf.mxu0
        %v2252 = vadd.f32 %v2039, %v2251
        %v2253 = vpop.f32.mrf.mxu0
        %v2254 = vadd.f32 %v2039, %v2253
        %2255 = vmatmul.bf16.gmra.mxu0 %v2118
        %v2256 = vpop.f32.mrf.mxu0
        %v2257 = vadd.f32 %v2039, %v2256
        %v2258 = vpop.f32.mrf.mxu0
        %v2259 = vadd.f32 %v2039, %v2258
        %2260 = vmatmul.bf16.gmra.mxu0 %v2121
        %v2261 = vpop.f32.mrf.mxu0
        %v2262 = vadd.f32 %v2039, %v2261
        %v2263 = vpop.f32.mrf.mxu0
        %v2264 = vadd.f32 %v2039, %v2263
        %2265 = vmatmul.bf16.gmra.mxu0 %v2124
        %v2266 = vpop.f32.mrf.mxu0
        %v2267 = vadd.f32 %v2039, %v2266
        %v2268 = vpop.f32.mrf.mxu0
        %v2269 = vadd.f32 %v2039, %v2268
        %2270 = vmatmul.bf16.gmra.mxu0 %v2127
        %v2271 = vpop.f32.mrf.mxu0
        %v2272 = vadd.f32 %v2039, %v2271
        %v2273 = vpop.f32.mrf.mxu0
        %v2274 = vadd.f32 %v2039, %v2273
        %2275 = vmatmul.bf16.gmra.mxu0 %v2130
        %v2276 = vpop.f32.mrf.mxu0
        %v2277 = vadd.f32 %v2039, %v2276
        %v2278 = vpop.f32.mrf.mxu0
        %v2279 = vadd.f32 %v2039, %v2278
        %2280 = vmatmul.bf16.gmra.mxu0 %v2133
        %v2281 = vpop.f32.mrf.mxu0
        %v2282 = vadd.f32 %v2039, %v2281
        %v2283 = vpop.f32.mrf.mxu0
        %v2284 = vadd.f32 %v2039, %v2283
        %2285 = vmatmul.bf16.gmra.mxu0 %v2136
        %v2286 = vpop.f32.mrf.mxu0
        %v2287 = vadd.f32 %v2039, %v2286
        %v2288 = vpop.f32.mrf.mxu0
        %v2289 = vadd.f32 %v2039, %v2288
        %2290 = vmatmul.bf16.gmra.mxu0 %v2139
        %v2291 = vpop.f32.mrf.mxu0
        %v2292 = vadd.f32 %v2039, %v2291
        %v2293 = vpop.f32.mrf.mxu0
        %v2294 = vadd.f32 %v2039, %v2293
        %2295 = vmatmul.bf16.gmra.mxu0 %v2142
        %v2296 = vpop.f32.mrf.mxu0
        %v2297 = vadd.f32 %v2039, %v2296
        %v2298 = vpop.f32.mrf.mxu0
        %v2299 = vadd.f32 %v2039, %v2298
        %2300 = vmatmul.bf16.gmra.mxu0 %v2145
        %v2301 = vpop.f32.mrf.mxu0
        %v2302 = vadd.f32 %v2039, %v2301
        %v2303 = vpop.f32.mrf.mxu0
        %v2304 = vadd.f32 %v2039, %v2303
        %2305 = vmatmul.bf16.gmra.mxu0 %v2148
        %v2306 = vpop.f32.mrf.mxu0
        %v2307 = vadd.f32 %v2039, %v2306
        %v2308 = vpop.f32.mrf.mxu0
        %v2309 = vadd.f32 %v2039, %v2308
        %2310 = vmatmul.bf16.gmra.mxu0 %v2151
        %v2311 = vpop.f32.mrf.mxu0
        %v2312 = vadd.f32 %v2039, %v2311
        %v2313 = vpop.f32.mrf.mxu0
        %v2314 = vadd.f32 %v2039, %v2313
        %2315 = vmatmul.bf16.gmra.mxu0 %v2154
        %v2316 = vpop.f32.mrf.mxu0
        %v2317 = vadd.f32 %v2039, %v2316
        %v2318 = vpop.f32.mrf.mxu0
        %v2319 = vadd.f32 %v2039, %v2318
        %2320 = vmatmul.bf16.gmra.mxu0 %v2157
        %v2321 = vpop.f32.mrf.mxu0
        %v2322 = vadd.f32 %v2039, %v2321
        %v2323 = vpop.f32.mrf.mxu0
        %v2324 = vadd.f32 %v2039, %v2323
        %2325 = vmatmul.bf16.gmra.mxu0 %v2160
        %v2326 = vpop.f32.mrf.mxu0
        %v2327 = vadd.f32 %v2039, %v2326
        %v2328 = vpop.f32.mrf.mxu0
        %v2329 = vadd.f32 %v2039, %v2328
        %2330 = vdwg.mxu0
        %v2331 = vxor.u32 %v2172, 2147483648
        %v2332 = vxor.u32 %v2174, 2147483648
        %v2333 = vxor.u32 %v2177, 2147483648
        %v2334 = vxor.u32 %v2179, 2147483648
        %v2335 = vxor.u32 %v2182, 2147483648
        %v2336 = vxor.u32 %v2184, 2147483648
        %v2337 = vxor.u32 %v2187, 2147483648
        %v2338 = vxor.u32 %v2189, 2147483648
        %v2339 = vxor.u32 %v2192, 2147483648
        %v2340 = vxor.u32 %v2194, 2147483648
        %v2341 = vxor.u32 %v2197, 2147483648
        %v2342 = vxor.u32 %v2199, 2147483648
        %v2343 = vxor.u32 %v2202, 2147483648
        %v2344 = vxor.u32 %v2204, 2147483648
        %v2345 = vxor.u32 %v2207, 2147483648
        %v2346 = vxor.u32 %v2209, 2147483648
        %v2347 = vxor.u32 %v2212, 2147483648
        %v2348 = vxor.u32 %v2214, 2147483648
        %v2349 = vxor.u32 %v2217, 2147483648
        %v2350 = vxor.u32 %v2219, 2147483648
        %v2351 = vxor.u32 %v2222, 2147483648
        %v2352 = vxor.u32 %v2224, 2147483648
        %v2353 = vxor.u32 %v2227, 2147483648
        %v2354 = vxor.u32 %v2229, 2147483648
        %v2355 = vxor.u32 %v2232, 2147483648
        %v2356 = vxor.u32 %v2234, 2147483648
        %v2357 = vxor.u32 %v2237, 2147483648
        %v2358 = vxor.u32 %v2239, 2147483648
        %v2359 = vxor.u32 %v2242, 2147483648
        %v2360 = vxor.u32 %v2244, 2147483648
        %v2361 = vxor.u32 %v2247, 2147483648
        %v2362 = vxor.u32 %v2249, 2147483648
        %v2363 = vxor.u32 %v2252, 2147483648
        %v2364 = vxor.u32 %v2254, 2147483648
        %v2365 = vxor.u32 %v2257, 2147483648
        %v2366 = vxor.u32 %v2259, 2147483648
        %v2367 = vxor.u32 %v2262, 2147483648
        %v2368 = vxor.u32 %v2264, 2147483648
        %v2369 = vxor.u32 %v2267, 2147483648
        %v2370 = vxor.u32 %v2269, 2147483648
        %v2371 = vxor.u32 %v2272, 2147483648
        %v2372 = vxor.u32 %v2274, 2147483648
        %v2373 = vxor.u32 %v2277, 2147483648
        %v2374 = vxor.u32 %v2279, 2147483648
        %v2375 = vxor.u32 %v2282, 2147483648
        %v2376 = vxor.u32 %v2284, 2147483648
        %v2377 = vxor.u32 %v2287, 2147483648
        %v2378 = vxor.u32 %v2289, 2147483648
        %v2379 = vxor.u32 %v2292, 2147483648
        %v2380 = vxor.u32 %v2294, 2147483648
        %v2381 = vxor.u32 %v2297, 2147483648
        %v2382 = vxor.u32 %v2299, 2147483648
        %v2383 = vxor.u32 %v2302, 2147483648
        %v2384 = vxor.u32 %v2304, 2147483648
        %v2385 = vxor.u32 %v2307, 2147483648
        %v2386 = vxor.u32 %v2309, 2147483648
        %v2387 = vxor.u32 %v2312, 2147483648
        %v2388 = vxor.u32 %v2314, 2147483648
        %v2389 = vxor.u32 %v2317, 2147483648
        %v2390 = vxor.u32 %v2319, 2147483648
        %v2391 = vxor.u32 %v2322, 2147483648
        %v2392 = vxor.u32 %v2324, 2147483648
        %v2393 = vxor.u32 %v2327, 2147483648
        %v2394 = vxor.u32 %v2329, 2147483648
        %v2395 = vmul.f32 %v2331, 1.442695
        %v2396 = vpow.pop %v2395
        %v2397 = vmul.f32 %v2332, 1.442695
        %v2398 = vpow.pop %v2397
        %v2399 = vmul.f32 %v2333, 1.442695
        %v2400 = vpow.pop %v2399
        %v2401 = vmul.f32 %v2334, 1.442695
        %v2402 = vpow.pop %v2401
        %v2403 = vmul.f32 %v2335, 1.442695
        %v2404 = vpow.pop %v2403
        %v2405 = vmul.f32 %v2336, 1.442695
        %v2406 = vpow.pop %v2405
        %v2407 = vmul.f32 %v2337, 1.442695
        %v2408 = vpow.pop %v2407
        %v2409 = vmul.f32 %v2338, 1.442695
        %v2410 = vpow.pop %v2409
        %v2411 = vmul.f32 %v2339, 1.442695
        %v2412 = vpow.pop %v2411
        %v2413 = vmul.f32 %v2340, 1.442695
        %v2414 = vpow.pop %v2413
        %v2415 = vmul.f32 %v2341, 1.442695
        %v2416 = vpow.pop %v2415
        %v2417 = vmul.f32 %v2342, 1.442695
        %v2418 = vpow.pop %v2417
        %v2419 = vmul.f32 %v2343, 1.442695
        %v2420 = vpow.pop %v2419
        %v2421 = vmul.f32 %v2344, 1.442695
        %v2422 = vpow.pop %v2421
        %v2423 = vmul.f32 %v2345, 1.442695
        %v2424 = vpow.pop %v2423
        %v2425 = vmul.f32 %v2346, 1.442695
        %v2426 = vpow.pop %v2425
        %v2427 = vmul.f32 %v2347, 1.442695
        %v2428 = vpow.pop %v2427
        %v2429 = vmul.f32 %v2348, 1.442695
        %v2430 = vpow.pop %v2429
        %v2431 = vmul.f32 %v2349, 1.442695
        %v2432 = vpow.pop %v2431
        %v2433 = vmul.f32 %v2350, 1.442695
        %v2434 = vpow.pop %v2433
        %v2435 = vmul.f32 %v2351, 1.442695
        %v2436 = vpow.pop %v2435
        %v2437 = vmul.f32 %v2352, 1.442695
        %v2438 = vpow.pop %v2437
        %v2439 = vmul.f32 %v2353, 1.442695
        %v2440 = vpow.pop %v2439
        %v2441 = vmul.f32 %v2354, 1.442695
        %v2442 = vpow.pop %v2441
        %v2443 = vmul.f32 %v2355, 1.442695
        %v2444 = vpow.pop %v2443
        %v2445 = vmul.f32 %v2356, 1.442695
        %v2446 = vpow.pop %v2445
        %v2447 = vmul.f32 %v2357, 1.442695
        %v2448 = vpow.pop %v2447
        %v2449 = vmul.f32 %v2358, 1.442695
        %v2450 = vpow.pop %v2449
        %v2451 = vmul.f32 %v2359, 1.442695
        %v2452 = vpow.pop %v2451
        %v2453 = vmul.f32 %v2360, 1.442695
        %v2454 = vpow.pop %v2453
        %v2455 = vmul.f32 %v2361, 1.442695
        %v2456 = vpow.pop %v2455
        %v2457 = vmul.f32 %v2362, 1.442695
        %v2458 = vpow.pop %v2457
        %v2459 = vmul.f32 %v2363, 1.442695
        %v2460 = vpow.pop %v2459
        %v2461 = vmul.f32 %v2364, 1.442695
        %v2462 = vpow.pop %v2461
        %v2463 = vmul.f32 %v2365, 1.442695
        %v2464 = vpow.pop %v2463
        %v2465 = vmul.f32 %v2366, 1.442695
        %v2466 = vpow.pop %v2465
        %v2467 = vmul.f32 %v2367, 1.442695
        %v2468 = vpow.pop %v2467
        %v2469 = vmul.f32 %v2368, 1.442695
        %v2470 = vpow.pop %v2469
        %v2471 = vmul.f32 %v2369, 1.442695
        %v2472 = vpow.pop %v2471
        %v2473 = vmul.f32 %v2370, 1.442695
        %v2474 = vpow.pop %v2473
        %v2475 = vmul.f32 %v2371, 1.442695
        %v2476 = vpow.pop %v2475
        %v2477 = vmul.f32 %v2372, 1.442695
        %v2478 = vpow.pop %v2477
        %v2479 = vmul.f32 %v2373, 1.442695
        %v2480 = vpow.pop %v2479
        %v2481 = vmul.f32 %v2374, 1.442695
        %v2482 = vpow.pop %v2481
        %v2483 = vmul.f32 %v2375, 1.442695
        %v2484 = vpow.pop %v2483
        %v2485 = vmul.f32 %v2376, 1.442695
        %v2486 = vpow.pop %v2485
        %v2487 = vmul.f32 %v2377, 1.442695
        %v2488 = vpow.pop %v2487
        %v2489 = vmul.f32 %v2378, 1.442695
        %v2490 = vpow.pop %v2489
        %v2491 = vmul.f32 %v2379, 1.442695
        %v2492 = vpow.pop %v2491
        %v2493 = vmul.f32 %v2380, 1.442695
        %v2494 = vpow.pop %v2493
        %v2495 = vmul.f32 %v2381, 1.442695
        %v2496 = vpow.pop %v2495
        %v2497 = vmul.f32 %v2382, 1.442695
        %v2498 = vpow.pop %v2497
        %v2499 = vmul.f32 %v2383, 1.442695
        %v2500 = vpow.pop %v2499
        %v2501 = vmul.f32 %v2384, 1.442695
        %v2502 = vpow.pop %v2501
        %v2503 = vmul.f32 %v2385, 1.442695
        %v2504 = vpow.pop %v2503
        %v2505 = vmul.f32 %v2386, 1.442695
        %v2506 = vpow.pop %v2505
        %v2507 = vmul.f32 %v2387, 1.442695
        %v2508 = vpow.pop %v2507
        %v2509 = vmul.f32 %v2388, 1.442695
        %v2510 = vpow.pop %v2509
        %v2511 = vmul.f32 %v2389, 1.442695
        %v2512 = vpow.pop %v2511
        %v2513 = vmul.f32 %v2390, 1.442695
        %v2514 = vpow.pop %v2513
        %v2515 = vmul.f32 %v2391, 1.442695
        %v2516 = vpow.pop %v2515
        %v2517 = vmul.f32 %v2392, 1.442695
        %v2518 = vpow.pop %v2517
        %v2519 = vmul.f32 %v2393, 1.442695
        %v2520 = vpow.pop %v2519
        %v2521 = vmul.f32 %v2394, 1.442695
        %v2522 = vpow.pop %v2521
        %v2523 = vadd.f32 %v2396, 1.0
        %v2524 = vadd.f32 %v2398, 1.0
        %v2525 = vadd.f32 %v2400, 1.0
        %v2526 = vadd.f32 %v2402, 1.0
        %v2527 = vadd.f32 %v2404, 1.0
        %v2528 = vadd.f32 %v2406, 1.0
        %v2529 = vadd.f32 %v2408, 1.0
        %v2530 = vadd.f32 %v2410, 1.0
        %v2531 = vadd.f32 %v2412, 1.0
        %v2532 = vadd.f32 %v2414, 1.0
        %v2533 = vadd.f32 %v2416, 1.0
        %v2534 = vadd.f32 %v2418, 1.0
        %v2535 = vadd.f32 %v2420, 1.0
        %v2536 = vadd.f32 %v2422, 1.0
        %v2537 = vadd.f32 %v2424, 1.0
        %v2538 = vadd.f32 %v2426, 1.0
        %v2539 = vadd.f32 %v2428, 1.0
        %v2540 = vadd.f32 %v2430, 1.0
        %v2541 = vadd.f32 %v2432, 1.0
        %v2542 = vadd.f32 %v2434, 1.0
        %v2543 = vadd.f32 %v2436, 1.0
        %v2544 = vadd.f32 %v2438, 1.0
        %v2545 = vadd.f32 %v2440, 1.0
        %v2546 = vadd.f32 %v2442, 1.0
        %v2547 = vadd.f32 %v2444, 1.0
        %v2548 = vadd.f32 %v2446, 1.0
        %v2549 = vadd.f32 %v2448, 1.0
        %v2550 = vadd.f32 %v2450, 1.0
        %v2551 = vadd.f32 %v2452, 1.0
        %v2552 = vadd.f32 %v2454, 1.0
        %v2553 = vadd.f32 %v2456, 1.0
        %v2554 = vadd.f32 %v2458, 1.0
        %v2555 = vadd.f32 %v2460, 1.0
        %v2556 = vadd.f32 %v2462, 1.0
        %v2557 = vadd.f32 %v2464, 1.0
        %v2558 = vadd.f32 %v2466, 1.0
        %v2559 = vadd.f32 %v2468, 1.0
        %v2560 = vadd.f32 %v2470, 1.0
        %v2561 = vadd.f32 %v2472, 1.0
        %v2562 = vadd.f32 %v2474, 1.0
        %v2563 = vadd.f32 %v2476, 1.0
        %v2564 = vadd.f32 %v2478, 1.0
        %v2565 = vadd.f32 %v2480, 1.0
        %v2566 = vadd.f32 %v2482, 1.0
        %v2567 = vadd.f32 %v2484, 1.0
        %v2568 = vadd.f32 %v2486, 1.0
        %v2569 = vadd.f32 %v2488, 1.0
        %v2570 = vadd.f32 %v2490, 1.0
        %v2571 = vadd.f32 %v2492, 1.0
        %v2572 = vadd.f32 %v2494, 1.0
        %v2573 = vadd.f32 %v2496, 1.0
        %v2574 = vadd.f32 %v2498, 1.0
        %v2575 = vadd.f32 %v2500, 1.0
        %v2576 = vadd.f32 %v2502, 1.0
        %v2577 = vadd.f32 %v2504, 1.0
        %v2578 = vadd.f32 %v2506, 1.0
        %v2579 = vadd.f32 %v2508, 1.0
        %v2580 = vadd.f32 %v2510, 1.0
        %v2581 = vadd.f32 %v2512, 1.0
        %v2582 = vadd.f32 %v2514, 1.0
        %v2583 = vadd.f32 %v2516, 1.0
        %v2584 = vadd.f32 %v2518, 1.0
        %v2585 = vadd.f32 %v2520, 1.0
        %v2586 = vadd.f32 %v2522, 1.0
        %v2587 = vrcp.pop %v2523
        %v2588 = vmul.f32 %v2523, %v2587
        %v2589 = vsub.f32 1.0, %v2588
        %v2590 = vmul.f32 %v2587, %v2589
        %v2591 = vadd.f32 %v2587, %v2590
        %vm2592 = vweird.f32 %v2523
        %vm2593 = vweird.f32 %v2587
        %vm2594 = vmor %vm2592, %vm2593
        %v2595 = vsel %vm2594, %v2587, %v2591
        %v2596 = vand.u32 2147483647, %v2523
        %vm2597 = vcmp.eq.f32.partialorder %v2596, 8.507059e+37
        %v2598 = vand.u32 %v2523, 2147483648
        %v2599 = vor.u32 1.1754944e-38, %v2598
        %v2600 = vsel %vm2597, %v2599, %v2595
        %v2601 = vmul.f32 1.0, %v2600
        %v2602 = vrcp.pop %v2524
        %v2603 = vmul.f32 %v2524, %v2602
        %v2604 = vsub.f32 1.0, %v2603
        %v2605 = vmul.f32 %v2602, %v2604
        %v2606 = vadd.f32 %v2602, %v2605
        %vm2607 = vweird.f32 %v2524
        %vm2608 = vweird.f32 %v2602
        %vm2609 = vmor %vm2607, %vm2608
        %v2610 = vsel %vm2609, %v2602, %v2606
        %v2611 = vand.u32 2147483647, %v2524
        %vm2612 = vcmp.eq.f32.partialorder %v2611, 8.507059e+37
        %v2613 = vand.u32 %v2524, 2147483648
        %v2614 = vor.u32 1.1754944e-38, %v2613
        %v2615 = vsel %vm2612, %v2614, %v2610
        %v2616 = vmul.f32 1.0, %v2615
        %v2617 = vrcp.pop %v2525
        %v2618 = vmul.f32 %v2525, %v2617
        %v2619 = vsub.f32 1.0, %v2618
        %v2620 = vmul.f32 %v2617, %v2619
        %v2621 = vadd.f32 %v2617, %v2620
        %vm2622 = vweird.f32 %v2525
        %vm2623 = vweird.f32 %v2617
        %vm2624 = vmor %vm2622, %vm2623
        %v2625 = vsel %vm2624, %v2617, %v2621
        %v2626 = vand.u32 2147483647, %v2525
        %vm2627 = vcmp.eq.f32.partialorder %v2626, 8.507059e+37
        %v2628 = vand.u32 %v2525, 2147483648
        %v2629 = vor.u32 1.1754944e-38, %v2628
        %v2630 = vsel %vm2627, %v2629, %v2625
        %v2631 = vmul.f32 1.0, %v2630
        %v2632 = vrcp.pop %v2526
        %v2633 = vmul.f32 %v2526, %v2632
        %v2634 = vsub.f32 1.0, %v2633
        %v2635 = vmul.f32 %v2632, %v2634
        %v2636 = vadd.f32 %v2632, %v2635
        %vm2637 = vweird.f32 %v2526
        %vm2638 = vweird.f32 %v2632
        %vm2639 = vmor %vm2637, %vm2638
        %v2640 = vsel %vm2639, %v2632, %v2636
        %v2641 = vand.u32 2147483647, %v2526
        %vm2642 = vcmp.eq.f32.partialorder %v2641, 8.507059e+37
        %v2643 = vand.u32 %v2526, 2147483648
        %v2644 = vor.u32 1.1754944e-38, %v2643
        %v2645 = vsel %vm2642, %v2644, %v2640
        %v2646 = vmul.f32 1.0, %v2645
        %v2647 = vrcp.pop %v2527
        %v2648 = vmul.f32 %v2527, %v2647
        %v2649 = vsub.f32 1.0, %v2648
        %v2650 = vmul.f32 %v2647, %v2649
        %v2651 = vadd.f32 %v2647, %v2650
        %vm2652 = vweird.f32 %v2527
        %vm2653 = vweird.f32 %v2647
        %vm2654 = vmor %vm2652, %vm2653
        %v2655 = vsel %vm2654, %v2647, %v2651
        %v2656 = vand.u32 2147483647, %v2527
        %vm2657 = vcmp.eq.f32.partialorder %v2656, 8.507059e+37
        %v2658 = vand.u32 %v2527, 2147483648
        %v2659 = vor.u32 1.1754944e-38, %v2658
        %v2660 = vsel %vm2657, %v2659, %v2655
        %v2661 = vmul.f32 1.0, %v2660
        %v2662 = vrcp.pop %v2528
        %v2663 = vmul.f32 %v2528, %v2662
        %v2664 = vsub.f32 1.0, %v2663
        %v2665 = vmul.f32 %v2662, %v2664
        %v2666 = vadd.f32 %v2662, %v2665
        %vm2667 = vweird.f32 %v2528
        %vm2668 = vweird.f32 %v2662
        %vm2669 = vmor %vm2667, %vm2668
        %v2670 = vsel %vm2669, %v2662, %v2666
        %v2671 = vand.u32 2147483647, %v2528
        %vm2672 = vcmp.eq.f32.partialorder %v2671, 8.507059e+37
        %v2673 = vand.u32 %v2528, 2147483648
        %v2674 = vor.u32 1.1754944e-38, %v2673
        %v2675 = vsel %vm2672, %v2674, %v2670
        %v2676 = vmul.f32 1.0, %v2675
        %v2677 = vrcp.pop %v2529
        %v2678 = vmul.f32 %v2529, %v2677
        %v2679 = vsub.f32 1.0, %v2678
        %v2680 = vmul.f32 %v2677, %v2679
        %v2681 = vadd.f32 %v2677, %v2680
        %vm2682 = vweird.f32 %v2529
        %vm2683 = vweird.f32 %v2677
        %vm2684 = vmor %vm2682, %vm2683
        %v2685 = vsel %vm2684, %v2677, %v2681
        %v2686 = vand.u32 2147483647, %v2529
        %vm2687 = vcmp.eq.f32.partialorder %v2686, 8.507059e+37
        %v2688 = vand.u32 %v2529, 2147483648
        %v2689 = vor.u32 1.1754944e-38, %v2688
        %v2690 = vsel %vm2687, %v2689, %v2685
        %v2691 = vmul.f32 1.0, %v2690
        %v2692 = vrcp.pop %v2530
        %v2693 = vmul.f32 %v2530, %v2692
        %v2694 = vsub.f32 1.0, %v2693
        %v2695 = vmul.f32 %v2692, %v2694
        %v2696 = vadd.f32 %v2692, %v2695
        %vm2697 = vweird.f32 %v2530
        %vm2698 = vweird.f32 %v2692
        %vm2699 = vmor %vm2697, %vm2698
        %v2700 = vsel %vm2699, %v2692, %v2696
        %v2701 = vand.u32 2147483647, %v2530
        %vm2702 = vcmp.eq.f32.partialorder %v2701, 8.507059e+37
        %v2703 = vand.u32 %v2530, 2147483648
        %v2704 = vor.u32 1.1754944e-38, %v2703
        %v2705 = vsel %vm2702, %v2704, %v2700
        %v2706 = vmul.f32 1.0, %v2705
        %v2707 = vrcp.pop %v2531
        %v2708 = vmul.f32 %v2531, %v2707
        %v2709 = vsub.f32 1.0, %v2708
        %v2710 = vmul.f32 %v2707, %v2709
        %v2711 = vadd.f32 %v2707, %v2710
        %vm2712 = vweird.f32 %v2531
        %vm2713 = vweird.f32 %v2707
        %vm2714 = vmor %vm2712, %vm2713
        %v2715 = vsel %vm2714, %v2707, %v2711
        %v2716 = vand.u32 2147483647, %v2531
        %vm2717 = vcmp.eq.f32.partialorder %v2716, 8.507059e+37
        %v2718 = vand.u32 %v2531, 2147483648
        %v2719 = vor.u32 1.1754944e-38, %v2718
        %v2720 = vsel %vm2717, %v2719, %v2715
        %v2721 = vmul.f32 1.0, %v2720
        %v2722 = vrcp.pop %v2532
        %v2723 = vmul.f32 %v2532, %v2722
        %v2724 = vsub.f32 1.0, %v2723
        %v2725 = vmul.f32 %v2722, %v2724
        %v2726 = vadd.f32 %v2722, %v2725
        %vm2727 = vweird.f32 %v2532
        %vm2728 = vweird.f32 %v2722
        %vm2729 = vmor %vm2727, %vm2728
        %v2730 = vsel %vm2729, %v2722, %v2726
        %v2731 = vand.u32 2147483647, %v2532
        %vm2732 = vcmp.eq.f32.partialorder %v2731, 8.507059e+37
        %v2733 = vand.u32 %v2532, 2147483648
        %v2734 = vor.u32 1.1754944e-38, %v2733
        %v2735 = vsel %vm2732, %v2734, %v2730
        %v2736 = vmul.f32 1.0, %v2735
        %v2737 = vrcp.pop %v2533
        %v2738 = vmul.f32 %v2533, %v2737
        %v2739 = vsub.f32 1.0, %v2738
        %v2740 = vmul.f32 %v2737, %v2739
        %v2741 = vadd.f32 %v2737, %v2740
        %vm2742 = vweird.f32 %v2533
        %vm2743 = vweird.f32 %v2737
        %vm2744 = vmor %vm2742, %vm2743
        %v2745 = vsel %vm2744, %v2737, %v2741
        %v2746 = vand.u32 2147483647, %v2533
        %vm2747 = vcmp.eq.f32.partialorder %v2746, 8.507059e+37
        %v2748 = vand.u32 %v2533, 2147483648
        %v2749 = vor.u32 1.1754944e-38, %v2748
        %v2750 = vsel %vm2747, %v2749, %v2745
        %v2751 = vmul.f32 1.0, %v2750
        %v2752 = vrcp.pop %v2534
        %v2753 = vmul.f32 %v2534, %v2752
        %v2754 = vsub.f32 1.0, %v2753
        %v2755 = vmul.f32 %v2752, %v2754
        %v2756 = vadd.f32 %v2752, %v2755
        %vm2757 = vweird.f32 %v2534
        %vm2758 = vweird.f32 %v2752
        %vm2759 = vmor %vm2757, %vm2758
        %v2760 = vsel %vm2759, %v2752, %v2756
        %v2761 = vand.u32 2147483647, %v2534
        %vm2762 = vcmp.eq.f32.partialorder %v2761, 8.507059e+37
        %v2763 = vand.u32 %v2534, 2147483648
        %v2764 = vor.u32 1.1754944e-38, %v2763
        %v2765 = vsel %vm2762, %v2764, %v2760
        %v2766 = vmul.f32 1.0, %v2765
        %v2767 = vrcp.pop %v2535
        %v2768 = vmul.f32 %v2535, %v2767
        %v2769 = vsub.f32 1.0, %v2768
        %v2770 = vmul.f32 %v2767, %v2769
        %v2771 = vadd.f32 %v2767, %v2770
        %vm2772 = vweird.f32 %v2535
        %vm2773 = vweird.f32 %v2767
        %vm2774 = vmor %vm2772, %vm2773
        %v2775 = vsel %vm2774, %v2767, %v2771
        %v2776 = vand.u32 2147483647, %v2535
        %vm2777 = vcmp.eq.f32.partialorder %v2776, 8.507059e+37
        %v2778 = vand.u32 %v2535, 2147483648
        %v2779 = vor.u32 1.1754944e-38, %v2778
        %v2780 = vsel %vm2777, %v2779, %v2775
        %v2781 = vmul.f32 1.0, %v2780
        %v2782 = vrcp.pop %v2536
        %v2783 = vmul.f32 %v2536, %v2782
        %v2784 = vsub.f32 1.0, %v2783
        %v2785 = vmul.f32 %v2782, %v2784
        %v2786 = vadd.f32 %v2782, %v2785
        %vm2787 = vweird.f32 %v2536
        %vm2788 = vweird.f32 %v2782
        %vm2789 = vmor %vm2787, %vm2788
        %v2790 = vsel %vm2789, %v2782, %v2786
        %v2791 = vand.u32 2147483647, %v2536
        %vm2792 = vcmp.eq.f32.partialorder %v2791, 8.507059e+37
        %v2793 = vand.u32 %v2536, 2147483648
        %v2794 = vor.u32 1.1754944e-38, %v2793
        %v2795 = vsel %vm2792, %v2794, %v2790
        %v2796 = vmul.f32 1.0, %v2795
        %v2797 = vrcp.pop %v2537
        %v2798 = vmul.f32 %v2537, %v2797
        %v2799 = vsub.f32 1.0, %v2798
        %v2800 = vmul.f32 %v2797, %v2799
        %v2801 = vadd.f32 %v2797, %v2800
        %vm2802 = vweird.f32 %v2537
        %vm2803 = vweird.f32 %v2797
        %vm2804 = vmor %vm2802, %vm2803
        %v2805 = vsel %vm2804, %v2797, %v2801
        %v2806 = vand.u32 2147483647, %v2537
        %vm2807 = vcmp.eq.f32.partialorder %v2806, 8.507059e+37
        %v2808 = vand.u32 %v2537, 2147483648
        %v2809 = vor.u32 1.1754944e-38, %v2808
        %v2810 = vsel %vm2807, %v2809, %v2805
        %v2811 = vmul.f32 1.0, %v2810
        %v2812 = vrcp.pop %v2538
        %v2813 = vmul.f32 %v2538, %v2812
        %v2814 = vsub.f32 1.0, %v2813
        %v2815 = vmul.f32 %v2812, %v2814
        %v2816 = vadd.f32 %v2812, %v2815
        %vm2817 = vweird.f32 %v2538
        %vm2818 = vweird.f32 %v2812
        %vm2819 = vmor %vm2817, %vm2818
        %v2820 = vsel %vm2819, %v2812, %v2816
        %v2821 = vand.u32 2147483647, %v2538
        %vm2822 = vcmp.eq.f32.partialorder %v2821, 8.507059e+37
        %v2823 = vand.u32 %v2538, 2147483648
        %v2824 = vor.u32 1.1754944e-38, %v2823
        %v2825 = vsel %vm2822, %v2824, %v2820
        %v2826 = vmul.f32 1.0, %v2825
        %v2827 = vrcp.pop %v2539
        %v2828 = vmul.f32 %v2539, %v2827
        %v2829 = vsub.f32 1.0, %v2828
        %v2830 = vmul.f32 %v2827, %v2829
        %v2831 = vadd.f32 %v2827, %v2830
        %vm2832 = vweird.f32 %v2539
        %vm2833 = vweird.f32 %v2827
        %vm2834 = vmor %vm2832, %vm2833
        %v2835 = vsel %vm2834, %v2827, %v2831
        %v2836 = vand.u32 2147483647, %v2539
        %vm2837 = vcmp.eq.f32.partialorder %v2836, 8.507059e+37
        %v2838 = vand.u32 %v2539, 2147483648
        %v2839 = vor.u32 1.1754944e-38, %v2838
        %v2840 = vsel %vm2837, %v2839, %v2835
        %v2841 = vmul.f32 1.0, %v2840
        %v2842 = vrcp.pop %v2540
        %v2843 = vmul.f32 %v2540, %v2842
        %v2844 = vsub.f32 1.0, %v2843
        %v2845 = vmul.f32 %v2842, %v2844
        %v2846 = vadd.f32 %v2842, %v2845
        %vm2847 = vweird.f32 %v2540
        %vm2848 = vweird.f32 %v2842
        %vm2849 = vmor %vm2847, %vm2848
        %v2850 = vsel %vm2849, %v2842, %v2846
        %v2851 = vand.u32 2147483647, %v2540
        %vm2852 = vcmp.eq.f32.partialorder %v2851, 8.507059e+37
        %v2853 = vand.u32 %v2540, 2147483648
        %v2854 = vor.u32 1.1754944e-38, %v2853
        %v2855 = vsel %vm2852, %v2854, %v2850
        %v2856 = vmul.f32 1.0, %v2855
        %v2857 = vrcp.pop %v2541
        %v2858 = vmul.f32 %v2541, %v2857
        %v2859 = vsub.f32 1.0, %v2858
        %v2860 = vmul.f32 %v2857, %v2859
        %v2861 = vadd.f32 %v2857, %v2860
        %vm2862 = vweird.f32 %v2541
        %vm2863 = vweird.f32 %v2857
        %vm2864 = vmor %vm2862, %vm2863
        %v2865 = vsel %vm2864, %v2857, %v2861
        %v2866 = vand.u32 2147483647, %v2541
        %vm2867 = vcmp.eq.f32.partialorder %v2866, 8.507059e+37
        %v2868 = vand.u32 %v2541, 2147483648
        %v2869 = vor.u32 1.1754944e-38, %v2868
        %v2870 = vsel %vm2867, %v2869, %v2865
        %v2871 = vmul.f32 1.0, %v2870
        %v2872 = vrcp.pop %v2542
        %v2873 = vmul.f32 %v2542, %v2872
        %v2874 = vsub.f32 1.0, %v2873
        %v2875 = vmul.f32 %v2872, %v2874
        %v2876 = vadd.f32 %v2872, %v2875
        %vm2877 = vweird.f32 %v2542
        %vm2878 = vweird.f32 %v2872
        %vm2879 = vmor %vm2877, %vm2878
        %v2880 = vsel %vm2879, %v2872, %v2876
        %v2881 = vand.u32 2147483647, %v2542
        %vm2882 = vcmp.eq.f32.partialorder %v2881, 8.507059e+37
        %v2883 = vand.u32 %v2542, 2147483648
        %v2884 = vor.u32 1.1754944e-38, %v2883
        %v2885 = vsel %vm2882, %v2884, %v2880
        %v2886 = vmul.f32 1.0, %v2885
        %v2887 = vrcp.pop %v2543
        %v2888 = vmul.f32 %v2543, %v2887
        %v2889 = vsub.f32 1.0, %v2888
        %v2890 = vmul.f32 %v2887, %v2889
        %v2891 = vadd.f32 %v2887, %v2890
        %vm2892 = vweird.f32 %v2543
        %vm2893 = vweird.f32 %v2887
        %vm2894 = vmor %vm2892, %vm2893
        %v2895 = vsel %vm2894, %v2887, %v2891
        %v2896 = vand.u32 2147483647, %v2543
        %vm2897 = vcmp.eq.f32.partialorder %v2896, 8.507059e+37
        %v2898 = vand.u32 %v2543, 2147483648
        %v2899 = vor.u32 1.1754944e-38, %v2898
        %v2900 = vsel %vm2897, %v2899, %v2895
        %v2901 = vmul.f32 1.0, %v2900
        %v2902 = vrcp.pop %v2544
        %v2903 = vmul.f32 %v2544, %v2902
        %v2904 = vsub.f32 1.0, %v2903
        %v2905 = vmul.f32 %v2902, %v2904
        %v2906 = vadd.f32 %v2902, %v2905
        %vm2907 = vweird.f32 %v2544
        %vm2908 = vweird.f32 %v2902
        %vm2909 = vmor %vm2907, %vm2908
        %v2910 = vsel %vm2909, %v2902, %v2906
        %v2911 = vand.u32 2147483647, %v2544
        %vm2912 = vcmp.eq.f32.partialorder %v2911, 8.507059e+37
        %v2913 = vand.u32 %v2544, 2147483648
        %v2914 = vor.u32 1.1754944e-38, %v2913
        %v2915 = vsel %vm2912, %v2914, %v2910
        %v2916 = vmul.f32 1.0, %v2915
        %v2917 = vrcp.pop %v2545
        %v2918 = vmul.f32 %v2545, %v2917
        %v2919 = vsub.f32 1.0, %v2918
        %v2920 = vmul.f32 %v2917, %v2919
        %v2921 = vadd.f32 %v2917, %v2920
        %vm2922 = vweird.f32 %v2545
        %vm2923 = vweird.f32 %v2917
        %vm2924 = vmor %vm2922, %vm2923
        %v2925 = vsel %vm2924, %v2917, %v2921
        %v2926 = vand.u32 2147483647, %v2545
        %vm2927 = vcmp.eq.f32.partialorder %v2926, 8.507059e+37
        %v2928 = vand.u32 %v2545, 2147483648
        %v2929 = vor.u32 1.1754944e-38, %v2928
        %v2930 = vsel %vm2927, %v2929, %v2925
        %v2931 = vmul.f32 1.0, %v2930
        %v2932 = vrcp.pop %v2546
        %v2933 = vmul.f32 %v2546, %v2932
        %v2934 = vsub.f32 1.0, %v2933
        %v2935 = vmul.f32 %v2932, %v2934
        %v2936 = vadd.f32 %v2932, %v2935
        %vm2937 = vweird.f32 %v2546
        %vm2938 = vweird.f32 %v2932
        %vm2939 = vmor %vm2937, %vm2938
        %v2940 = vsel %vm2939, %v2932, %v2936
        %v2941 = vand.u32 2147483647, %v2546
        %vm2942 = vcmp.eq.f32.partialorder %v2941, 8.507059e+37
        %v2943 = vand.u32 %v2546, 2147483648
        %v2944 = vor.u32 1.1754944e-38, %v2943
        %v2945 = vsel %vm2942, %v2944, %v2940
        %v2946 = vmul.f32 1.0, %v2945
        %v2947 = vrcp.pop %v2547
        %v2948 = vmul.f32 %v2547, %v2947
        %v2949 = vsub.f32 1.0, %v2948
        %v2950 = vmul.f32 %v2947, %v2949
        %v2951 = vadd.f32 %v2947, %v2950
        %vm2952 = vweird.f32 %v2547
        %vm2953 = vweird.f32 %v2947
        %vm2954 = vmor %vm2952, %vm2953
        %v2955 = vsel %vm2954, %v2947, %v2951
        %v2956 = vand.u32 2147483647, %v2547
        %vm2957 = vcmp.eq.f32.partialorder %v2956, 8.507059e+37
        %v2958 = vand.u32 %v2547, 2147483648
        %v2959 = vor.u32 1.1754944e-38, %v2958
        %v2960 = vsel %vm2957, %v2959, %v2955
        %v2961 = vmul.f32 1.0, %v2960
        %v2962 = vrcp.pop %v2548
        %v2963 = vmul.f32 %v2548, %v2962
        %v2964 = vsub.f32 1.0, %v2963
        %v2965 = vmul.f32 %v2962, %v2964
        %v2966 = vadd.f32 %v2962, %v2965
        %vm2967 = vweird.f32 %v2548
        %vm2968 = vweird.f32 %v2962
        %vm2969 = vmor %vm2967, %vm2968
        %v2970 = vsel %vm2969, %v2962, %v2966
        %v2971 = vand.u32 2147483647, %v2548
        %vm2972 = vcmp.eq.f32.partialorder %v2971, 8.507059e+37
        %v2973 = vand.u32 %v2548, 2147483648
        %v2974 = vor.u32 1.1754944e-38, %v2973
        %v2975 = vsel %vm2972, %v2974, %v2970
        %v2976 = vmul.f32 1.0, %v2975
        %v2977 = vrcp.pop %v2549
        %v2978 = vmul.f32 %v2549, %v2977
        %v2979 = vsub.f32 1.0, %v2978
        %v2980 = vmul.f32 %v2977, %v2979
        %v2981 = vadd.f32 %v2977, %v2980
        %vm2982 = vweird.f32 %v2549
        %vm2983 = vweird.f32 %v2977
        %vm2984 = vmor %vm2982, %vm2983
        %v2985 = vsel %vm2984, %v2977, %v2981
        %v2986 = vand.u32 2147483647, %v2549
        %vm2987 = vcmp.eq.f32.partialorder %v2986, 8.507059e+37
        %v2988 = vand.u32 %v2549, 2147483648
        %v2989 = vor.u32 1.1754944e-38, %v2988
        %v2990 = vsel %vm2987, %v2989, %v2985
        %v2991 = vmul.f32 1.0, %v2990
        %v2992 = vrcp.pop %v2550
        %v2993 = vmul.f32 %v2550, %v2992
        %v2994 = vsub.f32 1.0, %v2993
        %v2995 = vmul.f32 %v2992, %v2994
        %v2996 = vadd.f32 %v2992, %v2995
        %vm2997 = vweird.f32 %v2550
        %vm2998 = vweird.f32 %v2992
        %vm2999 = vmor %vm2997, %vm2998
        %v3000 = vsel %vm2999, %v2992, %v2996
        %v3001 = vand.u32 2147483647, %v2550
        %vm3002 = vcmp.eq.f32.partialorder %v3001, 8.507059e+37
        %v3003 = vand.u32 %v2550, 2147483648
        %v3004 = vor.u32 1.1754944e-38, %v3003
        %v3005 = vsel %vm3002, %v3004, %v3000
        %v3006 = vmul.f32 1.0, %v3005
        %v3007 = vrcp.pop %v2551
        %v3008 = vmul.f32 %v2551, %v3007
        %v3009 = vsub.f32 1.0, %v3008
        %v3010 = vmul.f32 %v3007, %v3009
        %v3011 = vadd.f32 %v3007, %v3010
        %vm3012 = vweird.f32 %v2551
        %vm3013 = vweird.f32 %v3007
        %vm3014 = vmor %vm3012, %vm3013
        %v3015 = vsel %vm3014, %v3007, %v3011
        %v3016 = vand.u32 2147483647, %v2551
        %vm3017 = vcmp.eq.f32.partialorder %v3016, 8.507059e+37
        %v3018 = vand.u32 %v2551, 2147483648
        %v3019 = vor.u32 1.1754944e-38, %v3018
        %v3020 = vsel %vm3017, %v3019, %v3015
        %v3021 = vmul.f32 1.0, %v3020
        %v3022 = vrcp.pop %v2552
        %v3023 = vmul.f32 %v2552, %v3022
        %v3024 = vsub.f32 1.0, %v3023
        %v3025 = vmul.f32 %v3022, %v3024
        %v3026 = vadd.f32 %v3022, %v3025
        %vm3027 = vweird.f32 %v2552
        %vm3028 = vweird.f32 %v3022
        %vm3029 = vmor %vm3027, %vm3028
        %v3030 = vsel %vm3029, %v3022, %v3026
        %v3031 = vand.u32 2147483647, %v2552
        %vm3032 = vcmp.eq.f32.partialorder %v3031, 8.507059e+37
        %v3033 = vand.u32 %v2552, 2147483648
        %v3034 = vor.u32 1.1754944e-38, %v3033
        %v3035 = vsel %vm3032, %v3034, %v3030
        %v3036 = vmul.f32 1.0, %v3035
        %v3037 = vrcp.pop %v2553
        %v3038 = vmul.f32 %v2553, %v3037
        %v3039 = vsub.f32 1.0, %v3038
        %v3040 = vmul.f32 %v3037, %v3039
        %v3041 = vadd.f32 %v3037, %v3040
        %vm3042 = vweird.f32 %v2553
        %vm3043 = vweird.f32 %v3037
        %vm3044 = vmor %vm3042, %vm3043
        %v3045 = vsel %vm3044, %v3037, %v3041
        %v3046 = vand.u32 2147483647, %v2553
        %vm3047 = vcmp.eq.f32.partialorder %v3046, 8.507059e+37
        %v3048 = vand.u32 %v2553, 2147483648
        %v3049 = vor.u32 1.1754944e-38, %v3048
        %v3050 = vsel %vm3047, %v3049, %v3045
        %v3051 = vmul.f32 1.0, %v3050
        %v3052 = vrcp.pop %v2554
        %v3053 = vmul.f32 %v2554, %v3052
        %v3054 = vsub.f32 1.0, %v3053
        %v3055 = vmul.f32 %v3052, %v3054
        %v3056 = vadd.f32 %v3052, %v3055
        %vm3057 = vweird.f32 %v2554
        %vm3058 = vweird.f32 %v3052
        %vm3059 = vmor %vm3057, %vm3058
        %v3060 = vsel %vm3059, %v3052, %v3056
        %v3061 = vand.u32 2147483647, %v2554
        %vm3062 = vcmp.eq.f32.partialorder %v3061, 8.507059e+37
        %v3063 = vand.u32 %v2554, 2147483648
        %v3064 = vor.u32 1.1754944e-38, %v3063
        %v3065 = vsel %vm3062, %v3064, %v3060
        %v3066 = vmul.f32 1.0, %v3065
        %v3067 = vrcp.pop %v2555
        %v3068 = vmul.f32 %v2555, %v3067
        %v3069 = vsub.f32 1.0, %v3068
        %v3070 = vmul.f32 %v3067, %v3069
        %v3071 = vadd.f32 %v3067, %v3070
        %vm3072 = vweird.f32 %v2555
        %vm3073 = vweird.f32 %v3067
        %vm3074 = vmor %vm3072, %vm3073
        %v3075 = vsel %vm3074, %v3067, %v3071
        %v3076 = vand.u32 2147483647, %v2555
        %vm3077 = vcmp.eq.f32.partialorder %v3076, 8.507059e+37
        %v3078 = vand.u32 %v2555, 2147483648
        %v3079 = vor.u32 1.1754944e-38, %v3078
        %v3080 = vsel %vm3077, %v3079, %v3075
        %v3081 = vmul.f32 1.0, %v3080
        %v3082 = vrcp.pop %v2556
        %v3083 = vmul.f32 %v2556, %v3082
        %v3084 = vsub.f32 1.0, %v3083
        %v3085 = vmul.f32 %v3082, %v3084
        %v3086 = vadd.f32 %v3082, %v3085
        %vm3087 = vweird.f32 %v2556
        %vm3088 = vweird.f32 %v3082
        %vm3089 = vmor %vm3087, %vm3088
        %v3090 = vsel %vm3089, %v3082, %v3086
        %v3091 = vand.u32 2147483647, %v2556
        %vm3092 = vcmp.eq.f32.partialorder %v3091, 8.507059e+37
        %v3093 = vand.u32 %v2556, 2147483648
        %v3094 = vor.u32 1.1754944e-38, %v3093
        %v3095 = vsel %vm3092, %v3094, %v3090
        %v3096 = vmul.f32 1.0, %v3095
        %v3097 = vrcp.pop %v2557
        %v3098 = vmul.f32 %v2557, %v3097
        %v3099 = vsub.f32 1.0, %v3098
        %v3100 = vmul.f32 %v3097, %v3099
        %v3101 = vadd.f32 %v3097, %v3100
        %vm3102 = vweird.f32 %v2557
        %vm3103 = vweird.f32 %v3097
        %vm3104 = vmor %vm3102, %vm3103
        %v3105 = vsel %vm3104, %v3097, %v3101
        %v3106 = vand.u32 2147483647, %v2557
        %vm3107 = vcmp.eq.f32.partialorder %v3106, 8.507059e+37
        %v3108 = vand.u32 %v2557, 2147483648
        %v3109 = vor.u32 1.1754944e-38, %v3108
        %v3110 = vsel %vm3107, %v3109, %v3105
        %v3111 = vmul.f32 1.0, %v3110
        %v3112 = vrcp.pop %v2558
        %v3113 = vmul.f32 %v2558, %v3112
        %v3114 = vsub.f32 1.0, %v3113
        %v3115 = vmul.f32 %v3112, %v3114
        %v3116 = vadd.f32 %v3112, %v3115
        %vm3117 = vweird.f32 %v2558
        %vm3118 = vweird.f32 %v3112
        %vm3119 = vmor %vm3117, %vm3118
        %v3120 = vsel %vm3119, %v3112, %v3116
        %v3121 = vand.u32 2147483647, %v2558
        %vm3122 = vcmp.eq.f32.partialorder %v3121, 8.507059e+37
        %v3123 = vand.u32 %v2558, 2147483648
        %v3124 = vor.u32 1.1754944e-38, %v3123
        %v3125 = vsel %vm3122, %v3124, %v3120
        %v3126 = vmul.f32 1.0, %v3125
        %v3127 = vrcp.pop %v2559
        %v3128 = vmul.f32 %v2559, %v3127
        %v3129 = vsub.f32 1.0, %v3128
        %v3130 = vmul.f32 %v3127, %v3129
        %v3131 = vadd.f32 %v3127, %v3130
        %vm3132 = vweird.f32 %v2559
        %vm3133 = vweird.f32 %v3127
        %vm3134 = vmor %vm3132, %vm3133
        %v3135 = vsel %vm3134, %v3127, %v3131
        %v3136 = vand.u32 2147483647, %v2559
        %vm3137 = vcmp.eq.f32.partialorder %v3136, 8.507059e+37
        %v3138 = vand.u32 %v2559, 2147483648
        %v3139 = vor.u32 1.1754944e-38, %v3138
        %v3140 = vsel %vm3137, %v3139, %v3135
        %v3141 = vmul.f32 1.0, %v3140
        %v3142 = vrcp.pop %v2560
        %v3143 = vmul.f32 %v2560, %v3142
        %v3144 = vsub.f32 1.0, %v3143
        %v3145 = vmul.f32 %v3142, %v3144
        %v3146 = vadd.f32 %v3142, %v3145
        %vm3147 = vweird.f32 %v2560
        %vm3148 = vweird.f32 %v3142
        %vm3149 = vmor %vm3147, %vm3148
        %v3150 = vsel %vm3149, %v3142, %v3146
        %v3151 = vand.u32 2147483647, %v2560
        %vm3152 = vcmp.eq.f32.partialorder %v3151, 8.507059e+37
        %v3153 = vand.u32 %v2560, 2147483648
        %v3154 = vor.u32 1.1754944e-38, %v3153
        %v3155 = vsel %vm3152, %v3154, %v3150
        %v3156 = vmul.f32 1.0, %v3155
        %v3157 = vrcp.pop %v2561
        %v3158 = vmul.f32 %v2561, %v3157
        %v3159 = vsub.f32 1.0, %v3158
        %v3160 = vmul.f32 %v3157, %v3159
        %v3161 = vadd.f32 %v3157, %v3160
        %vm3162 = vweird.f32 %v2561
        %vm3163 = vweird.f32 %v3157
        %vm3164 = vmor %vm3162, %vm3163
        %v3165 = vsel %vm3164, %v3157, %v3161
        %v3166 = vand.u32 2147483647, %v2561
        %vm3167 = vcmp.eq.f32.partialorder %v3166, 8.507059e+37
        %v3168 = vand.u32 %v2561, 2147483648
        %v3169 = vor.u32 1.1754944e-38, %v3168
        %v3170 = vsel %vm3167, %v3169, %v3165
        %v3171 = vmul.f32 1.0, %v3170
        %v3172 = vrcp.pop %v2562
        %v3173 = vmul.f32 %v2562, %v3172
        %v3174 = vsub.f32 1.0, %v3173
        %v3175 = vmul.f32 %v3172, %v3174
        %v3176 = vadd.f32 %v3172, %v3175
        %vm3177 = vweird.f32 %v2562
        %vm3178 = vweird.f32 %v3172
        %vm3179 = vmor %vm3177, %vm3178
        %v3180 = vsel %vm3179, %v3172, %v3176
        %v3181 = vand.u32 2147483647, %v2562
        %vm3182 = vcmp.eq.f32.partialorder %v3181, 8.507059e+37
        %v3183 = vand.u32 %v2562, 2147483648
        %v3184 = vor.u32 1.1754944e-38, %v3183
        %v3185 = vsel %vm3182, %v3184, %v3180
        %v3186 = vmul.f32 1.0, %v3185
        %v3187 = vrcp.pop %v2563
        %v3188 = vmul.f32 %v2563, %v3187
        %v3189 = vsub.f32 1.0, %v3188
        %v3190 = vmul.f32 %v3187, %v3189
        %v3191 = vadd.f32 %v3187, %v3190
        %vm3192 = vweird.f32 %v2563
        %vm3193 = vweird.f32 %v3187
        %vm3194 = vmor %vm3192, %vm3193
        %v3195 = vsel %vm3194, %v3187, %v3191
        %v3196 = vand.u32 2147483647, %v2563
        %vm3197 = vcmp.eq.f32.partialorder %v3196, 8.507059e+37
        %v3198 = vand.u32 %v2563, 2147483648
        %v3199 = vor.u32 1.1754944e-38, %v3198
        %v3200 = vsel %vm3197, %v3199, %v3195
        %v3201 = vmul.f32 1.0, %v3200
        %v3202 = vrcp.pop %v2564
        %v3203 = vmul.f32 %v2564, %v3202
        %v3204 = vsub.f32 1.0, %v3203
        %v3205 = vmul.f32 %v3202, %v3204
        %v3206 = vadd.f32 %v3202, %v3205
        %vm3207 = vweird.f32 %v2564
        %vm3208 = vweird.f32 %v3202
        %vm3209 = vmor %vm3207, %vm3208
        %v3210 = vsel %vm3209, %v3202, %v3206
        %v3211 = vand.u32 2147483647, %v2564
        %vm3212 = vcmp.eq.f32.partialorder %v3211, 8.507059e+37
        %v3213 = vand.u32 %v2564, 2147483648
        %v3214 = vor.u32 1.1754944e-38, %v3213
        %v3215 = vsel %vm3212, %v3214, %v3210
        %v3216 = vmul.f32 1.0, %v3215
        %v3217 = vrcp.pop %v2565
        %v3218 = vmul.f32 %v2565, %v3217
        %v3219 = vsub.f32 1.0, %v3218
        %v3220 = vmul.f32 %v3217, %v3219
        %v3221 = vadd.f32 %v3217, %v3220
        %vm3222 = vweird.f32 %v2565
        %vm3223 = vweird.f32 %v3217
        %vm3224 = vmor %vm3222, %vm3223
        %v3225 = vsel %vm3224, %v3217, %v3221
        %v3226 = vand.u32 2147483647, %v2565
        %vm3227 = vcmp.eq.f32.partialorder %v3226, 8.507059e+37
        %v3228 = vand.u32 %v2565, 2147483648
        %v3229 = vor.u32 1.1754944e-38, %v3228
        %v3230 = vsel %vm3227, %v3229, %v3225
        %v3231 = vmul.f32 1.0, %v3230
        %v3232 = vrcp.pop %v2566
        %v3233 = vmul.f32 %v2566, %v3232
        %v3234 = vsub.f32 1.0, %v3233
        %v3235 = vmul.f32 %v3232, %v3234
        %v3236 = vadd.f32 %v3232, %v3235
        %vm3237 = vweird.f32 %v2566
        %vm3238 = vweird.f32 %v3232
        %vm3239 = vmor %vm3237, %vm3238
        %v3240 = vsel %vm3239, %v3232, %v3236
        %v3241 = vand.u32 2147483647, %v2566
        %vm3242 = vcmp.eq.f32.partialorder %v3241, 8.507059e+37
        %v3243 = vand.u32 %v2566, 2147483648
        %v3244 = vor.u32 1.1754944e-38, %v3243
        %v3245 = vsel %vm3242, %v3244, %v3240
        %v3246 = vmul.f32 1.0, %v3245
        %v3247 = vrcp.pop %v2567
        %v3248 = vmul.f32 %v2567, %v3247
        %v3249 = vsub.f32 1.0, %v3248
        %v3250 = vmul.f32 %v3247, %v3249
        %v3251 = vadd.f32 %v3247, %v3250
        %vm3252 = vweird.f32 %v2567
        %vm3253 = vweird.f32 %v3247
        %vm3254 = vmor %vm3252, %vm3253
        %v3255 = vsel %vm3254, %v3247, %v3251
        %v3256 = vand.u32 2147483647, %v2567
        %vm3257 = vcmp.eq.f32.partialorder %v3256, 8.507059e+37
        %v3258 = vand.u32 %v2567, 2147483648
        %v3259 = vor.u32 1.1754944e-38, %v3258
        %v3260 = vsel %vm3257, %v3259, %v3255
        %v3261 = vmul.f32 1.0, %v3260
        %v3262 = vrcp.pop %v2568
        %v3263 = vmul.f32 %v2568, %v3262
        %v3264 = vsub.f32 1.0, %v3263
        %v3265 = vmul.f32 %v3262, %v3264
        %v3266 = vadd.f32 %v3262, %v3265
        %vm3267 = vweird.f32 %v2568
        %vm3268 = vweird.f32 %v3262
        %vm3269 = vmor %vm3267, %vm3268
        %v3270 = vsel %vm3269, %v3262, %v3266
        %v3271 = vand.u32 2147483647, %v2568
        %vm3272 = vcmp.eq.f32.partialorder %v3271, 8.507059e+37
        %v3273 = vand.u32 %v2568, 2147483648
        %v3274 = vor.u32 1.1754944e-38, %v3273
        %v3275 = vsel %vm3272, %v3274, %v3270
        %v3276 = vmul.f32 1.0, %v3275
        %v3277 = vrcp.pop %v2569
        %v3278 = vmul.f32 %v2569, %v3277
        %v3279 = vsub.f32 1.0, %v3278
        %v3280 = vmul.f32 %v3277, %v3279
        %v3281 = vadd.f32 %v3277, %v3280
        %vm3282 = vweird.f32 %v2569
        %vm3283 = vweird.f32 %v3277
        %vm3284 = vmor %vm3282, %vm3283
        %v3285 = vsel %vm3284, %v3277, %v3281
        %v3286 = vand.u32 2147483647, %v2569
        %vm3287 = vcmp.eq.f32.partialorder %v3286, 8.507059e+37
        %v3288 = vand.u32 %v2569, 2147483648
        %v3289 = vor.u32 1.1754944e-38, %v3288
        %v3290 = vsel %vm3287, %v3289, %v3285
        %v3291 = vmul.f32 1.0, %v3290
        %v3292 = vrcp.pop %v2570
        %v3293 = vmul.f32 %v2570, %v3292
        %v3294 = vsub.f32 1.0, %v3293
        %v3295 = vmul.f32 %v3292, %v3294
        %v3296 = vadd.f32 %v3292, %v3295
        %vm3297 = vweird.f32 %v2570
        %vm3298 = vweird.f32 %v3292
        %vm3299 = vmor %vm3297, %vm3298
        %v3300 = vsel %vm3299, %v3292, %v3296
        %v3301 = vand.u32 2147483647, %v2570
        %vm3302 = vcmp.eq.f32.partialorder %v3301, 8.507059e+37
        %v3303 = vand.u32 %v2570, 2147483648
        %v3304 = vor.u32 1.1754944e-38, %v3303
        %v3305 = vsel %vm3302, %v3304, %v3300
        %v3306 = vmul.f32 1.0, %v3305
        %v3307 = vrcp.pop %v2571
        %v3308 = vmul.f32 %v2571, %v3307
        %v3309 = vsub.f32 1.0, %v3308
        %v3310 = vmul.f32 %v3307, %v3309
        %v3311 = vadd.f32 %v3307, %v3310
        %vm3312 = vweird.f32 %v2571
        %vm3313 = vweird.f32 %v3307
        %vm3314 = vmor %vm3312, %vm3313
        %v3315 = vsel %vm3314, %v3307, %v3311
        %v3316 = vand.u32 2147483647, %v2571
        %vm3317 = vcmp.eq.f32.partialorder %v3316, 8.507059e+37
        %v3318 = vand.u32 %v2571, 2147483648
        %v3319 = vor.u32 1.1754944e-38, %v3318
        %v3320 = vsel %vm3317, %v3319, %v3315
        %v3321 = vmul.f32 1.0, %v3320
        %v3322 = vrcp.pop %v2572
        %v3323 = vmul.f32 %v2572, %v3322
        %v3324 = vsub.f32 1.0, %v3323
        %v3325 = vmul.f32 %v3322, %v3324
        %v3326 = vadd.f32 %v3322, %v3325
        %vm3327 = vweird.f32 %v2572
        %vm3328 = vweird.f32 %v3322
        %vm3329 = vmor %vm3327, %vm3328
        %v3330 = vsel %vm3329, %v3322, %v3326
        %v3331 = vand.u32 2147483647, %v2572
        %vm3332 = vcmp.eq.f32.partialorder %v3331, 8.507059e+37
        %v3333 = vand.u32 %v2572, 2147483648
        %v3334 = vor.u32 1.1754944e-38, %v3333
        %v3335 = vsel %vm3332, %v3334, %v3330
        %v3336 = vmul.f32 1.0, %v3335
        %v3337 = vrcp.pop %v2573
        %v3338 = vmul.f32 %v2573, %v3337
        %v3339 = vsub.f32 1.0, %v3338
        %v3340 = vmul.f32 %v3337, %v3339
        %v3341 = vadd.f32 %v3337, %v3340
        %vm3342 = vweird.f32 %v2573
        %vm3343 = vweird.f32 %v3337
        %vm3344 = vmor %vm3342, %vm3343
        %v3345 = vsel %vm3344, %v3337, %v3341
        %v3346 = vand.u32 2147483647, %v2573
        %vm3347 = vcmp.eq.f32.partialorder %v3346, 8.507059e+37
        %v3348 = vand.u32 %v2573, 2147483648
        %v3349 = vor.u32 1.1754944e-38, %v3348
        %v3350 = vsel %vm3347, %v3349, %v3345
        %v3351 = vmul.f32 1.0, %v3350
        %v3352 = vrcp.pop %v2574
        %v3353 = vmul.f32 %v2574, %v3352
        %v3354 = vsub.f32 1.0, %v3353
        %v3355 = vmul.f32 %v3352, %v3354
        %v3356 = vadd.f32 %v3352, %v3355
        %vm3357 = vweird.f32 %v2574
        %vm3358 = vweird.f32 %v3352
        %vm3359 = vmor %vm3357, %vm3358
        %v3360 = vsel %vm3359, %v3352, %v3356
        %v3361 = vand.u32 2147483647, %v2574
        %vm3362 = vcmp.eq.f32.partialorder %v3361, 8.507059e+37
        %v3363 = vand.u32 %v2574, 2147483648
        %v3364 = vor.u32 1.1754944e-38, %v3363
        %v3365 = vsel %vm3362, %v3364, %v3360
        %v3366 = vmul.f32 1.0, %v3365
        %v3367 = vrcp.pop %v2575
        %v3368 = vmul.f32 %v2575, %v3367
        %v3369 = vsub.f32 1.0, %v3368
        %v3370 = vmul.f32 %v3367, %v3369
        %v3371 = vadd.f32 %v3367, %v3370
        %vm3372 = vweird.f32 %v2575
        %vm3373 = vweird.f32 %v3367
        %vm3374 = vmor %vm3372, %vm3373
        %v3375 = vsel %vm3374, %v3367, %v3371
        %v3376 = vand.u32 2147483647, %v2575
        %vm3377 = vcmp.eq.f32.partialorder %v3376, 8.507059e+37
        %v3378 = vand.u32 %v2575, 2147483648
        %v3379 = vor.u32 1.1754944e-38, %v3378
        %v3380 = vsel %vm3377, %v3379, %v3375
        %v3381 = vmul.f32 1.0, %v3380
        %v3382 = vrcp.pop %v2576
        %v3383 = vmul.f32 %v2576, %v3382
        %v3384 = vsub.f32 1.0, %v3383
        %v3385 = vmul.f32 %v3382, %v3384
        %v3386 = vadd.f32 %v3382, %v3385
        %vm3387 = vweird.f32 %v2576
        %vm3388 = vweird.f32 %v3382
        %vm3389 = vmor %vm3387, %vm3388
        %v3390 = vsel %vm3389, %v3382, %v3386
        %v3391 = vand.u32 2147483647, %v2576
        %vm3392 = vcmp.eq.f32.partialorder %v3391, 8.507059e+37
        %v3393 = vand.u32 %v2576, 2147483648
        %v3394 = vor.u32 1.1754944e-38, %v3393
        %v3395 = vsel %vm3392, %v3394, %v3390
        %v3396 = vmul.f32 1.0, %v3395
        %v3397 = vrcp.pop %v2577
        %v3398 = vmul.f32 %v2577, %v3397
        %v3399 = vsub.f32 1.0, %v3398
        %v3400 = vmul.f32 %v3397, %v3399
        %v3401 = vadd.f32 %v3397, %v3400
        %vm3402 = vweird.f32 %v2577
        %vm3403 = vweird.f32 %v3397
        %vm3404 = vmor %vm3402, %vm3403
        %v3405 = vsel %vm3404, %v3397, %v3401
        %v3406 = vand.u32 2147483647, %v2577
        %vm3407 = vcmp.eq.f32.partialorder %v3406, 8.507059e+37
        %v3408 = vand.u32 %v2577, 2147483648
        %v3409 = vor.u32 1.1754944e-38, %v3408
        %v3410 = vsel %vm3407, %v3409, %v3405
        %v3411 = vmul.f32 1.0, %v3410
        %v3412 = vrcp.pop %v2578
        %v3413 = vmul.f32 %v2578, %v3412
        %v3414 = vsub.f32 1.0, %v3413
        %v3415 = vmul.f32 %v3412, %v3414
        %v3416 = vadd.f32 %v3412, %v3415
        %vm3417 = vweird.f32 %v2578
        %vm3418 = vweird.f32 %v3412
        %vm3419 = vmor %vm3417, %vm3418
        %v3420 = vsel %vm3419, %v3412, %v3416
        %v3421 = vand.u32 2147483647, %v2578
        %vm3422 = vcmp.eq.f32.partialorder %v3421, 8.507059e+37
        %v3423 = vand.u32 %v2578, 2147483648
        %v3424 = vor.u32 1.1754944e-38, %v3423
        %v3425 = vsel %vm3422, %v3424, %v3420
        %v3426 = vmul.f32 1.0, %v3425
        %v3427 = vrcp.pop %v2579
        %v3428 = vmul.f32 %v2579, %v3427
        %v3429 = vsub.f32 1.0, %v3428
        %v3430 = vmul.f32 %v3427, %v3429
        %v3431 = vadd.f32 %v3427, %v3430
        %vm3432 = vweird.f32 %v2579
        %vm3433 = vweird.f32 %v3427
        %vm3434 = vmor %vm3432, %vm3433
        %v3435 = vsel %vm3434, %v3427, %v3431
        %v3436 = vand.u32 2147483647, %v2579
        %vm3437 = vcmp.eq.f32.partialorder %v3436, 8.507059e+37
        %v3438 = vand.u32 %v2579, 2147483648
        %v3439 = vor.u32 1.1754944e-38, %v3438
        %v3440 = vsel %vm3437, %v3439, %v3435
        %v3441 = vmul.f32 1.0, %v3440
        %v3442 = vrcp.pop %v2580
        %v3443 = vmul.f32 %v2580, %v3442
        %v3444 = vsub.f32 1.0, %v3443
        %v3445 = vmul.f32 %v3442, %v3444
        %v3446 = vadd.f32 %v3442, %v3445
        %vm3447 = vweird.f32 %v2580
        %vm3448 = vweird.f32 %v3442
        %vm3449 = vmor %vm3447, %vm3448
        %v3450 = vsel %vm3449, %v3442, %v3446
        %v3451 = vand.u32 2147483647, %v2580
        %vm3452 = vcmp.eq.f32.partialorder %v3451, 8.507059e+37
        %v3453 = vand.u32 %v2580, 2147483648
        %v3454 = vor.u32 1.1754944e-38, %v3453
        %v3455 = vsel %vm3452, %v3454, %v3450
        %v3456 = vmul.f32 1.0, %v3455
        %v3457 = vrcp.pop %v2581
        %v3458 = vmul.f32 %v2581, %v3457
        %v3459 = vsub.f32 1.0, %v3458
        %v3460 = vmul.f32 %v3457, %v3459
        %v3461 = vadd.f32 %v3457, %v3460
        %vm3462 = vweird.f32 %v2581
        %vm3463 = vweird.f32 %v3457
        %vm3464 = vmor %vm3462, %vm3463
        %v3465 = vsel %vm3464, %v3457, %v3461
        %v3466 = vand.u32 2147483647, %v2581
        %vm3467 = vcmp.eq.f32.partialorder %v3466, 8.507059e+37
        %v3468 = vand.u32 %v2581, 2147483648
        %v3469 = vor.u32 1.1754944e-38, %v3468
        %v3470 = vsel %vm3467, %v3469, %v3465
        %v3471 = vmul.f32 1.0, %v3470
        %v3472 = vrcp.pop %v2582
        %v3473 = vmul.f32 %v2582, %v3472
        %v3474 = vsub.f32 1.0, %v3473
        %v3475 = vmul.f32 %v3472, %v3474
        %v3476 = vadd.f32 %v3472, %v3475
        %vm3477 = vweird.f32 %v2582
        %vm3478 = vweird.f32 %v3472
        %vm3479 = vmor %vm3477, %vm3478
        %v3480 = vsel %vm3479, %v3472, %v3476
        %v3481 = vand.u32 2147483647, %v2582
        %vm3482 = vcmp.eq.f32.partialorder %v3481, 8.507059e+37
        %v3483 = vand.u32 %v2582, 2147483648
        %v3484 = vor.u32 1.1754944e-38, %v3483
        %v3485 = vsel %vm3482, %v3484, %v3480
        %v3486 = vmul.f32 1.0, %v3485
        %v3487 = vrcp.pop %v2583
        %v3488 = vmul.f32 %v2583, %v3487
        %v3489 = vsub.f32 1.0, %v3488
        %v3490 = vmul.f32 %v3487, %v3489
        %v3491 = vadd.f32 %v3487, %v3490
        %vm3492 = vweird.f32 %v2583
        %vm3493 = vweird.f32 %v3487
        %vm3494 = vmor %vm3492, %vm3493
        %v3495 = vsel %vm3494, %v3487, %v3491
        %v3496 = vand.u32 2147483647, %v2583
        %vm3497 = vcmp.eq.f32.partialorder %v3496, 8.507059e+37
        %v3498 = vand.u32 %v2583, 2147483648
        %v3499 = vor.u32 1.1754944e-38, %v3498
        %v3500 = vsel %vm3497, %v3499, %v3495
        %v3501 = vmul.f32 1.0, %v3500
        %v3502 = vrcp.pop %v2584
        %v3503 = vmul.f32 %v2584, %v3502
        %v3504 = vsub.f32 1.0, %v3503
        %v3505 = vmul.f32 %v3502, %v3504
        %v3506 = vadd.f32 %v3502, %v3505
        %vm3507 = vweird.f32 %v2584
        %vm3508 = vweird.f32 %v3502
        %vm3509 = vmor %vm3507, %vm3508
        %v3510 = vsel %vm3509, %v3502, %v3506
        %v3511 = vand.u32 2147483647, %v2584
        %vm3512 = vcmp.eq.f32.partialorder %v3511, 8.507059e+37
        %v3513 = vand.u32 %v2584, 2147483648
        %v3514 = vor.u32 1.1754944e-38, %v3513
        %v3515 = vsel %vm3512, %v3514, %v3510
        %v3516 = vmul.f32 1.0, %v3515
        %v3517 = vrcp.pop %v2585
        %v3518 = vmul.f32 %v2585, %v3517
        %v3519 = vsub.f32 1.0, %v3518
        %v3520 = vmul.f32 %v3517, %v3519
        %v3521 = vadd.f32 %v3517, %v3520
        %vm3522 = vweird.f32 %v2585
        %vm3523 = vweird.f32 %v3517
        %vm3524 = vmor %vm3522, %vm3523
        %v3525 = vsel %vm3524, %v3517, %v3521
        %v3526 = vand.u32 2147483647, %v2585
        %vm3527 = vcmp.eq.f32.partialorder %v3526, 8.507059e+37
        %v3528 = vand.u32 %v2585, 2147483648
        %v3529 = vor.u32 1.1754944e-38, %v3528
        %v3530 = vsel %vm3527, %v3529, %v3525
        %v3531 = vmul.f32 1.0, %v3530
        %v3532 = vrcp.pop %v2586
        %v3533 = vmul.f32 %v2586, %v3532
        %v3534 = vsub.f32 1.0, %v3533
        %v3535 = vmul.f32 %v3532, %v3534
        %v3536 = vadd.f32 %v3532, %v3535
        %vm3537 = vweird.f32 %v2586
        %vm3538 = vweird.f32 %v3532
        %vm3539 = vmor %vm3537, %vm3538
        %v3540 = vsel %vm3539, %v3532, %v3536
        %v3541 = vand.u32 2147483647, %v2586
        %vm3542 = vcmp.eq.f32.partialorder %v3541, 8.507059e+37
        %v3543 = vand.u32 %v2586, 2147483648
        %v3544 = vor.u32 1.1754944e-38, %v3543
        %v3545 = vsel %vm3542, %v3544, %v3540
        %v3546 = vmul.f32 1.0, %v3545
        %v3547 = vmul.f32 %v2172, %v2601
        %v3548 = vmul.f32 %v2174, %v2616
        %v3549 = vmul.f32 %v2177, %v2631
        %v3550 = vmul.f32 %v2179, %v2646
        %v3551 = vmul.f32 %v2182, %v2661
        %v3552 = vmul.f32 %v2184, %v2676
        %v3553 = vmul.f32 %v2187, %v2691
        %v3554 = vmul.f32 %v2189, %v2706
        %v3555 = vmul.f32 %v2192, %v2721
        %v3556 = vmul.f32 %v2194, %v2736
        %v3557 = vmul.f32 %v2197, %v2751
        %v3558 = vmul.f32 %v2199, %v2766
        %v3559 = vmul.f32 %v2202, %v2781
        %v3560 = vmul.f32 %v2204, %v2796
        %v3561 = vmul.f32 %v2207, %v2811
        %v3562 = vmul.f32 %v2209, %v2826
        %v3563 = vmul.f32 %v2212, %v2841
        %v3564 = vmul.f32 %v2214, %v2856
        %v3565 = vmul.f32 %v2217, %v2871
        %v3566 = vmul.f32 %v2219, %v2886
        %v3567 = vmul.f32 %v2222, %v2901
        %v3568 = vmul.f32 %v2224, %v2916
        %v3569 = vmul.f32 %v2227, %v2931
        %v3570 = vmul.f32 %v2229, %v2946
        %v3571 = vmul.f32 %v2232, %v2961
        %v3572 = vmul.f32 %v2234, %v2976
        %v3573 = vmul.f32 %v2237, %v2991
        %v3574 = vmul.f32 %v2239, %v3006
        %v3575 = vmul.f32 %v2242, %v3021
        %v3576 = vmul.f32 %v2244, %v3036
        %v3577 = vmul.f32 %v2247, %v3051
        %v3578 = vmul.f32 %v2249, %v3066
        %v3579 = vmul.f32 %v2252, %v3081
        %v3580 = vmul.f32 %v2254, %v3096
        %v3581 = vmul.f32 %v2257, %v3111
        %v3582 = vmul.f32 %v2259, %v3126
        %v3583 = vmul.f32 %v2262, %v3141
        %v3584 = vmul.f32 %v2264, %v3156
        %v3585 = vmul.f32 %v2267, %v3171
        %v3586 = vmul.f32 %v2269, %v3186
        %v3587 = vmul.f32 %v2272, %v3201
        %v3588 = vmul.f32 %v2274, %v3216
        %v3589 = vmul.f32 %v2277, %v3231
        %v3590 = vmul.f32 %v2279, %v3246
        %v3591 = vmul.f32 %v2282, %v3261
        %v3592 = vmul.f32 %v2284, %v3276
        %v3593 = vmul.f32 %v2287, %v3291
        %v3594 = vmul.f32 %v2289, %v3306
        %v3595 = vmul.f32 %v2292, %v3321
        %v3596 = vmul.f32 %v2294, %v3336
        %v3597 = vmul.f32 %v2297, %v3351
        %v3598 = vmul.f32 %v2299, %v3366
        %v3599 = vmul.f32 %v2302, %v3381
        %v3600 = vmul.f32 %v2304, %v3396
        %v3601 = vmul.f32 %v2307, %v3411
        %v3602 = vmul.f32 %v2309, %v3426
        %v3603 = vmul.f32 %v2312, %v3441
        %v3604 = vmul.f32 %v2314, %v3456
        %v3605 = vmul.f32 %v2317, %v3471
        %v3606 = vmul.f32 %v2319, %v3486
        %v3607 = vmul.f32 %v2322, %v3501
        %v3608 = vmul.f32 %v2324, %v3516
        %v3609 = vmul.f32 %v2327, %v3531
        %v3610 = vmul.f32 %v2329, %v3546
        %v3611 = vpack.c.bf16 %v3548, %v3547
        %v3612 = vpack.c.bf16 %v3550, %v3549
        %v3613 = vpack.c.bf16 %v3552, %v3551
        %v3614 = vpack.c.bf16 %v3554, %v3553
        %v3615 = vpack.c.bf16 %v3556, %v3555
        %v3616 = vpack.c.bf16 %v3558, %v3557
        %v3617 = vpack.c.bf16 %v3560, %v3559
        %v3618 = vpack.c.bf16 %v3562, %v3561
        %v3619 = vpack.c.bf16 %v3564, %v3563
        %v3620 = vpack.c.bf16 %v3566, %v3565
        %v3621 = vpack.c.bf16 %v3568, %v3567
        %v3622 = vpack.c.bf16 %v3570, %v3569
        %v3623 = vpack.c.bf16 %v3572, %v3571
        %v3624 = vpack.c.bf16 %v3574, %v3573
        %v3625 = vpack.c.bf16 %v3576, %v3575
        %v3626 = vpack.c.bf16 %v3578, %v3577
        %v3627 = vpack.c.bf16 %v3580, %v3579
        %v3628 = vpack.c.bf16 %v3582, %v3581
        %v3629 = vpack.c.bf16 %v3584, %v3583
        %v3630 = vpack.c.bf16 %v3586, %v3585
        %v3631 = vpack.c.bf16 %v3588, %v3587
        %v3632 = vpack.c.bf16 %v3590, %v3589
        %v3633 = vpack.c.bf16 %v3592, %v3591
        %v3634 = vpack.c.bf16 %v3594, %v3593
        %v3635 = vpack.c.bf16 %v3596, %v3595
        %v3636 = vpack.c.bf16 %v3598, %v3597
        %v3637 = vpack.c.bf16 %v3600, %v3599
        %v3638 = vpack.c.bf16 %v3602, %v3601
        %v3639 = vpack.c.bf16 %v3604, %v3603
        %v3640 = vpack.c.bf16 %v3606, %v3605
        %v3641 = vpack.c.bf16 %v3608, %v3607
        %v3642 = vpack.c.bf16 %v3610, %v3609
        %v3643 = vld [vmem:[%s5] sm:$0xf]
        %v3644 = vld [vmem:[%s5 + $0x4] sm:$0xf]
        %v3645 = vld [vmem:[%s5 + $0x8] sm:$0xf]
        %v3646 = vld [vmem:[%s5 + $0xc] sm:$0xf]
        %v3647 = vld [vmem:[%s5 + $0x10] sm:$0xf]
        %v3648 = vld [vmem:[%s5 + $0x14] sm:$0xf]
        %v3649 = vld [vmem:[%s5 + $0x18] sm:$0xf]
        %v3650 = vld [vmem:[%s5 + $0x1c] sm:$0xf]
        %v3651 = vld [vmem:[%s6] sm:$0x1]
        %v3653 = vperm.slane %v3651, 0
        %v3663 = vunpack.c.l.b16 %v3643
        %v3664 = vunpack.c.l.b16 %v3644
        %v3665 = vunpack.c.l.b16 %v3645
        %v3666 = vunpack.c.l.b16 %v3646
        %v3667 = vunpack.c.l.b16 %v3647
        %v3668 = vunpack.c.l.b16 %v3648
        %v3669 = vunpack.c.l.b16 %v3649
        %v3670 = vunpack.c.l.b16 %v3650
        %v3671 = vpack.c.b16 %v3664, %v3663
        %v3672 = vpack.c.b16 %v3666, %v3665
        %v3673 = vpack.c.b16 %v3668, %v3667
        %v3674 = vpack.c.b16 %v3670, %v3669
        %v3680 = vsel %vm2065, %v3611, 0
        %v3683 = vsel %vm2065, %v3612, 0
        %v3686 = vsel %vm2065, %v3613, 0
        %v3689 = vsel %vm2065, %v3614, 0
        %v3692 = vsel %vm2065, %v3615, 0
        %v3695 = vsel %vm2065, %v3616, 0
        %v3698 = vsel %vm2065, %v3617, 0
        %v3701 = vsel %vm2065, %v3618, 0
        %v3704 = vsel %vm2065, %v3619, 0
        %v3707 = vsel %vm2065, %v3620, 0
        %v3710 = vsel %vm2065, %v3621, 0
        %v3713 = vsel %vm2065, %v3622, 0
        %v3716 = vsel %vm2065, %v3623, 0
        %v3719 = vsel %vm2065, %v3624, 0
        %v3722 = vsel %vm2065, %v3625, 0
        %v3725 = vsel %vm2065, %v3626, 0
        %v3728 = vsel %vm2065, %v3627, 0
        %v3731 = vsel %vm2065, %v3628, 0
        %v3734 = vsel %vm2065, %v3629, 0
        %v3737 = vsel %vm2065, %v3630, 0
        %v3740 = vsel %vm2065, %v3631, 0
        %v3743 = vsel %vm2065, %v3632, 0
        %v3746 = vsel %vm2065, %v3633, 0
        %v3749 = vsel %vm2065, %v3634, 0
        %v3752 = vsel %vm2065, %v3635, 0
        %v3755 = vsel %vm2065, %v3636, 0
        %v3758 = vsel %vm2065, %v3637, 0
        %v3761 = vsel %vm2065, %v3638, 0
        %v3764 = vsel %vm2065, %v3639, 0
        %v3767 = vsel %vm2065, %v3640, 0
        %v3770 = vsel %vm2065, %v3641, 0
        %v3773 = vsel %vm2065, %v3642, 0
        %3775 = vmatpush.bf16.msra.mxu0 0
        %3776 = vmatpush.bf16.msra.mxu0 0
        %3777 = vmatpush.bf16.msra.mxu0 0
        %3778 = vmatpush.bf16.msra.mxu0 0
        %3779 = vmatpush.bf16.msra.mxu0 %v3674
        %3780 = vmatpush.bf16.msra.mxu0 %v3673
        %3781 = vmatpush.bf16.msra.mxu0 %v3672
        %3782 = vmatpush.bf16.msra.mxu0 %v3671
        %3783 = vmatmul.bf16.gmra.mxu0 %v3680
        %v3784 = vpop.f32.mrf.mxu0
        %v3785 = vadd.f32 %v3653, %v3784
        %v3786 = vpop.f32.mrf.mxu0
        %v3787 = vadd.f32 %v3653, %v3786
        %3788 = vmatmul.bf16.gmra.mxu0 %v3683
        %v3789 = vpop.f32.mrf.mxu0
        %v3790 = vadd.f32 %v3653, %v3789
        %v3791 = vpop.f32.mrf.mxu0
        %v3792 = vadd.f32 %v3653, %v3791
        %3793 = vmatmul.bf16.gmra.mxu0 %v3686
        %v3794 = vpop.f32.mrf.mxu0
        %v3795 = vadd.f32 %v3653, %v3794
        %v3796 = vpop.f32.mrf.mxu0
        %v3797 = vadd.f32 %v3653, %v3796
        %3798 = vmatmul.bf16.gmra.mxu0 %v3689
        %v3799 = vpop.f32.mrf.mxu0
        %v3800 = vadd.f32 %v3653, %v3799
        %v3801 = vpop.f32.mrf.mxu0
        %v3802 = vadd.f32 %v3653, %v3801
        %3803 = vmatmul.bf16.gmra.mxu0 %v3692
        %v3804 = vpop.f32.mrf.mxu0
        %v3805 = vadd.f32 %v3653, %v3804
        %v3806 = vpop.f32.mrf.mxu0
        %v3807 = vadd.f32 %v3653, %v3806
        %3808 = vmatmul.bf16.gmra.mxu0 %v3695
        %v3809 = vpop.f32.mrf.mxu0
        %v3810 = vadd.f32 %v3653, %v3809
        %v3811 = vpop.f32.mrf.mxu0
        %v3812 = vadd.f32 %v3653, %v3811
        %3813 = vmatmul.bf16.gmra.mxu0 %v3698
        %v3814 = vpop.f32.mrf.mxu0
        %v3815 = vadd.f32 %v3653, %v3814
        %v3816 = vpop.f32.mrf.mxu0
        %v3817 = vadd.f32 %v3653, %v3816
        %3818 = vmatmul.bf16.gmra.mxu0 %v3701
        %v3819 = vpop.f32.mrf.mxu0
        %v3820 = vadd.f32 %v3653, %v3819
        %v3821 = vpop.f32.mrf.mxu0
        %v3822 = vadd.f32 %v3653, %v3821
        %3823 = vmatmul.bf16.gmra.mxu0 %v3704
        %v3824 = vpop.f32.mrf.mxu0
        %v3825 = vadd.f32 %v3653, %v3824
        %v3826 = vpop.f32.mrf.mxu0
        %v3827 = vadd.f32 %v3653, %v3826
        %3828 = vmatmul.bf16.gmra.mxu0 %v3707
        %v3829 = vpop.f32.mrf.mxu0
        %v3830 = vadd.f32 %v3653, %v3829
        %v3831 = vpop.f32.mrf.mxu0
        %v3832 = vadd.f32 %v3653, %v3831
        %3833 = vmatmul.bf16.gmra.mxu0 %v3710
        %v3834 = vpop.f32.mrf.mxu0
        %v3835 = vadd.f32 %v3653, %v3834
        %v3836 = vpop.f32.mrf.mxu0
        %v3837 = vadd.f32 %v3653, %v3836
        %3838 = vmatmul.bf16.gmra.mxu0 %v3713
        %v3839 = vpop.f32.mrf.mxu0
        %v3840 = vadd.f32 %v3653, %v3839
        %v3841 = vpop.f32.mrf.mxu0
        %v3842 = vadd.f32 %v3653, %v3841
        %3843 = vmatmul.bf16.gmra.mxu0 %v3716
        %v3844 = vpop.f32.mrf.mxu0
        %v3845 = vadd.f32 %v3653, %v3844
        %v3846 = vpop.f32.mrf.mxu0
        %v3847 = vadd.f32 %v3653, %v3846
        %3848 = vmatmul.bf16.gmra.mxu0 %v3719
        %v3849 = vpop.f32.mrf.mxu0
        %v3850 = vadd.f32 %v3653, %v3849
        %v3851 = vpop.f32.mrf.mxu0
        %v3852 = vadd.f32 %v3653, %v3851
        %3853 = vmatmul.bf16.gmra.mxu0 %v3722
        %v3854 = vpop.f32.mrf.mxu0
        %v3855 = vadd.f32 %v3653, %v3854
        %v3856 = vpop.f32.mrf.mxu0
        %v3857 = vadd.f32 %v3653, %v3856
        %3858 = vmatmul.bf16.gmra.mxu0 %v3725
        %v3859 = vpop.f32.mrf.mxu0
        %v3860 = vadd.f32 %v3653, %v3859
        %v3861 = vpop.f32.mrf.mxu0
        %v3862 = vadd.f32 %v3653, %v3861
        %3863 = vmatmul.bf16.gmra.mxu0 %v3728
        %v3864 = vpop.f32.mrf.mxu0
        %v3865 = vadd.f32 %v3653, %v3864
        %v3866 = vpop.f32.mrf.mxu0
        %v3867 = vadd.f32 %v3653, %v3866
        %3868 = vmatmul.bf16.gmra.mxu0 %v3731
        %v3869 = vpop.f32.mrf.mxu0
        %v3870 = vadd.f32 %v3653, %v3869
        %v3871 = vpop.f32.mrf.mxu0
        %v3872 = vadd.f32 %v3653, %v3871
        %3873 = vmatmul.bf16.gmra.mxu0 %v3734
        %v3874 = vpop.f32.mrf.mxu0
        %v3875 = vadd.f32 %v3653, %v3874
        %v3876 = vpop.f32.mrf.mxu0
        %v3877 = vadd.f32 %v3653, %v3876
        %3878 = vmatmul.bf16.gmra.mxu0 %v3737
        %v3879 = vpop.f32.mrf.mxu0
        %v3880 = vadd.f32 %v3653, %v3879
        %v3881 = vpop.f32.mrf.mxu0
        %v3882 = vadd.f32 %v3653, %v3881
        %3883 = vmatmul.bf16.gmra.mxu0 %v3740
        %v3884 = vpop.f32.mrf.mxu0
        %v3885 = vadd.f32 %v3653, %v3884
        %v3886 = vpop.f32.mrf.mxu0
        %v3887 = vadd.f32 %v3653, %v3886
        %3888 = vmatmul.bf16.gmra.mxu0 %v3743
        %v3889 = vpop.f32.mrf.mxu0
        %v3890 = vadd.f32 %v3653, %v3889
        %v3891 = vpop.f32.mrf.mxu0
        %v3892 = vadd.f32 %v3653, %v3891
        %3893 = vmatmul.bf16.gmra.mxu0 %v3746
        %v3894 = vpop.f32.mrf.mxu0
        %v3895 = vadd.f32 %v3653, %v3894
        %v3896 = vpop.f32.mrf.mxu0
        %v3897 = vadd.f32 %v3653, %v3896
        %3898 = vmatmul.bf16.gmra.mxu0 %v3749
        %v3899 = vpop.f32.mrf.mxu0
        %v3900 = vadd.f32 %v3653, %v3899
        %v3901 = vpop.f32.mrf.mxu0
        %v3902 = vadd.f32 %v3653, %v3901
        %3903 = vmatmul.bf16.gmra.mxu0 %v3752
        %v3904 = vpop.f32.mrf.mxu0
        %v3905 = vadd.f32 %v3653, %v3904
        %v3906 = vpop.f32.mrf.mxu0
        %v3907 = vadd.f32 %v3653, %v3906
        %3908 = vmatmul.bf16.gmra.mxu0 %v3755
        %v3909 = vpop.f32.mrf.mxu0
        %v3910 = vadd.f32 %v3653, %v3909
        %v3911 = vpop.f32.mrf.mxu0
        %v3912 = vadd.f32 %v3653, %v3911
        %3913 = vmatmul.bf16.gmra.mxu0 %v3758
        %v3914 = vpop.f32.mrf.mxu0
        %v3915 = vadd.f32 %v3653, %v3914
        %v3916 = vpop.f32.mrf.mxu0
        %v3917 = vadd.f32 %v3653, %v3916
        %3918 = vmatmul.bf16.gmra.mxu0 %v3761
        %v3919 = vpop.f32.mrf.mxu0
        %v3920 = vadd.f32 %v3653, %v3919
        %v3921 = vpop.f32.mrf.mxu0
        %v3922 = vadd.f32 %v3653, %v3921
        %3923 = vmatmul.bf16.gmra.mxu0 %v3764
        %v3924 = vpop.f32.mrf.mxu0
        %v3925 = vadd.f32 %v3653, %v3924
        %v3926 = vpop.f32.mrf.mxu0
        %v3927 = vadd.f32 %v3653, %v3926
        %3928 = vmatmul.bf16.gmra.mxu0 %v3767
        %v3929 = vpop.f32.mrf.mxu0
        %v3930 = vadd.f32 %v3653, %v3929
        %v3931 = vpop.f32.mrf.mxu0
        %v3932 = vadd.f32 %v3653, %v3931
        %3933 = vmatmul.bf16.gmra.mxu0 %v3770
        %v3934 = vpop.f32.mrf.mxu0
        %v3935 = vadd.f32 %v3653, %v3934
        %v3936 = vpop.f32.mrf.mxu0
        %v3937 = vadd.f32 %v3653, %v3936
        %3938 = vmatmul.bf16.gmra.mxu0 %v3773
        %v3939 = vpop.f32.mrf.mxu0
        %v3940 = vadd.f32 %v3653, %v3939
        %v3941 = vpop.f32.mrf.mxu0
        %v3942 = vadd.f32 %v3653, %v3941
        %3943 = vdwg.mxu0
        %3944 = vadd.xlane.f32.xlu0 %v3785
        %v3945 = vpop.xlane.xlu0 %3944
        %3946 = vadd.xlane.f32.xlu0 %v3787
        %v3947 = vpop.xlane.xlu0 %3946
        %3948 = vadd.xlane.f32.xlu0 %v3790
        %v3949 = vpop.xlane.xlu0 %3948
        %3950 = vadd.xlane.f32.xlu0 %v3792
        %v3951 = vpop.xlane.xlu0 %3950
        %3952 = vadd.xlane.f32.xlu0 %v3795
        %v3953 = vpop.xlane.xlu0 %3952
        %3954 = vadd.xlane.f32.xlu0 %v3797
        %v3955 = vpop.xlane.xlu0 %3954
        %3956 = vadd.xlane.f32.xlu0 %v3800
        %v3957 = vpop.xlane.xlu0 %3956
        %3958 = vadd.xlane.f32.xlu0 %v3802
        %v3959 = vpop.xlane.xlu0 %3958
        %3960 = vadd.xlane.f32.xlu0 %v3805
        %v3961 = vpop.xlane.xlu0 %3960
        %3962 = vadd.xlane.f32.xlu0 %v3807
        %v3963 = vpop.xlane.xlu0 %3962
        %3964 = vadd.xlane.f32.xlu0 %v3810
        %v3965 = vpop.xlane.xlu0 %3964
        %3966 = vadd.xlane.f32.xlu0 %v3812
        %v3967 = vpop.xlane.xlu0 %3966
        %3968 = vadd.xlane.f32.xlu0 %v3815
        %v3969 = vpop.xlane.xlu0 %3968
        %3970 = vadd.xlane.f32.xlu0 %v3817
        %v3971 = vpop.xlane.xlu0 %3970
        %3972 = vadd.xlane.f32.xlu0 %v3820
        %v3973 = vpop.xlane.xlu0 %3972
        %3974 = vadd.xlane.f32.xlu0 %v3822
        %v3975 = vpop.xlane.xlu0 %3974
        %3976 = vadd.xlane.f32.xlu0 %v3825
        %v3977 = vpop.xlane.xlu0 %3976
        %3978 = vadd.xlane.f32.xlu0 %v3827
        %v3979 = vpop.xlane.xlu0 %3978
        %3980 = vadd.xlane.f32.xlu0 %v3830
        %v3981 = vpop.xlane.xlu0 %3980
        %3982 = vadd.xlane.f32.xlu0 %v3832
        %v3983 = vpop.xlane.xlu0 %3982
        %3984 = vadd.xlane.f32.xlu0 %v3835
        %v3985 = vpop.xlane.xlu0 %3984
        %3986 = vadd.xlane.f32.xlu0 %v3837
        %v3987 = vpop.xlane.xlu0 %3986
        %3988 = vadd.xlane.f32.xlu0 %v3840
        %v3989 = vpop.xlane.xlu0 %3988
        %3990 = vadd.xlane.f32.xlu0 %v3842
        %v3991 = vpop.xlane.xlu0 %3990
        %3992 = vadd.xlane.f32.xlu0 %v3845
        %v3993 = vpop.xlane.xlu0 %3992
        %3994 = vadd.xlane.f32.xlu0 %v3847
        %v3995 = vpop.xlane.xlu0 %3994
        %3996 = vadd.xlane.f32.xlu0 %v3850
        %v3997 = vpop.xlane.xlu0 %3996
        %3998 = vadd.xlane.f32.xlu0 %v3852
        %v3999 = vpop.xlane.xlu0 %3998
        %4000 = vadd.xlane.f32.xlu0 %v3855
        %v4001 = vpop.xlane.xlu0 %4000
        %4002 = vadd.xlane.f32.xlu0 %v3857
        %v4003 = vpop.xlane.xlu0 %4002
        %4004 = vadd.xlane.f32.xlu0 %v3860
        %v4005 = vpop.xlane.xlu0 %4004
        %4006 = vadd.xlane.f32.xlu0 %v3862
        %v4007 = vpop.xlane.xlu0 %4006
        %4008 = vadd.xlane.f32.xlu0 %v3865
        %v4009 = vpop.xlane.xlu0 %4008
        %4010 = vadd.xlane.f32.xlu0 %v3867
        %v4011 = vpop.xlane.xlu0 %4010
        %4012 = vadd.xlane.f32.xlu0 %v3870
        %v4013 = vpop.xlane.xlu0 %4012
        %4014 = vadd.xlane.f32.xlu0 %v3872
        %v4015 = vpop.xlane.xlu0 %4014
        %4016 = vadd.xlane.f32.xlu0 %v3875
        %v4017 = vpop.xlane.xlu0 %4016
        %4018 = vadd.xlane.f32.xlu0 %v3877
        %v4019 = vpop.xlane.xlu0 %4018
        %4020 = vadd.xlane.f32.xlu0 %v3880
        %v4021 = vpop.xlane.xlu0 %4020
        %4022 = vadd.xlane.f32.xlu0 %v3882
        %v4023 = vpop.xlane.xlu0 %4022
        %4024 = vadd.xlane.f32.xlu0 %v3885
        %v4025 = vpop.xlane.xlu0 %4024
        %4026 = vadd.xlane.f32.xlu0 %v3887
        %v4027 = vpop.xlane.xlu0 %4026
        %4028 = vadd.xlane.f32.xlu0 %v3890
        %v4029 = vpop.xlane.xlu0 %4028
        %4030 = vadd.xlane.f32.xlu0 %v3892
        %v4031 = vpop.xlane.xlu0 %4030
        %4032 = vadd.xlane.f32.xlu0 %v3895
        %v4033 = vpop.xlane.xlu0 %4032
        %4034 = vadd.xlane.f32.xlu0 %v3897
        %v4035 = vpop.xlane.xlu0 %4034
        %4036 = vadd.xlane.f32.xlu0 %v3900
        %v4037 = vpop.xlane.xlu0 %4036
        %4038 = vadd.xlane.f32.xlu0 %v3902
        %v4039 = vpop.xlane.xlu0 %4038
        %4040 = vadd.xlane.f32.xlu0 %v3905
        %v4041 = vpop.xlane.xlu0 %4040
        %4042 = vadd.xlane.f32.xlu0 %v3907
        %v4043 = vpop.xlane.xlu0 %4042
        %4044 = vadd.xlane.f32.xlu0 %v3910
        %v4045 = vpop.xlane.xlu0 %4044
        %4046 = vadd.xlane.f32.xlu0 %v3912
        %v4047 = vpop.xlane.xlu0 %4046
        %4048 = vadd.xlane.f32.xlu0 %v3915
        %v4049 = vpop.xlane.xlu0 %4048
        %4050 = vadd.xlane.f32.xlu0 %v3917
        %v4051 = vpop.xlane.xlu0 %4050
        %4052 = vadd.xlane.f32.xlu0 %v3920
        %v4053 = vpop.xlane.xlu0 %4052
        %4054 = vadd.xlane.f32.xlu0 %v3922
        %v4055 = vpop.xlane.xlu0 %4054
        %4056 = vadd.xlane.f32.xlu0 %v3925
        %v4057 = vpop.xlane.xlu0 %4056
        %4058 = vadd.xlane.f32.xlu0 %v3927
        %v4059 = vpop.xlane.xlu0 %4058
        %4060 = vadd.xlane.f32.xlu0 %v3930
        %v4061 = vpop.xlane.xlu0 %4060
        %4062 = vadd.xlane.f32.xlu0 %v3932
        %v4063 = vpop.xlane.xlu0 %4062
        %4064 = vadd.xlane.f32.xlu0 %v3935
        %v4065 = vpop.xlane.xlu0 %4064
        %4066 = vadd.xlane.f32.xlu0 %v3937
        %v4067 = vpop.xlane.xlu0 %4066
        %4068 = vadd.xlane.f32.xlu0 %v3940
        %v4069 = vpop.xlane.xlu0 %4068
        %4070 = vadd.xlane.f32.xlu0 %v3942
        %v4071 = vpop.xlane.xlu0 %4070
        %v4072 = vmul.f32 %v3945, 0.03125
        %v4073 = vmul.f32 %v3947, 0.03125
        %v4074 = vmul.f32 %v3949, 0.03125
        %v4075 = vmul.f32 %v3951, 0.03125
        %v4076 = vmul.f32 %v3953, 0.03125
        %v4077 = vmul.f32 %v3955, 0.03125
        %v4078 = vmul.f32 %v3957, 0.03125
        %v4079 = vmul.f32 %v3959, 0.03125
        %v4080 = vmul.f32 %v3961, 0.03125
        %v4081 = vmul.f32 %v3963, 0.03125
        %v4082 = vmul.f32 %v3965, 0.03125
        %v4083 = vmul.f32 %v3967, 0.03125
        %v4084 = vmul.f32 %v3969, 0.03125
        %v4085 = vmul.f32 %v3971, 0.03125
        %v4086 = vmul.f32 %v3973, 0.03125
        %v4087 = vmul.f32 %v3975, 0.03125
        %v4088 = vmul.f32 %v3977, 0.03125
        %v4089 = vmul.f32 %v3979, 0.03125
        %v4090 = vmul.f32 %v3981, 0.03125
        %v4091 = vmul.f32 %v3983, 0.03125
        %v4092 = vmul.f32 %v3985, 0.03125
        %v4093 = vmul.f32 %v3987, 0.03125
        %v4094 = vmul.f32 %v3989, 0.03125
        %v4095 = vmul.f32 %v3991, 0.03125
        %v4096 = vmul.f32 %v3993, 0.03125
        %v4097 = vmul.f32 %v3995, 0.03125
        %v4098 = vmul.f32 %v3997, 0.03125
        %v4099 = vmul.f32 %v3999, 0.03125
        %v4100 = vmul.f32 %v4001, 0.03125
        %v4101 = vmul.f32 %v4003, 0.03125
        %v4102 = vmul.f32 %v4005, 0.03125
        %v4103 = vmul.f32 %v4007, 0.03125
        %v4104 = vmul.f32 %v4009, 0.03125
        %v4105 = vmul.f32 %v4011, 0.03125
        %v4106 = vmul.f32 %v4013, 0.03125
        %v4107 = vmul.f32 %v4015, 0.03125
        %v4108 = vmul.f32 %v4017, 0.03125
        %v4109 = vmul.f32 %v4019, 0.03125
        %v4110 = vmul.f32 %v4021, 0.03125
        %v4111 = vmul.f32 %v4023, 0.03125
        %v4112 = vmul.f32 %v4025, 0.03125
        %v4113 = vmul.f32 %v4027, 0.03125
        %v4114 = vmul.f32 %v4029, 0.03125
        %v4115 = vmul.f32 %v4031, 0.03125
        %v4116 = vmul.f32 %v4033, 0.03125
        %v4117 = vmul.f32 %v4035, 0.03125
        %v4118 = vmul.f32 %v4037, 0.03125
        %v4119 = vmul.f32 %v4039, 0.03125
        %v4120 = vmul.f32 %v4041, 0.03125
        %v4121 = vmul.f32 %v4043, 0.03125
        %v4122 = vmul.f32 %v4045, 0.03125
        %v4123 = vmul.f32 %v4047, 0.03125
        %v4124 = vmul.f32 %v4049, 0.03125
        %v4125 = vmul.f32 %v4051, 0.03125
        %v4126 = vmul.f32 %v4053, 0.03125
        %v4127 = vmul.f32 %v4055, 0.03125
        %v4128 = vmul.f32 %v4057, 0.03125
        %v4129 = vmul.f32 %v4059, 0.03125
        %v4130 = vmul.f32 %v4061, 0.03125
        %v4131 = vmul.f32 %v4063, 0.03125
        %v4132 = vmul.f32 %v4065, 0.03125
        %v4133 = vmul.f32 %v4067, 0.03125
        %v4134 = vmul.f32 %v4069, 0.03125
        %v4135 = vmul.f32 %v4071, 0.03125
        %v4136 = vsub.f32 %v3785, %v4072
        %v4137 = vsub.f32 %v3787, %v4073
        %v4138 = vsub.f32 %v3790, %v4074
        %v4139 = vsub.f32 %v3792, %v4075
        %v4140 = vsub.f32 %v3795, %v4076
        %v4141 = vsub.f32 %v3797, %v4077
        %v4142 = vsub.f32 %v3800, %v4078
        %v4143 = vsub.f32 %v3802, %v4079
        %v4144 = vsub.f32 %v3805, %v4080
        %v4145 = vsub.f32 %v3807, %v4081
        %v4146 = vsub.f32 %v3810, %v4082
        %v4147 = vsub.f32 %v3812, %v4083
        %v4148 = vsub.f32 %v3815, %v4084
        %v4149 = vsub.f32 %v3817, %v4085
        %v4150 = vsub.f32 %v3820, %v4086
        %v4151 = vsub.f32 %v3822, %v4087
        %v4152 = vsub.f32 %v3825, %v4088
        %v4153 = vsub.f32 %v3827, %v4089
        %v4154 = vsub.f32 %v3830, %v4090
        %v4155 = vsub.f32 %v3832, %v4091
        %v4156 = vsub.f32 %v3835, %v4092
        %v4157 = vsub.f32 %v3837, %v4093
        %v4158 = vsub.f32 %v3840, %v4094
        %v4159 = vsub.f32 %v3842, %v4095
        %v4160 = vsub.f32 %v3845, %v4096
        %v4161 = vsub.f32 %v3847, %v4097
        %v4162 = vsub.f32 %v3850, %v4098
        %v4163 = vsub.f32 %v3852, %v4099
        %v4164 = vsub.f32 %v3855, %v4100
        %v4165 = vsub.f32 %v3857, %v4101
        %v4166 = vsub.f32 %v3860, %v4102
        %v4167 = vsub.f32 %v3862, %v4103
        %v4168 = vsub.f32 %v3865, %v4104
        %v4169 = vsub.f32 %v3867, %v4105
        %v4170 = vsub.f32 %v3870, %v4106
        %v4171 = vsub.f32 %v3872, %v4107
        %v4172 = vsub.f32 %v3875, %v4108
        %v4173 = vsub.f32 %v3877, %v4109
        %v4174 = vsub.f32 %v3880, %v4110
        %v4175 = vsub.f32 %v3882, %v4111
        %v4176 = vsub.f32 %v3885, %v4112
        %v4177 = vsub.f32 %v3887, %v4113
        %v4178 = vsub.f32 %v3890, %v4114
        %v4179 = vsub.f32 %v3892, %v4115
        %v4180 = vsub.f32 %v3895, %v4116
        %v4181 = vsub.f32 %v3897, %v4117
        %v4182 = vsub.f32 %v3900, %v4118
        %v4183 = vsub.f32 %v3902, %v4119
        %v4184 = vsub.f32 %v3905, %v4120
        %v4185 = vsub.f32 %v3907, %v4121
        %v4186 = vsub.f32 %v3910, %v4122
        %v4187 = vsub.f32 %v3912, %v4123
        %v4188 = vsub.f32 %v3915, %v4124
        %v4189 = vsub.f32 %v3917, %v4125
        %v4190 = vsub.f32 %v3920, %v4126
        %v4191 = vsub.f32 %v3922, %v4127
        %v4192 = vsub.f32 %v3925, %v4128
        %v4193 = vsub.f32 %v3927, %v4129
        %v4194 = vsub.f32 %v3930, %v4130
        %v4195 = vsub.f32 %v3932, %v4131
        %v4196 = vsub.f32 %v3935, %v4132
        %v4197 = vsub.f32 %v3937, %v4133
        %v4198 = vsub.f32 %v3940, %v4134
        %v4199 = vsub.f32 %v3942, %v4135
        %v4200 = vlaneseq
        %v4201 = vand.u32 %v4200, 127
        %vm4202 = vcmp.lt.s32.totalorder %v4201, 32
        %v4203 = vsel %vm4202, 1, 0
        %vm4204 = vcmp.eq.s32.totalorder %v4203, 1
        %v4205 = vsel %vm4204, %v4136, 0.0
        %v4206 = vsel %vm4204, %v4137, 0.0
        %v4207 = vsel %vm4204, %v4138, 0.0
        %v4208 = vsel %vm4204, %v4139, 0.0
        %v4209 = vsel %vm4204, %v4140, 0.0
        %v4210 = vsel %vm4204, %v4141, 0.0
        %v4211 = vsel %vm4204, %v4142, 0.0
        %v4212 = vsel %vm4204, %v4143, 0.0
        %v4213 = vsel %vm4204, %v4144, 0.0
        %v4214 = vsel %vm4204, %v4145, 0.0
        %v4215 = vsel %vm4204, %v4146, 0.0
        %v4216 = vsel %vm4204, %v4147, 0.0
        %v4217 = vsel %vm4204, %v4148, 0.0
        %v4218 = vsel %vm4204, %v4149, 0.0
        %v4219 = vsel %vm4204, %v4150, 0.0
        %v4220 = vsel %vm4204, %v4151, 0.0
        %v4221 = vsel %vm4204, %v4152, 0.0
        %v4222 = vsel %vm4204, %v4153, 0.0
        %v4223 = vsel %vm4204, %v4154, 0.0
        %v4224 = vsel %vm4204, %v4155, 0.0
        %v4225 = vsel %vm4204, %v4156, 0.0
        %v4226 = vsel %vm4204, %v4157, 0.0
        %v4227 = vsel %vm4204, %v4158, 0.0
        %v4228 = vsel %vm4204, %v4159, 0.0
        %v4229 = vsel %vm4204, %v4160, 0.0
        %v4230 = vsel %vm4204, %v4161, 0.0
        %v4231 = vsel %vm4204, %v4162, 0.0
        %v4232 = vsel %vm4204, %v4163, 0.0
        %v4233 = vsel %vm4204, %v4164, 0.0
        %v4234 = vsel %vm4204, %v4165, 0.0
        %v4235 = vsel %vm4204, %v4166, 0.0
        %v4236 = vsel %vm4204, %v4167, 0.0
        %v4237 = vsel %vm4204, %v4168, 0.0
        %v4238 = vsel %vm4204, %v4169, 0.0
        %v4239 = vsel %vm4204, %v4170, 0.0
        %v4240 = vsel %vm4204, %v4171, 0.0
        %v4241 = vsel %vm4204, %v4172, 0.0
        %v4242 = vsel %vm4204, %v4173, 0.0
        %v4243 = vsel %vm4204, %v4174, 0.0
        %v4244 = vsel %vm4204, %v4175, 0.0
        %v4245 = vsel %vm4204, %v4176, 0.0
        %v4246 = vsel %vm4204, %v4177, 0.0
        %v4247 = vsel %vm4204, %v4178, 0.0
        %v4248 = vsel %vm4204, %v4179, 0.0
        %v4249 = vsel %vm4204, %v4180, 0.0
        %v4250 = vsel %vm4204, %v4181, 0.0
        %v4251 = vsel %vm4204, %v4182, 0.0
        %v4252 = vsel %vm4204, %v4183, 0.0
        %v4253 = vsel %vm4204, %v4184, 0.0
        %v4254 = vsel %vm4204, %v4185, 0.0
        %v4255 = vsel %vm4204, %v4186, 0.0
        %v4256 = vsel %vm4204, %v4187, 0.0
        %v4257 = vsel %vm4204, %v4188, 0.0
        %v4258 = vsel %vm4204, %v4189, 0.0
        %v4259 = vsel %vm4204, %v4190, 0.0
        %v4260 = vsel %vm4204, %v4191, 0.0
        %v4261 = vsel %vm4204, %v4192, 0.0
        %v4262 = vsel %vm4204, %v4193, 0.0
        %v4263 = vsel %vm4204, %v4194, 0.0
        %v4264 = vsel %vm4204, %v4195, 0.0
        %v4265 = vsel %vm4204, %v4196, 0.0
        %v4266 = vsel %vm4204, %v4197, 0.0
        %v4267 = vsel %vm4204, %v4198, 0.0
        %v4268 = vsel %vm4204, %v4199, 0.0
        %v4269 = vmul.f32 %v4205, %v4205
        %v4270 = vmul.f32 %v4206, %v4206
        %v4271 = vmul.f32 %v4207, %v4207
        %v4272 = vmul.f32 %v4208, %v4208
        %v4273 = vmul.f32 %v4209, %v4209
        %v4274 = vmul.f32 %v4210, %v4210
        %v4275 = vmul.f32 %v4211, %v4211
        %v4276 = vmul.f32 %v4212, %v4212
        %v4277 = vmul.f32 %v4213, %v4213
        %v4278 = vmul.f32 %v4214, %v4214
        %v4279 = vmul.f32 %v4215, %v4215
        %v4280 = vmul.f32 %v4216, %v4216
        %v4281 = vmul.f32 %v4217, %v4217
        %v4282 = vmul.f32 %v4218, %v4218
        %v4283 = vmul.f32 %v4219, %v4219
        %v4284 = vmul.f32 %v4220, %v4220
        %v4285 = vmul.f32 %v4221, %v4221
        %v4286 = vmul.f32 %v4222, %v4222
        %v4287 = vmul.f32 %v4223, %v4223
        %v4288 = vmul.f32 %v4224, %v4224
        %v4289 = vmul.f32 %v4225, %v4225
        %v4290 = vmul.f32 %v4226, %v4226
        %v4291 = vmul.f32 %v4227, %v4227
        %v4292 = vmul.f32 %v4228, %v4228
        %v4293 = vmul.f32 %v4229, %v4229
        %v4294 = vmul.f32 %v4230, %v4230
        %v4295 = vmul.f32 %v4231, %v4231
        %v4296 = vmul.f32 %v4232, %v4232
        %v4297 = vmul.f32 %v4233, %v4233
        %v4298 = vmul.f32 %v4234, %v4234
        %v4299 = vmul.f32 %v4235, %v4235
        %v4300 = vmul.f32 %v4236, %v4236
        %v4301 = vmul.f32 %v4237, %v4237
        %v4302 = vmul.f32 %v4238, %v4238
        %v4303 = vmul.f32 %v4239, %v4239
        %v4304 = vmul.f32 %v4240, %v4240
        %v4305 = vmul.f32 %v4241, %v4241
        %v4306 = vmul.f32 %v4242, %v4242
        %v4307 = vmul.f32 %v4243, %v4243
        %v4308 = vmul.f32 %v4244, %v4244
        %v4309 = vmul.f32 %v4245, %v4245
        %v4310 = vmul.f32 %v4246, %v4246
        %v4311 = vmul.f32 %v4247, %v4247
        %v4312 = vmul.f32 %v4248, %v4248
        %v4313 = vmul.f32 %v4249, %v4249
        %v4314 = vmul.f32 %v4250, %v4250
        %v4315 = vmul.f32 %v4251, %v4251
        %v4316 = vmul.f32 %v4252, %v4252
        %v4317 = vmul.f32 %v4253, %v4253
        %v4318 = vmul.f32 %v4254, %v4254
        %v4319 = vmul.f32 %v4255, %v4255
        %v4320 = vmul.f32 %v4256, %v4256
        %v4321 = vmul.f32 %v4257, %v4257
        %v4322 = vmul.f32 %v4258, %v4258
        %v4323 = vmul.f32 %v4259, %v4259
        %v4324 = vmul.f32 %v4260, %v4260
        %v4325 = vmul.f32 %v4261, %v4261
        %v4326 = vmul.f32 %v4262, %v4262
        %v4327 = vmul.f32 %v4263, %v4263
        %v4328 = vmul.f32 %v4264, %v4264
        %v4329 = vmul.f32 %v4265, %v4265
        %v4330 = vmul.f32 %v4266, %v4266
        %v4331 = vmul.f32 %v4267, %v4267
        %v4332 = vmul.f32 %v4268, %v4268
        %4333 = vadd.xlane.f32.xlu0 %v4269
        %v4334 = vpop.xlane.xlu0 %4333
        %4335 = vadd.xlane.f32.xlu0 %v4270
        %v4336 = vpop.xlane.xlu0 %4335
        %4337 = vadd.xlane.f32.xlu0 %v4271
        %v4338 = vpop.xlane.xlu0 %4337
        %4339 = vadd.xlane.f32.xlu0 %v4272
        %v4340 = vpop.xlane.xlu0 %4339
        %4341 = vadd.xlane.f32.xlu0 %v4273
        %v4342 = vpop.xlane.xlu0 %4341
        %4343 = vadd.xlane.f32.xlu0 %v4274
        %v4344 = vpop.xlane.xlu0 %4343
        %4345 = vadd.xlane.f32.xlu0 %v4275
        %v4346 = vpop.xlane.xlu0 %4345
        %4347 = vadd.xlane.f32.xlu0 %v4276
        %v4348 = vpop.xlane.xlu0 %4347
        %4349 = vadd.xlane.f32.xlu0 %v4277
        %v4350 = vpop.xlane.xlu0 %4349
        %4351 = vadd.xlane.f32.xlu0 %v4278
        %v4352 = vpop.xlane.xlu0 %4351
        %4353 = vadd.xlane.f32.xlu0 %v4279
        %v4354 = vpop.xlane.xlu0 %4353
        %4355 = vadd.xlane.f32.xlu0 %v4280
        %v4356 = vpop.xlane.xlu0 %4355
        %4357 = vadd.xlane.f32.xlu0 %v4281
        %v4358 = vpop.xlane.xlu0 %4357
        %4359 = vadd.xlane.f32.xlu0 %v4282
        %v4360 = vpop.xlane.xlu0 %4359
        %4361 = vadd.xlane.f32.xlu0 %v4283
        %v4362 = vpop.xlane.xlu0 %4361
        %4363 = vadd.xlane.f32.xlu0 %v4284
        %v4364 = vpop.xlane.xlu0 %4363
        %4365 = vadd.xlane.f32.xlu0 %v4285
        %v4366 = vpop.xlane.xlu0 %4365
        %4367 = vadd.xlane.f32.xlu0 %v4286
        %v4368 = vpop.xlane.xlu0 %4367
        %4369 = vadd.xlane.f32.xlu0 %v4287
        %v4370 = vpop.xlane.xlu0 %4369
        %4371 = vadd.xlane.f32.xlu0 %v4288
        %v4372 = vpop.xlane.xlu0 %4371
        %4373 = vadd.xlane.f32.xlu0 %v4289
        %v4374 = vpop.xlane.xlu0 %4373
        %4375 = vadd.xlane.f32.xlu0 %v4290
        %v4376 = vpop.xlane.xlu0 %4375
        %4377 = vadd.xlane.f32.xlu0 %v4291
        %v4378 = vpop.xlane.xlu0 %4377
        %4379 = vadd.xlane.f32.xlu0 %v4292
        %v4380 = vpop.xlane.xlu0 %4379
        %4381 = vadd.xlane.f32.xlu0 %v4293
        %v4382 = vpop.xlane.xlu0 %4381
        %4383 = vadd.xlane.f32.xlu0 %v4294
        %v4384 = vpop.xlane.xlu0 %4383
        %4385 = vadd.xlane.f32.xlu0 %v4295
        %v4386 = vpop.xlane.xlu0 %4385
        %4387 = vadd.xlane.f32.xlu0 %v4296
        %v4388 = vpop.xlane.xlu0 %4387
        %4389 = vadd.xlane.f32.xlu0 %v4297
        %v4390 = vpop.xlane.xlu0 %4389
        %4391 = vadd.xlane.f32.xlu0 %v4298
        %v4392 = vpop.xlane.xlu0 %4391
        %4393 = vadd.xlane.f32.xlu0 %v4299
        %v4394 = vpop.xlane.xlu0 %4393
        %4395 = vadd.xlane.f32.xlu0 %v4300
        %v4396 = vpop.xlane.xlu0 %4395
        %4397 = vadd.xlane.f32.xlu0 %v4301
        %v4398 = vpop.xlane.xlu0 %4397
        %4399 = vadd.xlane.f32.xlu0 %v4302
        %v4400 = vpop.xlane.xlu0 %4399
        %4401 = vadd.xlane.f32.xlu0 %v4303
        %v4402 = vpop.xlane.xlu0 %4401
        %4403 = vadd.xlane.f32.xlu0 %v4304
        %v4404 = vpop.xlane.xlu0 %4403
        %4405 = vadd.xlane.f32.xlu0 %v4305
        %v4406 = vpop.xlane.xlu0 %4405
        %4407 = vadd.xlane.f32.xlu0 %v4306
        %v4408 = vpop.xlane.xlu0 %4407
        %4409 = vadd.xlane.f32.xlu0 %v4307
        %v4410 = vpop.xlane.xlu0 %4409
        %4411 = vadd.xlane.f32.xlu0 %v4308
        %v4412 = vpop.xlane.xlu0 %4411
        %4413 = vadd.xlane.f32.xlu0 %v4309
        %v4414 = vpop.xlane.xlu0 %4413
        %4415 = vadd.xlane.f32.xlu0 %v4310
        %v4416 = vpop.xlane.xlu0 %4415
        %4417 = vadd.xlane.f32.xlu0 %v4311
        %v4418 = vpop.xlane.xlu0 %4417
        %4419 = vadd.xlane.f32.xlu0 %v4312
        %v4420 = vpop.xlane.xlu0 %4419
        %4421 = vadd.xlane.f32.xlu0 %v4313
        %v4422 = vpop.xlane.xlu0 %4421
        %4423 = vadd.xlane.f32.xlu0 %v4314
        %v4424 = vpop.xlane.xlu0 %4423
        %4425 = vadd.xlane.f32.xlu0 %v4315
        %v4426 = vpop.xlane.xlu0 %4425
        %4427 = vadd.xlane.f32.xlu0 %v4316
        %v4428 = vpop.xlane.xlu0 %4427
        %4429 = vadd.xlane.f32.xlu0 %v4317
        %v4430 = vpop.xlane.xlu0 %4429
        %4431 = vadd.xlane.f32.xlu0 %v4318
        %v4432 = vpop.xlane.xlu0 %4431
        %4433 = vadd.xlane.f32.xlu0 %v4319
        %v4434 = vpop.xlane.xlu0 %4433
        %4435 = vadd.xlane.f32.xlu0 %v4320
        %v4436 = vpop.xlane.xlu0 %4435
        %4437 = vadd.xlane.f32.xlu0 %v4321
        %v4438 = vpop.xlane.xlu0 %4437
        %4439 = vadd.xlane.f32.xlu0 %v4322
        %v4440 = vpop.xlane.xlu0 %4439
        %4441 = vadd.xlane.f32.xlu0 %v4323
        %v4442 = vpop.xlane.xlu0 %4441
        %4443 = vadd.xlane.f32.xlu0 %v4324
        %v4444 = vpop.xlane.xlu0 %4443
        %4445 = vadd.xlane.f32.xlu0 %v4325
        %v4446 = vpop.xlane.xlu0 %4445
        %4447 = vadd.xlane.f32.xlu0 %v4326
        %v4448 = vpop.xlane.xlu0 %4447
        %4449 = vadd.xlane.f32.xlu0 %v4327
        %v4450 = vpop.xlane.xlu0 %4449
        %4451 = vadd.xlane.f32.xlu0 %v4328
        %v4452 = vpop.xlane.xlu0 %4451
        %4453 = vadd.xlane.f32.xlu0 %v4329
        %v4454 = vpop.xlane.xlu0 %4453
        %4455 = vadd.xlane.f32.xlu0 %v4330
        %v4456 = vpop.xlane.xlu0 %4455
        %4457 = vadd.xlane.f32.xlu0 %v4331
        %v4458 = vpop.xlane.xlu0 %4457
        %4459 = vadd.xlane.f32.xlu0 %v4332
        %v4460 = vpop.xlane.xlu0 %4459
        %v4461 = vmul.f32 %v4334, 0.03125
        %v4462 = vmul.f32 %v4336, 0.03125
        %v4463 = vmul.f32 %v4338, 0.03125
        %v4464 = vmul.f32 %v4340, 0.03125
        %v4465 = vmul.f32 %v4342, 0.03125
        %v4466 = vmul.f32 %v4344, 0.03125
        %v4467 = vmul.f32 %v4346, 0.03125
        %v4468 = vmul.f32 %v4348, 0.03125
        %v4469 = vmul.f32 %v4350, 0.03125
        %v4470 = vmul.f32 %v4352, 0.03125
        %v4471 = vmul.f32 %v4354, 0.03125
        %v4472 = vmul.f32 %v4356, 0.03125
        %v4473 = vmul.f32 %v4358, 0.03125
        %v4474 = vmul.f32 %v4360, 0.03125
        %v4475 = vmul.f32 %v4362, 0.03125
        %v4476 = vmul.f32 %v4364, 0.03125
        %v4477 = vmul.f32 %v4366, 0.03125
        %v4478 = vmul.f32 %v4368, 0.03125
        %v4479 = vmul.f32 %v4370, 0.03125
        %v4480 = vmul.f32 %v4372, 0.03125
        %v4481 = vmul.f32 %v4374, 0.03125
        %v4482 = vmul.f32 %v4376, 0.03125
        %v4483 = vmul.f32 %v4378, 0.03125
        %v4484 = vmul.f32 %v4380, 0.03125
        %v4485 = vmul.f32 %v4382, 0.03125
        %v4486 = vmul.f32 %v4384, 0.03125
        %v4487 = vmul.f32 %v4386, 0.03125
        %v4488 = vmul.f32 %v4388, 0.03125
        %v4489 = vmul.f32 %v4390, 0.03125
        %v4490 = vmul.f32 %v4392, 0.03125
        %v4491 = vmul.f32 %v4394, 0.03125
        %v4492 = vmul.f32 %v4396, 0.03125
        %v4493 = vmul.f32 %v4398, 0.03125
        %v4494 = vmul.f32 %v4400, 0.03125
        %v4495 = vmul.f32 %v4402, 0.03125
        %v4496 = vmul.f32 %v4404, 0.03125
        %v4497 = vmul.f32 %v4406, 0.03125
        %v4498 = vmul.f32 %v4408, 0.03125
        %v4499 = vmul.f32 %v4410, 0.03125
        %v4500 = vmul.f32 %v4412, 0.03125
        %v4501 = vmul.f32 %v4414, 0.03125
        %v4502 = vmul.f32 %v4416, 0.03125
        %v4503 = vmul.f32 %v4418, 0.03125
        %v4504 = vmul.f32 %v4420, 0.03125
        %v4505 = vmul.f32 %v4422, 0.03125
        %v4506 = vmul.f32 %v4424, 0.03125
        %v4507 = vmul.f32 %v4426, 0.03125
        %v4508 = vmul.f32 %v4428, 0.03125
        %v4509 = vmul.f32 %v4430, 0.03125
        %v4510 = vmul.f32 %v4432, 0.03125
        %v4511 = vmul.f32 %v4434, 0.03125
        %v4512 = vmul.f32 %v4436, 0.03125
        %v4513 = vmul.f32 %v4438, 0.03125
        %v4514 = vmul.f32 %v4440, 0.03125
        %v4515 = vmul.f32 %v4442, 0.03125
        %v4516 = vmul.f32 %v4444, 0.03125
        %v4517 = vmul.f32 %v4446, 0.03125
        %v4518 = vmul.f32 %v4448, 0.03125
        %v4519 = vmul.f32 %v4450, 0.03125
        %v4520 = vmul.f32 %v4452, 0.03125
        %v4521 = vmul.f32 %v4454, 0.03125
        %v4522 = vmul.f32 %v4456, 0.03125
        %v4523 = vmul.f32 %v4458, 0.03125
        %v4524 = vmul.f32 %v4460, 0.03125
        %v4525 = vadd.f32 %v4461, 1e-05
        %v4526 = vadd.f32 %v4462, 1e-05
        %v4527 = vadd.f32 %v4463, 1e-05
        %v4528 = vadd.f32 %v4464, 1e-05
        %v4529 = vadd.f32 %v4465, 1e-05
        %v4530 = vadd.f32 %v4466, 1e-05
        %v4531 = vadd.f32 %v4467, 1e-05
        %v4532 = vadd.f32 %v4468, 1e-05
        %v4533 = vadd.f32 %v4469, 1e-05
        %v4534 = vadd.f32 %v4470, 1e-05
        %v4535 = vadd.f32 %v4471, 1e-05
        %v4536 = vadd.f32 %v4472, 1e-05
        %v4537 = vadd.f32 %v4473, 1e-05
        %v4538 = vadd.f32 %v4474, 1e-05
        %v4539 = vadd.f32 %v4475, 1e-05
        %v4540 = vadd.f32 %v4476, 1e-05
        %v4541 = vadd.f32 %v4477, 1e-05
        %v4542 = vadd.f32 %v4478, 1e-05
        %v4543 = vadd.f32 %v4479, 1e-05
        %v4544 = vadd.f32 %v4480, 1e-05
        %v4545 = vadd.f32 %v4481, 1e-05
        %v4546 = vadd.f32 %v4482, 1e-05
        %v4547 = vadd.f32 %v4483, 1e-05
        %v4548 = vadd.f32 %v4484, 1e-05
        %v4549 = vadd.f32 %v4485, 1e-05
        %v4550 = vadd.f32 %v4486, 1e-05
        %v4551 = vadd.f32 %v4487, 1e-05
        %v4552 = vadd.f32 %v4488, 1e-05
        %v4553 = vadd.f32 %v4489, 1e-05
        %v4554 = vadd.f32 %v4490, 1e-05
        %v4555 = vadd.f32 %v4491, 1e-05
        %v4556 = vadd.f32 %v4492, 1e-05
        %v4557 = vadd.f32 %v4493, 1e-05
        %v4558 = vadd.f32 %v4494, 1e-05
        %v4559 = vadd.f32 %v4495, 1e-05
        %v4560 = vadd.f32 %v4496, 1e-05
        %v4561 = vadd.f32 %v4497, 1e-05
        %v4562 = vadd.f32 %v4498, 1e-05
        %v4563 = vadd.f32 %v4499, 1e-05
        %v4564 = vadd.f32 %v4500, 1e-05
        %v4565 = vadd.f32 %v4501, 1e-05
        %v4566 = vadd.f32 %v4502, 1e-05
        %v4567 = vadd.f32 %v4503, 1e-05
        %v4568 = vadd.f32 %v4504, 1e-05
        %v4569 = vadd.f32 %v4505, 1e-05
        %v4570 = vadd.f32 %v4506, 1e-05
        %v4571 = vadd.f32 %v4507, 1e-05
        %v4572 = vadd.f32 %v4508, 1e-05
        %v4573 = vadd.f32 %v4509, 1e-05
        %v4574 = vadd.f32 %v4510, 1e-05
        %v4575 = vadd.f32 %v4511, 1e-05
        %v4576 = vadd.f32 %v4512, 1e-05
        %v4577 = vadd.f32 %v4513, 1e-05
        %v4578 = vadd.f32 %v4514, 1e-05
        %v4579 = vadd.f32 %v4515, 1e-05
        %v4580 = vadd.f32 %v4516, 1e-05
        %v4581 = vadd.f32 %v4517, 1e-05
        %v4582 = vadd.f32 %v4518, 1e-05
        %v4583 = vadd.f32 %v4519, 1e-05
        %v4584 = vadd.f32 %v4520, 1e-05
        %v4585 = vadd.f32 %v4521, 1e-05
        %v4586 = vadd.f32 %v4522, 1e-05
        %v4587 = vadd.f32 %v4523, 1e-05
        %v4588 = vadd.f32 %v4524, 1e-05
        %v4589 = vrsqrt.pop %v4525
        %v4590 = vmul.f32 %v4589, %v4525
        %v4591 = vmul.f32 %v4590, %v4589
        %v4592 = vmul.f32 0.5, %v4591
        %v4593 = vsub.f32 1.5, %v4592
        %v4594 = vmul.f32 %v4589, %v4593
        %vm4595 = vweird.f32 %v4525
        %vm4596 = vweird.f32 %v4589
        %vm4597 = vmor %vm4595, %vm4596
        %v4598 = vsel %vm4597, %v4589, %v4594
        %v4599 = vrsqrt.pop %v4526
        %v4600 = vmul.f32 %v4599, %v4526
        %v4601 = vmul.f32 %v4600, %v4599
        %v4602 = vmul.f32 0.5, %v4601
        %v4603 = vsub.f32 1.5, %v4602
        %v4604 = vmul.f32 %v4599, %v4603
        %vm4605 = vweird.f32 %v4526
        %vm4606 = vweird.f32 %v4599
        %vm4607 = vmor %vm4605, %vm4606
        %v4608 = vsel %vm4607, %v4599, %v4604
        %v4609 = vrsqrt.pop %v4527
        %v4610 = vmul.f32 %v4609, %v4527
        %v4611 = vmul.f32 %v4610, %v4609
        %v4612 = vmul.f32 0.5, %v4611
        %v4613 = vsub.f32 1.5, %v4612
        %v4614 = vmul.f32 %v4609, %v4613
        %vm4615 = vweird.f32 %v4527
        %vm4616 = vweird.f32 %v4609
        %vm4617 = vmor %vm4615, %vm4616
        %v4618 = vsel %vm4617, %v4609, %v4614
        %v4619 = vrsqrt.pop %v4528
        %v4620 = vmul.f32 %v4619, %v4528
        %v4621 = vmul.f32 %v4620, %v4619
        %v4622 = vmul.f32 0.5, %v4621
        %v4623 = vsub.f32 1.5, %v4622
        %v4624 = vmul.f32 %v4619, %v4623
        %vm4625 = vweird.f32 %v4528
        %vm4626 = vweird.f32 %v4619
        %vm4627 = vmor %vm4625, %vm4626
        %v4628 = vsel %vm4627, %v4619, %v4624
        %v4629 = vrsqrt.pop %v4529
        %v4630 = vmul.f32 %v4629, %v4529
        %v4631 = vmul.f32 %v4630, %v4629
        %v4632 = vmul.f32 0.5, %v4631
        %v4633 = vsub.f32 1.5, %v4632
        %v4634 = vmul.f32 %v4629, %v4633
        %vm4635 = vweird.f32 %v4529
        %vm4636 = vweird.f32 %v4629
        %vm4637 = vmor %vm4635, %vm4636
        %v4638 = vsel %vm4637, %v4629, %v4634
        %v4639 = vrsqrt.pop %v4530
        %v4640 = vmul.f32 %v4639, %v4530
        %v4641 = vmul.f32 %v4640, %v4639
        %v4642 = vmul.f32 0.5, %v4641
        %v4643 = vsub.f32 1.5, %v4642
        %v4644 = vmul.f32 %v4639, %v4643
        %vm4645 = vweird.f32 %v4530
        %vm4646 = vweird.f32 %v4639
        %vm4647 = vmor %vm4645, %vm4646
        %v4648 = vsel %vm4647, %v4639, %v4644
        %v4649 = vrsqrt.pop %v4531
        %v4650 = vmul.f32 %v4649, %v4531
        %v4651 = vmul.f32 %v4650, %v4649
        %v4652 = vmul.f32 0.5, %v4651
        %v4653 = vsub.f32 1.5, %v4652
        %v4654 = vmul.f32 %v4649, %v4653
        %vm4655 = vweird.f32 %v4531
        %vm4656 = vweird.f32 %v4649
        %vm4657 = vmor %vm4655, %vm4656
        %v4658 = vsel %vm4657, %v4649, %v4654
        %v4659 = vrsqrt.pop %v4532
        %v4660 = vmul.f32 %v4659, %v4532
        %v4661 = vmul.f32 %v4660, %v4659
        %v4662 = vmul.f32 0.5, %v4661
        %v4663 = vsub.f32 1.5, %v4662
        %v4664 = vmul.f32 %v4659, %v4663
        %vm4665 = vweird.f32 %v4532
        %vm4666 = vweird.f32 %v4659
        %vm4667 = vmor %vm4665, %vm4666
        %v4668 = vsel %vm4667, %v4659, %v4664
        %v4669 = vrsqrt.pop %v4533
        %v4670 = vmul.f32 %v4669, %v4533
        %v4671 = vmul.f32 %v4670, %v4669
        %v4672 = vmul.f32 0.5, %v4671
        %v4673 = vsub.f32 1.5, %v4672
        %v4674 = vmul.f32 %v4669, %v4673
        %vm4675 = vweird.f32 %v4533
        %vm4676 = vweird.f32 %v4669
        %vm4677 = vmor %vm4675, %vm4676
        %v4678 = vsel %vm4677, %v4669, %v4674
        %v4679 = vrsqrt.pop %v4534
        %v4680 = vmul.f32 %v4679, %v4534
        %v4681 = vmul.f32 %v4680, %v4679
        %v4682 = vmul.f32 0.5, %v4681
        %v4683 = vsub.f32 1.5, %v4682
        %v4684 = vmul.f32 %v4679, %v4683
        %vm4685 = vweird.f32 %v4534
        %vm4686 = vweird.f32 %v4679
        %vm4687 = vmor %vm4685, %vm4686
        %v4688 = vsel %vm4687, %v4679, %v4684
        %v4689 = vrsqrt.pop %v4535
        %v4690 = vmul.f32 %v4689, %v4535
        %v4691 = vmul.f32 %v4690, %v4689
        %v4692 = vmul.f32 0.5, %v4691
        %v4693 = vsub.f32 1.5, %v4692
        %v4694 = vmul.f32 %v4689, %v4693
        %vm4695 = vweird.f32 %v4535
        %vm4696 = vweird.f32 %v4689
        %vm4697 = vmor %vm4695, %vm4696
        %v4698 = vsel %vm4697, %v4689, %v4694
        %v4699 = vrsqrt.pop %v4536
        %v4700 = vmul.f32 %v4699, %v4536
        %v4701 = vmul.f32 %v4700, %v4699
        %v4702 = vmul.f32 0.5, %v4701
        %v4703 = vsub.f32 1.5, %v4702
        %v4704 = vmul.f32 %v4699, %v4703
        %vm4705 = vweird.f32 %v4536
        %vm4706 = vweird.f32 %v4699
        %vm4707 = vmor %vm4705, %vm4706
        %v4708 = vsel %vm4707, %v4699, %v4704
        %v4709 = vrsqrt.pop %v4537
        %v4710 = vmul.f32 %v4709, %v4537
        %v4711 = vmul.f32 %v4710, %v4709
        %v4712 = vmul.f32 0.5, %v4711
        %v4713 = vsub.f32 1.5, %v4712
        %v4714 = vmul.f32 %v4709, %v4713
        %vm4715 = vweird.f32 %v4537
        %vm4716 = vweird.f32 %v4709
        %vm4717 = vmor %vm4715, %vm4716
        %v4718 = vsel %vm4717, %v4709, %v4714
        %v4719 = vrsqrt.pop %v4538
        %v4720 = vmul.f32 %v4719, %v4538
        %v4721 = vmul.f32 %v4720, %v4719
        %v4722 = vmul.f32 0.5, %v4721
        %v4723 = vsub.f32 1.5, %v4722
        %v4724 = vmul.f32 %v4719, %v4723
        %vm4725 = vweird.f32 %v4538
        %vm4726 = vweird.f32 %v4719
        %vm4727 = vmor %vm4725, %vm4726
        %v4728 = vsel %vm4727, %v4719, %v4724
        %v4729 = vrsqrt.pop %v4539
        %v4730 = vmul.f32 %v4729, %v4539
        %v4731 = vmul.f32 %v4730, %v4729
        %v4732 = vmul.f32 0.5, %v4731
        %v4733 = vsub.f32 1.5, %v4732
        %v4734 = vmul.f32 %v4729, %v4733
        %vm4735 = vweird.f32 %v4539
        %vm4736 = vweird.f32 %v4729
        %vm4737 = vmor %vm4735, %vm4736
        %v4738 = vsel %vm4737, %v4729, %v4734
        %v4739 = vrsqrt.pop %v4540
        %v4740 = vmul.f32 %v4739, %v4540
        %v4741 = vmul.f32 %v4740, %v4739
        %v4742 = vmul.f32 0.5, %v4741
        %v4743 = vsub.f32 1.5, %v4742
        %v4744 = vmul.f32 %v4739, %v4743
        %vm4745 = vweird.f32 %v4540
        %vm4746 = vweird.f32 %v4739
        %vm4747 = vmor %vm4745, %vm4746
        %v4748 = vsel %vm4747, %v4739, %v4744
        %v4749 = vrsqrt.pop %v4541
        %v4750 = vmul.f32 %v4749, %v4541
        %v4751 = vmul.f32 %v4750, %v4749
        %v4752 = vmul.f32 0.5, %v4751
        %v4753 = vsub.f32 1.5, %v4752
        %v4754 = vmul.f32 %v4749, %v4753
        %vm4755 = vweird.f32 %v4541
        %vm4756 = vweird.f32 %v4749
        %vm4757 = vmor %vm4755, %vm4756
        %v4758 = vsel %vm4757, %v4749, %v4754
        %v4759 = vrsqrt.pop %v4542
        %v4760 = vmul.f32 %v4759, %v4542
        %v4761 = vmul.f32 %v4760, %v4759
        %v4762 = vmul.f32 0.5, %v4761
        %v4763 = vsub.f32 1.5, %v4762
        %v4764 = vmul.f32 %v4759, %v4763
        %vm4765 = vweird.f32 %v4542
        %vm4766 = vweird.f32 %v4759
        %vm4767 = vmor %vm4765, %vm4766
        %v4768 = vsel %vm4767, %v4759, %v4764
        %v4769 = vrsqrt.pop %v4543
        %v4770 = vmul.f32 %v4769, %v4543
        %v4771 = vmul.f32 %v4770, %v4769
        %v4772 = vmul.f32 0.5, %v4771
        %v4773 = vsub.f32 1.5, %v4772
        %v4774 = vmul.f32 %v4769, %v4773
        %vm4775 = vweird.f32 %v4543
        %vm4776 = vweird.f32 %v4769
        %vm4777 = vmor %vm4775, %vm4776
        %v4778 = vsel %vm4777, %v4769, %v4774
        %v4779 = vrsqrt.pop %v4544
        %v4780 = vmul.f32 %v4779, %v4544
        %v4781 = vmul.f32 %v4780, %v4779
        %v4782 = vmul.f32 0.5, %v4781
        %v4783 = vsub.f32 1.5, %v4782
        %v4784 = vmul.f32 %v4779, %v4783
        %vm4785 = vweird.f32 %v4544
        %vm4786 = vweird.f32 %v4779
        %vm4787 = vmor %vm4785, %vm4786
        %v4788 = vsel %vm4787, %v4779, %v4784
        %v4789 = vrsqrt.pop %v4545
        %v4790 = vmul.f32 %v4789, %v4545
        %v4791 = vmul.f32 %v4790, %v4789
        %v4792 = vmul.f32 0.5, %v4791
        %v4793 = vsub.f32 1.5, %v4792
        %v4794 = vmul.f32 %v4789, %v4793
        %vm4795 = vweird.f32 %v4545
        %vm4796 = vweird.f32 %v4789
        %vm4797 = vmor %vm4795, %vm4796
        %v4798 = vsel %vm4797, %v4789, %v4794
        %v4799 = vrsqrt.pop %v4546
        %v4800 = vmul.f32 %v4799, %v4546
        %v4801 = vmul.f32 %v4800, %v4799
        %v4802 = vmul.f32 0.5, %v4801
        %v4803 = vsub.f32 1.5, %v4802
        %v4804 = vmul.f32 %v4799, %v4803
        %vm4805 = vweird.f32 %v4546
        %vm4806 = vweird.f32 %v4799
        %vm4807 = vmor %vm4805, %vm4806
        %v4808 = vsel %vm4807, %v4799, %v4804
        %v4809 = vrsqrt.pop %v4547
        %v4810 = vmul.f32 %v4809, %v4547
        %v4811 = vmul.f32 %v4810, %v4809
        %v4812 = vmul.f32 0.5, %v4811
        %v4813 = vsub.f32 1.5, %v4812
        %v4814 = vmul.f32 %v4809, %v4813
        %vm4815 = vweird.f32 %v4547
        %vm4816 = vweird.f32 %v4809
        %vm4817 = vmor %vm4815, %vm4816
        %v4818 = vsel %vm4817, %v4809, %v4814
        %v4819 = vrsqrt.pop %v4548
        %v4820 = vmul.f32 %v4819, %v4548
        %v4821 = vmul.f32 %v4820, %v4819
        %v4822 = vmul.f32 0.5, %v4821
        %v4823 = vsub.f32 1.5, %v4822
        %v4824 = vmul.f32 %v4819, %v4823
        %vm4825 = vweird.f32 %v4548
        %vm4826 = vweird.f32 %v4819
        %vm4827 = vmor %vm4825, %vm4826
        %v4828 = vsel %vm4827, %v4819, %v4824
        %v4829 = vrsqrt.pop %v4549
        %v4830 = vmul.f32 %v4829, %v4549
        %v4831 = vmul.f32 %v4830, %v4829
        %v4832 = vmul.f32 0.5, %v4831
        %v4833 = vsub.f32 1.5, %v4832
        %v4834 = vmul.f32 %v4829, %v4833
        %vm4835 = vweird.f32 %v4549
        %vm4836 = vweird.f32 %v4829
        %vm4837 = vmor %vm4835, %vm4836
        %v4838 = vsel %vm4837, %v4829, %v4834
        %v4839 = vrsqrt.pop %v4550
        %v4840 = vmul.f32 %v4839, %v4550
        %v4841 = vmul.f32 %v4840, %v4839
        %v4842 = vmul.f32 0.5, %v4841
        %v4843 = vsub.f32 1.5, %v4842
        %v4844 = vmul.f32 %v4839, %v4843
        %vm4845 = vweird.f32 %v4550
        %vm4846 = vweird.f32 %v4839
        %vm4847 = vmor %vm4845, %vm4846
        %v4848 = vsel %vm4847, %v4839, %v4844
        %v4849 = vrsqrt.pop %v4551
        %v4850 = vmul.f32 %v4849, %v4551
        %v4851 = vmul.f32 %v4850, %v4849
        %v4852 = vmul.f32 0.5, %v4851
        %v4853 = vsub.f32 1.5, %v4852
        %v4854 = vmul.f32 %v4849, %v4853
        %vm4855 = vweird.f32 %v4551
        %vm4856 = vweird.f32 %v4849
        %vm4857 = vmor %vm4855, %vm4856
        %v4858 = vsel %vm4857, %v4849, %v4854
        %v4859 = vrsqrt.pop %v4552
        %v4860 = vmul.f32 %v4859, %v4552
        %v4861 = vmul.f32 %v4860, %v4859
        %v4862 = vmul.f32 0.5, %v4861
        %v4863 = vsub.f32 1.5, %v4862
        %v4864 = vmul.f32 %v4859, %v4863
        %vm4865 = vweird.f32 %v4552
        %vm4866 = vweird.f32 %v4859
        %vm4867 = vmor %vm4865, %vm4866
        %v4868 = vsel %vm4867, %v4859, %v4864
        %v4869 = vrsqrt.pop %v4553
        %v4870 = vmul.f32 %v4869, %v4553
        %v4871 = vmul.f32 %v4870, %v4869
        %v4872 = vmul.f32 0.5, %v4871
        %v4873 = vsub.f32 1.5, %v4872
        %v4874 = vmul.f32 %v4869, %v4873
        %vm4875 = vweird.f32 %v4553
        %vm4876 = vweird.f32 %v4869
        %vm4877 = vmor %vm4875, %vm4876
        %v4878 = vsel %vm4877, %v4869, %v4874
        %v4879 = vrsqrt.pop %v4554
        %v4880 = vmul.f32 %v4879, %v4554
        %v4881 = vmul.f32 %v4880, %v4879
        %v4882 = vmul.f32 0.5, %v4881
        %v4883 = vsub.f32 1.5, %v4882
        %v4884 = vmul.f32 %v4879, %v4883
        %vm4885 = vweird.f32 %v4554
        %vm4886 = vweird.f32 %v4879
        %vm4887 = vmor %vm4885, %vm4886
        %v4888 = vsel %vm4887, %v4879, %v4884
        %v4889 = vrsqrt.pop %v4555
        %v4890 = vmul.f32 %v4889, %v4555
        %v4891 = vmul.f32 %v4890, %v4889
        %v4892 = vmul.f32 0.5, %v4891
        %v4893 = vsub.f32 1.5, %v4892
        %v4894 = vmul.f32 %v4889, %v4893
        %vm4895 = vweird.f32 %v4555
        %vm4896 = vweird.f32 %v4889
        %vm4897 = vmor %vm4895, %vm4896
        %v4898 = vsel %vm4897, %v4889, %v4894
        %v4899 = vrsqrt.pop %v4556
        %v4900 = vmul.f32 %v4899, %v4556
        %v4901 = vmul.f32 %v4900, %v4899
        %v4902 = vmul.f32 0.5, %v4901
        %v4903 = vsub.f32 1.5, %v4902
        %v4904 = vmul.f32 %v4899, %v4903
        %vm4905 = vweird.f32 %v4556
        %vm4906 = vweird.f32 %v4899
        %vm4907 = vmor %vm4905, %vm4906
        %v4908 = vsel %vm4907, %v4899, %v4904
        %v4909 = vrsqrt.pop %v4557
        %v4910 = vmul.f32 %v4909, %v4557
        %v4911 = vmul.f32 %v4910, %v4909
        %v4912 = vmul.f32 0.5, %v4911
        %v4913 = vsub.f32 1.5, %v4912
        %v4914 = vmul.f32 %v4909, %v4913
        %vm4915 = vweird.f32 %v4557
        %vm4916 = vweird.f32 %v4909
        %vm4917 = vmor %vm4915, %vm4916
        %v4918 = vsel %vm4917, %v4909, %v4914
        %v4919 = vrsqrt.pop %v4558
        %v4920 = vmul.f32 %v4919, %v4558
        %v4921 = vmul.f32 %v4920, %v4919
        %v4922 = vmul.f32 0.5, %v4921
        %v4923 = vsub.f32 1.5, %v4922
        %v4924 = vmul.f32 %v4919, %v4923
        %vm4925 = vweird.f32 %v4558
        %vm4926 = vweird.f32 %v4919
        %vm4927 = vmor %vm4925, %vm4926
        %v4928 = vsel %vm4927, %v4919, %v4924
        %v4929 = vrsqrt.pop %v4559
        %v4930 = vmul.f32 %v4929, %v4559
        %v4931 = vmul.f32 %v4930, %v4929
        %v4932 = vmul.f32 0.5, %v4931
        %v4933 = vsub.f32 1.5, %v4932
        %v4934 = vmul.f32 %v4929, %v4933
        %vm4935 = vweird.f32 %v4559
        %vm4936 = vweird.f32 %v4929
        %vm4937 = vmor %vm4935, %vm4936
        %v4938 = vsel %vm4937, %v4929, %v4934
        %v4939 = vrsqrt.pop %v4560
        %v4940 = vmul.f32 %v4939, %v4560
        %v4941 = vmul.f32 %v4940, %v4939
        %v4942 = vmul.f32 0.5, %v4941
        %v4943 = vsub.f32 1.5, %v4942
        %v4944 = vmul.f32 %v4939, %v4943
        %vm4945 = vweird.f32 %v4560
        %vm4946 = vweird.f32 %v4939
        %vm4947 = vmor %vm4945, %vm4946
        %v4948 = vsel %vm4947, %v4939, %v4944
        %v4949 = vrsqrt.pop %v4561
        %v4950 = vmul.f32 %v4949, %v4561
        %v4951 = vmul.f32 %v4950, %v4949
        %v4952 = vmul.f32 0.5, %v4951
        %v4953 = vsub.f32 1.5, %v4952
        %v4954 = vmul.f32 %v4949, %v4953
        %vm4955 = vweird.f32 %v4561
        %vm4956 = vweird.f32 %v4949
        %vm4957 = vmor %vm4955, %vm4956
        %v4958 = vsel %vm4957, %v4949, %v4954
        %v4959 = vrsqrt.pop %v4562
        %v4960 = vmul.f32 %v4959, %v4562
        %v4961 = vmul.f32 %v4960, %v4959
        %v4962 = vmul.f32 0.5, %v4961
        %v4963 = vsub.f32 1.5, %v4962
        %v4964 = vmul.f32 %v4959, %v4963
        %vm4965 = vweird.f32 %v4562
        %vm4966 = vweird.f32 %v4959
        %vm4967 = vmor %vm4965, %vm4966
        %v4968 = vsel %vm4967, %v4959, %v4964
        %v4969 = vrsqrt.pop %v4563
        %v4970 = vmul.f32 %v4969, %v4563
        %v4971 = vmul.f32 %v4970, %v4969
        %v4972 = vmul.f32 0.5, %v4971
        %v4973 = vsub.f32 1.5, %v4972
        %v4974 = vmul.f32 %v4969, %v4973
        %vm4975 = vweird.f32 %v4563
        %vm4976 = vweird.f32 %v4969
        %vm4977 = vmor %vm4975, %vm4976
        %v4978 = vsel %vm4977, %v4969, %v4974
        %v4979 = vrsqrt.pop %v4564
        %v4980 = vmul.f32 %v4979, %v4564
        %v4981 = vmul.f32 %v4980, %v4979
        %v4982 = vmul.f32 0.5, %v4981
        %v4983 = vsub.f32 1.5, %v4982
        %v4984 = vmul.f32 %v4979, %v4983
        %vm4985 = vweird.f32 %v4564
        %vm4986 = vweird.f32 %v4979
        %vm4987 = vmor %vm4985, %vm4986
        %v4988 = vsel %vm4987, %v4979, %v4984
        %v4989 = vrsqrt.pop %v4565
        %v4990 = vmul.f32 %v4989, %v4565
        %v4991 = vmul.f32 %v4990, %v4989
        %v4992 = vmul.f32 0.5, %v4991
        %v4993 = vsub.f32 1.5, %v4992
        %v4994 = vmul.f32 %v4989, %v4993
        %vm4995 = vweird.f32 %v4565
        %vm4996 = vweird.f32 %v4989
        %vm4997 = vmor %vm4995, %vm4996
        %v4998 = vsel %vm4997, %v4989, %v4994
        %v4999 = vrsqrt.pop %v4566
        %v5000 = vmul.f32 %v4999, %v4566
        %v5001 = vmul.f32 %v5000, %v4999
        %v5002 = vmul.f32 0.5, %v5001
        %v5003 = vsub.f32 1.5, %v5002
        %v5004 = vmul.f32 %v4999, %v5003
        %vm5005 = vweird.f32 %v4566
        %vm5006 = vweird.f32 %v4999
        %vm5007 = vmor %vm5005, %vm5006
        %v5008 = vsel %vm5007, %v4999, %v5004
        %v5009 = vrsqrt.pop %v4567
        %v5010 = vmul.f32 %v5009, %v4567
        %v5011 = vmul.f32 %v5010, %v5009
        %v5012 = vmul.f32 0.5, %v5011
        %v5013 = vsub.f32 1.5, %v5012
        %v5014 = vmul.f32 %v5009, %v5013
        %vm5015 = vweird.f32 %v4567
        %vm5016 = vweird.f32 %v5009
        %vm5017 = vmor %vm5015, %vm5016
        %v5018 = vsel %vm5017, %v5009, %v5014
        %v5019 = vrsqrt.pop %v4568
        %v5020 = vmul.f32 %v5019, %v4568
        %v5021 = vmul.f32 %v5020, %v5019
        %v5022 = vmul.f32 0.5, %v5021
        %v5023 = vsub.f32 1.5, %v5022
        %v5024 = vmul.f32 %v5019, %v5023
        %vm5025 = vweird.f32 %v4568
        %vm5026 = vweird.f32 %v5019
        %vm5027 = vmor %vm5025, %vm5026
        %v5028 = vsel %vm5027, %v5019, %v5024
        %v5029 = vrsqrt.pop %v4569
        %v5030 = vmul.f32 %v5029, %v4569
        %v5031 = vmul.f32 %v5030, %v5029
        %v5032 = vmul.f32 0.5, %v5031
        %v5033 = vsub.f32 1.5, %v5032
        %v5034 = vmul.f32 %v5029, %v5033
        %vm5035 = vweird.f32 %v4569
        %vm5036 = vweird.f32 %v5029
        %vm5037 = vmor %vm5035, %vm5036
        %v5038 = vsel %vm5037, %v5029, %v5034
        %v5039 = vrsqrt.pop %v4570
        %v5040 = vmul.f32 %v5039, %v4570
        %v5041 = vmul.f32 %v5040, %v5039
        %v5042 = vmul.f32 0.5, %v5041
        %v5043 = vsub.f32 1.5, %v5042
        %v5044 = vmul.f32 %v5039, %v5043
        %vm5045 = vweird.f32 %v4570
        %vm5046 = vweird.f32 %v5039
        %vm5047 = vmor %vm5045, %vm5046
        %v5048 = vsel %vm5047, %v5039, %v5044
        %v5049 = vrsqrt.pop %v4571
        %v5050 = vmul.f32 %v5049, %v4571
        %v5051 = vmul.f32 %v5050, %v5049
        %v5052 = vmul.f32 0.5, %v5051
        %v5053 = vsub.f32 1.5, %v5052
        %v5054 = vmul.f32 %v5049, %v5053
        %vm5055 = vweird.f32 %v4571
        %vm5056 = vweird.f32 %v5049
        %vm5057 = vmor %vm5055, %vm5056
        %v5058 = vsel %vm5057, %v5049, %v5054
        %v5059 = vrsqrt.pop %v4572
        %v5060 = vmul.f32 %v5059, %v4572
        %v5061 = vmul.f32 %v5060, %v5059
        %v5062 = vmul.f32 0.5, %v5061
        %v5063 = vsub.f32 1.5, %v5062
        %v5064 = vmul.f32 %v5059, %v5063
        %vm5065 = vweird.f32 %v4572
        %vm5066 = vweird.f32 %v5059
        %vm5067 = vmor %vm5065, %vm5066
        %v5068 = vsel %vm5067, %v5059, %v5064
        %v5069 = vrsqrt.pop %v4573
        %v5070 = vmul.f32 %v5069, %v4573
        %v5071 = vmul.f32 %v5070, %v5069
        %v5072 = vmul.f32 0.5, %v5071
        %v5073 = vsub.f32 1.5, %v5072
        %v5074 = vmul.f32 %v5069, %v5073
        %vm5075 = vweird.f32 %v4573
        %vm5076 = vweird.f32 %v5069
        %vm5077 = vmor %vm5075, %vm5076
        %v5078 = vsel %vm5077, %v5069, %v5074
        %v5079 = vrsqrt.pop %v4574
        %v5080 = vmul.f32 %v5079, %v4574
        %v5081 = vmul.f32 %v5080, %v5079
        %v5082 = vmul.f32 0.5, %v5081
        %v5083 = vsub.f32 1.5, %v5082
        %v5084 = vmul.f32 %v5079, %v5083
        %vm5085 = vweird.f32 %v4574
        %vm5086 = vweird.f32 %v5079
        %vm5087 = vmor %vm5085, %vm5086
        %v5088 = vsel %vm5087, %v5079, %v5084
        %v5089 = vrsqrt.pop %v4575
        %v5090 = vmul.f32 %v5089, %v4575
        %v5091 = vmul.f32 %v5090, %v5089
        %v5092 = vmul.f32 0.5, %v5091
        %v5093 = vsub.f32 1.5, %v5092
        %v5094 = vmul.f32 %v5089, %v5093
        %vm5095 = vweird.f32 %v4575
        %vm5096 = vweird.f32 %v5089
        %vm5097 = vmor %vm5095, %vm5096
        %v5098 = vsel %vm5097, %v5089, %v5094
        %v5099 = vrsqrt.pop %v4576
        %v5100 = vmul.f32 %v5099, %v4576
        %v5101 = vmul.f32 %v5100, %v5099
        %v5102 = vmul.f32 0.5, %v5101
        %v5103 = vsub.f32 1.5, %v5102
        %v5104 = vmul.f32 %v5099, %v5103
        %vm5105 = vweird.f32 %v4576
        %vm5106 = vweird.f32 %v5099
        %vm5107 = vmor %vm5105, %vm5106
        %v5108 = vsel %vm5107, %v5099, %v5104
        %v5109 = vrsqrt.pop %v4577
        %v5110 = vmul.f32 %v5109, %v4577
        %v5111 = vmul.f32 %v5110, %v5109
        %v5112 = vmul.f32 0.5, %v5111
        %v5113 = vsub.f32 1.5, %v5112
        %v5114 = vmul.f32 %v5109, %v5113
        %vm5115 = vweird.f32 %v4577
        %vm5116 = vweird.f32 %v5109
        %vm5117 = vmor %vm5115, %vm5116
        %v5118 = vsel %vm5117, %v5109, %v5114
        %v5119 = vrsqrt.pop %v4578
        %v5120 = vmul.f32 %v5119, %v4578
        %v5121 = vmul.f32 %v5120, %v5119
        %v5122 = vmul.f32 0.5, %v5121
        %v5123 = vsub.f32 1.5, %v5122
        %v5124 = vmul.f32 %v5119, %v5123
        %vm5125 = vweird.f32 %v4578
        %vm5126 = vweird.f32 %v5119
        %vm5127 = vmor %vm5125, %vm5126
        %v5128 = vsel %vm5127, %v5119, %v5124
        %v5129 = vrsqrt.pop %v4579
        %v5130 = vmul.f32 %v5129, %v4579
        %v5131 = vmul.f32 %v5130, %v5129
        %v5132 = vmul.f32 0.5, %v5131
        %v5133 = vsub.f32 1.5, %v5132
        %v5134 = vmul.f32 %v5129, %v5133
        %vm5135 = vweird.f32 %v4579
        %vm5136 = vweird.f32 %v5129
        %vm5137 = vmor %vm5135, %vm5136
        %v5138 = vsel %vm5137, %v5129, %v5134
        %v5139 = vrsqrt.pop %v4580
        %v5140 = vmul.f32 %v5139, %v4580
        %v5141 = vmul.f32 %v5140, %v5139
        %v5142 = vmul.f32 0.5, %v5141
        %v5143 = vsub.f32 1.5, %v5142
        %v5144 = vmul.f32 %v5139, %v5143
        %vm5145 = vweird.f32 %v4580
        %vm5146 = vweird.f32 %v5139
        %vm5147 = vmor %vm5145, %vm5146
        %v5148 = vsel %vm5147, %v5139, %v5144
        %v5149 = vrsqrt.pop %v4581
        %v5150 = vmul.f32 %v5149, %v4581
        %v5151 = vmul.f32 %v5150, %v5149
        %v5152 = vmul.f32 0.5, %v5151
        %v5153 = vsub.f32 1.5, %v5152
        %v5154 = vmul.f32 %v5149, %v5153
        %vm5155 = vweird.f32 %v4581
        %vm5156 = vweird.f32 %v5149
        %vm5157 = vmor %vm5155, %vm5156
        %v5158 = vsel %vm5157, %v5149, %v5154
        %v5159 = vrsqrt.pop %v4582
        %v5160 = vmul.f32 %v5159, %v4582
        %v5161 = vmul.f32 %v5160, %v5159
        %v5162 = vmul.f32 0.5, %v5161
        %v5163 = vsub.f32 1.5, %v5162
        %v5164 = vmul.f32 %v5159, %v5163
        %vm5165 = vweird.f32 %v4582
        %vm5166 = vweird.f32 %v5159
        %vm5167 = vmor %vm5165, %vm5166
        %v5168 = vsel %vm5167, %v5159, %v5164
        %v5169 = vrsqrt.pop %v4583
        %v5170 = vmul.f32 %v5169, %v4583
        %v5171 = vmul.f32 %v5170, %v5169
        %v5172 = vmul.f32 0.5, %v5171
        %v5173 = vsub.f32 1.5, %v5172
        %v5174 = vmul.f32 %v5169, %v5173
        %vm5175 = vweird.f32 %v4583
        %vm5176 = vweird.f32 %v5169
        %vm5177 = vmor %vm5175, %vm5176
        %v5178 = vsel %vm5177, %v5169, %v5174
        %v5179 = vrsqrt.pop %v4584
        %v5180 = vmul.f32 %v5179, %v4584
        %v5181 = vmul.f32 %v5180, %v5179
        %v5182 = vmul.f32 0.5, %v5181
        %v5183 = vsub.f32 1.5, %v5182
        %v5184 = vmul.f32 %v5179, %v5183
        %vm5185 = vweird.f32 %v4584
        %vm5186 = vweird.f32 %v5179
        %vm5187 = vmor %vm5185, %vm5186
        %v5188 = vsel %vm5187, %v5179, %v5184
        %v5189 = vrsqrt.pop %v4585
        %v5190 = vmul.f32 %v5189, %v4585
        %v5191 = vmul.f32 %v5190, %v5189
        %v5192 = vmul.f32 0.5, %v5191
        %v5193 = vsub.f32 1.5, %v5192
        %v5194 = vmul.f32 %v5189, %v5193
        %vm5195 = vweird.f32 %v4585
        %vm5196 = vweird.f32 %v5189
        %vm5197 = vmor %vm5195, %vm5196
        %v5198 = vsel %vm5197, %v5189, %v5194
        %v5199 = vrsqrt.pop %v4586
        %v5200 = vmul.f32 %v5199, %v4586
        %v5201 = vmul.f32 %v5200, %v5199
        %v5202 = vmul.f32 0.5, %v5201
        %v5203 = vsub.f32 1.5, %v5202
        %v5204 = vmul.f32 %v5199, %v5203
        %vm5205 = vweird.f32 %v4586
        %vm5206 = vweird.f32 %v5199
        %vm5207 = vmor %vm5205, %vm5206
        %v5208 = vsel %vm5207, %v5199, %v5204
        %v5209 = vrsqrt.pop %v4587
        %v5210 = vmul.f32 %v5209, %v4587
        %v5211 = vmul.f32 %v5210, %v5209
        %v5212 = vmul.f32 0.5, %v5211
        %v5213 = vsub.f32 1.5, %v5212
        %v5214 = vmul.f32 %v5209, %v5213
        %vm5215 = vweird.f32 %v4587
        %vm5216 = vweird.f32 %v5209
        %vm5217 = vmor %vm5215, %vm5216
        %v5218 = vsel %vm5217, %v5209, %v5214
        %v5219 = vrsqrt.pop %v4588
        %v5220 = vmul.f32 %v5219, %v4588
        %v5221 = vmul.f32 %v5220, %v5219
        %v5222 = vmul.f32 0.5, %v5221
        %v5223 = vsub.f32 1.5, %v5222
        %v5224 = vmul.f32 %v5219, %v5223
        %vm5225 = vweird.f32 %v4588
        %vm5226 = vweird.f32 %v5219
        %vm5227 = vmor %vm5225, %vm5226
        %v5228 = vsel %vm5227, %v5219, %v5224
        %v5229 = vmul.f32 %v4205, %v4598
        %v5230 = vmul.f32 %v4206, %v4608
        %v5231 = vmul.f32 %v4207, %v4618
        %v5232 = vmul.f32 %v4208, %v4628
        %v5233 = vmul.f32 %v4209, %v4638
        %v5234 = vmul.f32 %v4210, %v4648
        %v5235 = vmul.f32 %v4211, %v4658
        %v5236 = vmul.f32 %v4212, %v4668
        %v5237 = vmul.f32 %v4213, %v4678
        %v5238 = vmul.f32 %v4214, %v4688
        %v5239 = vmul.f32 %v4215, %v4698
        %v5240 = vmul.f32 %v4216, %v4708
        %v5241 = vmul.f32 %v4217, %v4718
        %v5242 = vmul.f32 %v4218, %v4728
        %v5243 = vmul.f32 %v4219, %v4738
        %v5244 = vmul.f32 %v4220, %v4748
        %v5245 = vmul.f32 %v4221, %v4758
        %v5246 = vmul.f32 %v4222, %v4768
        %v5247 = vmul.f32 %v4223, %v4778
        %v5248 = vmul.f32 %v4224, %v4788
        %v5249 = vmul.f32 %v4225, %v4798
        %v5250 = vmul.f32 %v4226, %v4808
        %v5251 = vmul.f32 %v4227, %v4818
        %v5252 = vmul.f32 %v4228, %v4828
        %v5253 = vmul.f32 %v4229, %v4838
        %v5254 = vmul.f32 %v4230, %v4848
        %v5255 = vmul.f32 %v4231, %v4858
        %v5256 = vmul.f32 %v4232, %v4868
        %v5257 = vmul.f32 %v4233, %v4878
        %v5258 = vmul.f32 %v4234, %v4888
        %v5259 = vmul.f32 %v4235, %v4898
        %v5260 = vmul.f32 %v4236, %v4908
        %v5261 = vmul.f32 %v4237, %v4918
        %v5262 = vmul.f32 %v4238, %v4928
        %v5263 = vmul.f32 %v4239, %v4938
        %v5264 = vmul.f32 %v4240, %v4948
        %v5265 = vmul.f32 %v4241, %v4958
        %v5266 = vmul.f32 %v4242, %v4968
        %v5267 = vmul.f32 %v4243, %v4978
        %v5268 = vmul.f32 %v4244, %v4988
        %v5269 = vmul.f32 %v4245, %v4998
        %v5270 = vmul.f32 %v4246, %v5008
        %v5271 = vmul.f32 %v4247, %v5018
        %v5272 = vmul.f32 %v4248, %v5028
        %v5273 = vmul.f32 %v4249, %v5038
        %v5274 = vmul.f32 %v4250, %v5048
        %v5275 = vmul.f32 %v4251, %v5058
        %v5276 = vmul.f32 %v4252, %v5068
        %v5277 = vmul.f32 %v4253, %v5078
        %v5278 = vmul.f32 %v4254, %v5088
        %v5279 = vmul.f32 %v4255, %v5098
        %v5280 = vmul.f32 %v4256, %v5108
        %v5281 = vmul.f32 %v4257, %v5118
        %v5282 = vmul.f32 %v4258, %v5128
        %v5283 = vmul.f32 %v4259, %v5138
        %v5284 = vmul.f32 %v4260, %v5148
        %v5285 = vmul.f32 %v4261, %v5158
        %v5286 = vmul.f32 %v4262, %v5168
        %v5287 = vmul.f32 %v4263, %v5178
        %v5288 = vmul.f32 %v4264, %v5188
        %v5289 = vmul.f32 %v4265, %v5198
        %v5290 = vmul.f32 %v4266, %v5208
        %v5291 = vmul.f32 %v4267, %v5218
        %v5292 = vmul.f32 %v4268, %v5228
        %v5293 = vld [vmem:[%s7] sm:$0x1]
        %v5295 = vperm.slane %v5293, 0
        %v5297 = vmul.f32 %v5229, %v5295
        %v5298 = vmul.f32 %v5230, %v5295
        %v5299 = vmul.f32 %v5231, %v5295
        %v5300 = vmul.f32 %v5232, %v5295
        %v5301 = vmul.f32 %v5233, %v5295
        %v5302 = vmul.f32 %v5234, %v5295
        %v5303 = vmul.f32 %v5235, %v5295
        %v5304 = vmul.f32 %v5236, %v5295
        %v5305 = vmul.f32 %v5237, %v5295
        %v5306 = vmul.f32 %v5238, %v5295
        %v5307 = vmul.f32 %v5239, %v5295
        %v5308 = vmul.f32 %v5240, %v5295
        %v5309 = vmul.f32 %v5241, %v5295
        %v5310 = vmul.f32 %v5242, %v5295
        %v5311 = vmul.f32 %v5243, %v5295
        %v5312 = vmul.f32 %v5244, %v5295
        %v5313 = vmul.f32 %v5245, %v5295
        %v5314 = vmul.f32 %v5246, %v5295
        %v5315 = vmul.f32 %v5247, %v5295
        %v5316 = vmul.f32 %v5248, %v5295
        %v5317 = vmul.f32 %v5249, %v5295
        %v5318 = vmul.f32 %v5250, %v5295
        %v5319 = vmul.f32 %v5251, %v5295
        %v5320 = vmul.f32 %v5252, %v5295
        %v5321 = vmul.f32 %v5253, %v5295
        %v5322 = vmul.f32 %v5254, %v5295
        %v5323 = vmul.f32 %v5255, %v5295
        %v5324 = vmul.f32 %v5256, %v5295
        %v5325 = vmul.f32 %v5257, %v5295
        %v5326 = vmul.f32 %v5258, %v5295
        %v5327 = vmul.f32 %v5259, %v5295
        %v5328 = vmul.f32 %v5260, %v5295
        %v5329 = vmul.f32 %v5261, %v5295
        %v5330 = vmul.f32 %v5262, %v5295
        %v5331 = vmul.f32 %v5263, %v5295
        %v5332 = vmul.f32 %v5264, %v5295
        %v5333 = vmul.f32 %v5265, %v5295
        %v5334 = vmul.f32 %v5266, %v5295
        %v5335 = vmul.f32 %v5267, %v5295
        %v5336 = vmul.f32 %v5268, %v5295
        %v5337 = vmul.f32 %v5269, %v5295
        %v5338 = vmul.f32 %v5270, %v5295
        %v5339 = vmul.f32 %v5271, %v5295
        %v5340 = vmul.f32 %v5272, %v5295
        %v5341 = vmul.f32 %v5273, %v5295
        %v5342 = vmul.f32 %v5274, %v5295
        %v5343 = vmul.f32 %v5275, %v5295
        %v5344 = vmul.f32 %v5276, %v5295
        %v5345 = vmul.f32 %v5277, %v5295
        %v5346 = vmul.f32 %v5278, %v5295
        %v5347 = vmul.f32 %v5279, %v5295
        %v5348 = vmul.f32 %v5280, %v5295
        %v5349 = vmul.f32 %v5281, %v5295
        %v5350 = vmul.f32 %v5282, %v5295
        %v5351 = vmul.f32 %v5283, %v5295
        %v5352 = vmul.f32 %v5284, %v5295
        %v5353 = vmul.f32 %v5285, %v5295
        %v5354 = vmul.f32 %v5286, %v5295
        %v5355 = vmul.f32 %v5287, %v5295
        %v5356 = vmul.f32 %v5288, %v5295
        %v5357 = vmul.f32 %v5289, %v5295
        %v5358 = vmul.f32 %v5290, %v5295
        %v5359 = vmul.f32 %v5291, %v5295
        %v5360 = vmul.f32 %v5292, %v5295
        %v5361 = vld [vmem:[%s8] sm:$0x1]
        %v5363 = vperm.slane %v5361, 0
        %v5365 = vadd.f32 %v5297, %v5363
        %v5366 = vadd.f32 %v5298, %v5363
        %v5367 = vadd.f32 %v5299, %v5363
        %v5368 = vadd.f32 %v5300, %v5363
        %v5369 = vadd.f32 %v5301, %v5363
        %v5370 = vadd.f32 %v5302, %v5363
        %v5371 = vadd.f32 %v5303, %v5363
        %v5372 = vadd.f32 %v5304, %v5363
        %v5373 = vadd.f32 %v5305, %v5363
        %v5374 = vadd.f32 %v5306, %v5363
        %v5375 = vadd.f32 %v5307, %v5363
        %v5376 = vadd.f32 %v5308, %v5363
        %v5377 = vadd.f32 %v5309, %v5363
        %v5378 = vadd.f32 %v5310, %v5363
        %v5379 = vadd.f32 %v5311, %v5363
        %v5380 = vadd.f32 %v5312, %v5363
        %v5381 = vadd.f32 %v5313, %v5363
        %v5382 = vadd.f32 %v5314, %v5363
        %v5383 = vadd.f32 %v5315, %v5363
        %v5384 = vadd.f32 %v5316, %v5363
        %v5385 = vadd.f32 %v5317, %v5363
        %v5386 = vadd.f32 %v5318, %v5363
        %v5387 = vadd.f32 %v5319, %v5363
        %v5388 = vadd.f32 %v5320, %v5363
        %v5389 = vadd.f32 %v5321, %v5363
        %v5390 = vadd.f32 %v5322, %v5363
        %v5391 = vadd.f32 %v5323, %v5363
        %v5392 = vadd.f32 %v5324, %v5363
        %v5393 = vadd.f32 %v5325, %v5363
        %v5394 = vadd.f32 %v5326, %v5363
        %v5395 = vadd.f32 %v5327, %v5363
        %v5396 = vadd.f32 %v5328, %v5363
        %v5397 = vadd.f32 %v5329, %v5363
        %v5398 = vadd.f32 %v5330, %v5363
        %v5399 = vadd.f32 %v5331, %v5363
        %v5400 = vadd.f32 %v5332, %v5363
        %v5401 = vadd.f32 %v5333, %v5363
        %v5402 = vadd.f32 %v5334, %v5363
        %v5403 = vadd.f32 %v5335, %v5363
        %v5404 = vadd.f32 %v5336, %v5363
        %v5405 = vadd.f32 %v5337, %v5363
        %v5406 = vadd.f32 %v5338, %v5363
        %v5407 = vadd.f32 %v5339, %v5363
        %v5408 = vadd.f32 %v5340, %v5363
        %v5409 = vadd.f32 %v5341, %v5363
        %v5410 = vadd.f32 %v5342, %v5363
        %v5411 = vadd.f32 %v5343, %v5363
        %v5412 = vadd.f32 %v5344, %v5363
        %v5413 = vadd.f32 %v5345, %v5363
        %v5414 = vadd.f32 %v5346, %v5363
        %v5415 = vadd.f32 %v5347, %v5363
        %v5416 = vadd.f32 %v5348, %v5363
        %v5417 = vadd.f32 %v5349, %v5363
        %v5418 = vadd.f32 %v5350, %v5363
        %v5419 = vadd.f32 %v5351, %v5363
        %v5420 = vadd.f32 %v5352, %v5363
        %v5421 = vadd.f32 %v5353, %v5363
        %v5422 = vadd.f32 %v5354, %v5363
        %v5423 = vadd.f32 %v5355, %v5363
        %v5424 = vadd.f32 %v5356, %v5363
        %v5425 = vadd.f32 %v5357, %v5363
        %v5426 = vadd.f32 %v5358, %v5363
        %v5427 = vadd.f32 %v5359, %v5363
        %v5428 = vadd.f32 %v5360, %v5363
        %5429 = vst [vmem:[%s326] sm:$0xff] %v5365
        %5430 = vst [vmem:[%s326 + $0x8] sm:$0xff] %v5366
        %5431 = vst [vmem:[%s326 + $0x10] sm:$0xff] %v5367
        %5432 = vst [vmem:[%s326 + $0x18] sm:$0xff] %v5368
        %5433 = vst [vmem:[%s326 + $0x20] sm:$0xff] %v5369
        %5434 = vst [vmem:[%s326 + $0x28] sm:$0xff] %v5370
        %5435 = vst [vmem:[%s326 + $0x30] sm:$0xff] %v5371
        %5436 = vst [vmem:[%s326 + $0x38] sm:$0xff] %v5372
        %5437 = vst [vmem:[%s326 + $0x40] sm:$0xff] %v5373
        %5438 = vst [vmem:[%s326 + $0x48] sm:$0xff] %v5374
        %5439 = vst [vmem:[%s326 + $0x50] sm:$0xff] %v5375
        %5440 = vst [vmem:[%s326 + $0x58] sm:$0xff] %v5376
        %5441 = vst [vmem:[%s326 + $0x60] sm:$0xff] %v5377
        %5442 = vst [vmem:[%s326 + $0x68] sm:$0xff] %v5378
        %5443 = vst [vmem:[%s326 + $0x70] sm:$0xff] %v5379
        %5444 = vst [vmem:[%s326 + $0x78] sm:$0xff] %v5380
        %5445 = vst [vmem:[%s326 + $0x80] sm:$0xff] %v5381
        %5446 = vst [vmem:[%s326 + $0x88] sm:$0xff] %v5382
        %5447 = vst [vmem:[%s326 + $0x90] sm:$0xff] %v5383
        %5448 = vst [vmem:[%s326 + $0x98] sm:$0xff] %v5384
        %5449 = vst [vmem:[%s326 + $0xa0] sm:$0xff] %v5385
        %5450 = vst [vmem:[%s326 + $0xa8] sm:$0xff] %v5386
        %5451 = vst [vmem:[%s326 + $0xb0] sm:$0xff] %v5387
        %5452 = vst [vmem:[%s326 + $0xb8] sm:$0xff] %v5388
        %5453 = vst [vmem:[%s326 + $0xc0] sm:$0xff] %v5389
        %5454 = vst [vmem:[%s326 + $0xc8] sm:$0xff] %v5390
        %5455 = vst [vmem:[%s326 + $0xd0] sm:$0xff] %v5391
        %5456 = vst [vmem:[%s326 + $0xd8] sm:$0xff] %v5392
        %5457 = vst [vmem:[%s326 + $0xe0] sm:$0xff] %v5393
        %5458 = vst [vmem:[%s326 + $0xe8] sm:$0xff] %v5394
        %5459 = vst [vmem:[%s326 + $0xf0] sm:$0xff] %v5395
        %5460 = vst [vmem:[%s326 + $0xf8] sm:$0xff] %v5396
        %5461 = vst [vmem:[%s326 + $0x100] sm:$0xff] %v5397
        %5462 = vst [vmem:[%s326 + $0x108] sm:$0xff] %v5398
        %5463 = vst [vmem:[%s326 + $0x110] sm:$0xff] %v5399
        %5464 = vst [vmem:[%s326 + $0x118] sm:$0xff] %v5400
        %5465 = vst [vmem:[%s326 + $0x120] sm:$0xff] %v5401
        %5466 = vst [vmem:[%s326 + $0x128] sm:$0xff] %v5402
        %5467 = vst [vmem:[%s326 + $0x130] sm:$0xff] %v5403
        %5468 = vst [vmem:[%s326 + $0x138] sm:$0xff] %v5404
        %5469 = vst [vmem:[%s326 + $0x140] sm:$0xff] %v5405
        %5470 = vst [vmem:[%s326 + $0x148] sm:$0xff] %v5406
        %5471 = vst [vmem:[%s326 + $0x150] sm:$0xff] %v5407
        %5472 = vst [vmem:[%s326 + $0x158] sm:$0xff] %v5408
        %5473 = vst [vmem:[%s326 + $0x160] sm:$0xff] %v5409
        %5474 = vst [vmem:[%s326 + $0x168] sm:$0xff] %v5410
        %5475 = vst [vmem:[%s326 + $0x170] sm:$0xff] %v5411
        %5476 = vst [vmem:[%s326 + $0x178] sm:$0xff] %v5412
        %5477 = vst [vmem:[%s326 + $0x180] sm:$0xff] %v5413
        %5478 = vst [vmem:[%s326 + $0x188] sm:$0xff] %v5414
        %5479 = vst [vmem:[%s326 + $0x190] sm:$0xff] %v5415
        %5480 = vst [vmem:[%s326 + $0x198] sm:$0xff] %v5416
        %5481 = vst [vmem:[%s326 + $0x1a0] sm:$0xff] %v5417
        %5482 = vst [vmem:[%s326 + $0x1a8] sm:$0xff] %v5418
        %5483 = vst [vmem:[%s326 + $0x1b0] sm:$0xff] %v5419
        %5484 = vst [vmem:[%s326 + $0x1b8] sm:$0xff] %v5420
        %5485 = vst [vmem:[%s326 + $0x1c0] sm:$0xff] %v5421
        %5486 = vst [vmem:[%s326 + $0x1c8] sm:$0xff] %v5422
        %5487 = vst [vmem:[%s326 + $0x1d0] sm:$0xff] %v5423
        %5488 = vst [vmem:[%s326 + $0x1d8] sm:$0xff] %v5424
        %5489 = vst [vmem:[%s326 + $0x1e0] sm:$0xff] %v5425
        %5490 = vst [vmem:[%s326 + $0x1e8] sm:$0xff] %v5426
        %5491 = vst [vmem:[%s326 + $0x1f0] sm:$0xff] %v5427
        %5492 = vst [vmem:[%s326 + $0x1f8] sm:$0xff] %v5428
        %s5493 = sand.u32 %s225, 1
        %s5494 = scalar_lea.sflag [#allocation3], %s5493
        %s5495 = sand.u32 %s225, 1
        %s5496 = smul.addr %s5495, 512
        %s5497 = scalar_lea.vmem [#allocation2], %s5496
        // Predicated region
        $region57: #{tpu_custom_call.1} parent=55 // pred_check
          %p5498 = pneg %p235
        $region58: #{tpu_custom_call.1} parent=55 // pred_check_branch
          %5500 = sbr.rel (%p5498) target = $region60
        $region59: #{tpu_custom_call.1} parent=55 // pred_region
          %s5501 = smul.u32 64, %s23
          %5503 = vsyncadd %s5494, 0
          %s5504 = smul.addr %s5501, 8
          %s5505 = scalar_lea.hbm %s9, %s5504
          %s5506 = sshll.u32 %s5497, 4
          %s5507 = int_to_ptr.vmem [resolvable:$true] %s5506
          %s5508 = sshll.u32 %s5505, 4
          %s5509 = int_to_ptr.hbm [resolvable:$true] %s5508
          %5514 = dma.vmem_to_hbm [thread:$0]  %s5507, 8192, %s5509, %s5494, 128, 128, 8
        $region60: #{tpu_custom_call.1} parent=55 // pred_fallthru
          _
      $region56: #{tpu_custom_call.1} parent=5 // pred_fallthru
        _
      %p5515 = scmp.le.s32.totalorder 2, %s18
      // Predicated region
      $region61: #{tpu_custom_call.1} parent=5 // pred_check
        %p5516 = pneg %p5515
      $region62: #{tpu_custom_call.1} parent=5 // pred_check_branch
        %5518 = sbr.rel (%p5516) target = $region64
      $region63: #{tpu_custom_call.1} parent=5 // pred_region
        %s5519 = ssub.s32 %s18, 2
        // Predicated region
        $region65: #{tpu_custom_call.1} parent=63 // pred_check
          %p5520 = pneg %p241
        $region66: #{tpu_custom_call.1} parent=63 // pred_check_branch
          %5522 = sbr.rel (%p5520) target = $region68
        $region67: #{tpu_custom_call.1} parent=63 // pred_region
          %s5523 = sand.u32 %s226, 1
          %s5524 = scalar_lea.sflag [#allocation3], %s5523
          %s5525 = sand.u32 %s226, 1
          %s5526 = smul.addr %s5525, 512
          %s5527 = scalar_lea.vmem [#allocation2], %s5526
          %5529 = dma.done %s5524, 8192
        $region68: #{tpu_custom_call.1} parent=63 // pred_fallthru
          _
      $region64: #{tpu_custom_call.1} parent=5 // pred_fallthru
        _
    $region6: #{tpu_custom_call.1} parent=1 // loop_footer
      %s22 = sadd.s32 1, %s18
    $region7: #{tpu_custom_call.1} parent=1 // loop_footer_branch
      %17 = sbr.rel target = $region3
    $region8: #{tpu_custom_call.1} parent=1 // loop_exit
      _
    %5530 = vsyncpa [#allocation3], 1
    %s5531 = scalar_lea.sflag [#allocation3], 1
    %5532 = vsyncpa %s5531, 1

</llo_original>
